<compile_context>
chip_gen: v7x
topology: tpu7x:2x2x1
jax: 0.10.0
libtpu: 0.0.40
codegen_flags: <defaults>
</compile_context>

<pallas_src>
import jax
import jax.numpy as jnp
import numpy as np
from jax.experimental import pallas as pl
from jax.experimental.pallas import tpu as pltpu


# ----------------------------------------------------------------------- conv kernel
def _audio_conv_block_kernel(x_ref, w1_ref, s1_ref, w2_ref, s2_ref, o_ref, x1p_ref):
    """Fused Conv(1->C1)+BN+ReLU -> Conv(C1->C2)+BN+ReLU -> MaxPool2x2, one image.

    Input / scratch W-axis layout (width WD = W + 8):
      [E0, E0+Wh)  = even input columns,   E0 = 0
      [Wh, Wh+8)   = zero gap (provides the cross-parity SAME-padding columns)
      [O0, O0+Wh)  = odd input columns,    O0 = Wh + 8
    plus a 1-row zero halo (rows 0 and H+1).  Every 3x3 tap of both convs is then a
    contiguous slice, and the 2x2 max-pool is strided-access free.
    """
    H = x_ref.shape[1] - 2
    WD = x_ref.shape[2]
    Wh = (WD - 8) // 2                    # = W // 2
    C1 = w1_ref.shape[3]
    C2 = w2_ref.shape[3]
    E0, O0 = 0, Wh + 8
    cols_e = (O0 - 1, E0, O0)             # tap dj = 0,1,2 for even output columns
    cols_o = (E0, O0, E0 + 1)             # tap dj = 0,1,2 for odd  output columns

    # ---- conv1 (Cin == 1): 9 taps x 2 column parities, VPU broadcast mul-accum ----
    acc1_e = jnp.zeros((H, Wh, C1), jnp.float32)
    acc1_o = jnp.zeros((H, Wh, C1), jnp.float32)
    for di in range(3):
        for dj in range(3):
            w_tap = w1_ref[di, dj][None]                              # (1, 1, C1)
            acc1_e += x_ref[0, di:di + H, cols_e[dj]:cols_e[dj] + Wh, :] * w_tap
            acc1_o += x_ref[0, di:di + H, cols_o[dj]:cols_o[dj] + Wh, :] * w_tap
    shift1 = s1_ref[...][None]                                        # (1, 1, C1)
    y1_e = jnp.maximum(acc1_e + shift1, 0.0)
    y1_o = jnp.maximum(acc1_o + shift1, 0.0)

    # ---- stage conv1 output into the zero-padded de-interleaved VMEM scratch ----
    # (stores are dense and 8-aligned: offsets E0 / O0 and width Wh are multiples of 8)
    x1p_ref[...] = jnp.zeros((H + 2, WD, C1), jnp.float32)
    x1p_ref[1:H + 1, E0:E0 + Wh, :] = y1_e
    x1p_ref[1:H + 1, O0:O0 + Wh, :] = y1_o

    # ---- conv2: 9 taps x 2 parities as (H*Wh, C1) @ (C1, C2) MXU matmuls ----
    # (further MXU win possible by stacking taps into one K = 9*C1 contraction)
    acc2_e = jnp.zeros((H * Wh, C2), jnp.float32)
    acc2_o = jnp.zeros((H * Wh, C2), jnp.float32)
    for di in range(3):
        for dj in range(3):
            w_tap = w2_ref[di, dj]                                    # (C1, C2)
            win_e = x1p_ref[di:di + H, cols_e[dj]:cols_e[dj] + Wh, :].reshape(H * Wh, C1)
            win_o = x1p_ref[di:di + H, cols_o[dj]:cols_o[dj] + Wh, :].reshape(H * Wh, C1)
            acc2_e += jnp.dot(win_e, w_tap, preferred_element_type=jnp.float32)
            acc2_o += jnp.dot(win_o, w_tap, preferred_element_type=jnp.float32)
    y2_e = jnp.maximum(acc2_e + s2_ref[...], 0.0)     # even output columns, row = h*Wh+m
    y2_o = jnp.maximum(acc2_o + s2_ref[...], 0.0)     # odd  output columns

    # ---- fused 2x2 max-pool ----
    wp = jnp.maximum(y2_e, y2_o)                      # pool over W (pairs 2m, 2m+1)
    wp = wp.reshape(H // 2, 2, Wh, C2)                # trivial split of the row axis
    pooled = jnp.maximum(wp[:, 0], wp[:, 1])          # pool over H -> (H//2, Wh, C2)
    o_ref[0] = pooled.reshape((H // 2) * Wh, C2).astype(o_ref.dtype)


def _audio_conv_block(xin, w1, s1, w2, s2, *, H, W, out_dtype=jnp.bfloat16):
    B = xin.shape[0]
    WD = W + 8
    C1 = w1.shape[3]
    C2 = w2.shape[3]
    S = (H // 2) * (W // 2)
    return pl.pallas_call(
        _audio_conv_block_kernel,
        out_shape=jax.ShapeDtypeStruct((B, S, C2), out_dtype),
        grid_spec=pltpu.PrefetchScalarGridSpec(
            num_scalar_prefetch=0,
            grid=(B,),                                  # one image per grid step
            in_specs=[
                pl.BlockSpec((1, H + 2, WD, 1), lambda b: (b, 0, 0, 0)),
                pl.BlockSpec((3, 3, 1, C1), lambda b: (0, 0, 0, 0)),
                pl.BlockSpec((1, C1), lambda b: (0, 0)),
                pl.BlockSpec((3, 3, C1, C2), lambda b: (0, 0, 0, 0)),
                pl.BlockSpec((1, C2), lambda b: (0, 0)),
            ],
            out_specs=pl.BlockSpec((1, S, C2), lambda b: (b, 0, 0)),
            scratch_shapes=[pltpu.VMEM((H + 2, WD, C1), jnp.float32)],
        ),
        compiler_params=pltpu.CompilerParams(
            dimension_semantics=("parallel",),          # megacore-shard over batch
            vmem_limit_bytes=32 * 1024 * 1024,
        ),
    )(xin, w1, s1, w2, s2)


# ------------------------------------------------------------------------- FC kernel
def _fc_kernel(x_ref, w_ref, b_ref, o_ref, acc_ref):
    @pl.when(pl.program_id(1) == 0)
    def _():
        acc_ref[...] = jnp.zeros_like(acc_ref)

    acc_ref[...] += jnp.dot(x_ref[...], w_ref[...], preferred_element_type=jnp.float32)

    @pl.when(pl.program_id(1) == pl.num_programs(1) - 1)
    def _():
        o_ref[...] = acc_ref[...] + b_ref[...]


def linear(x, w, b, *, tk=8192, tn=128):
    """y = x @ w + b.  w is already (K, N): pre-transposed, NCHW-permuted and
    hidden-padded at init.  K-tiled with an f32 VMEM accumulator."""
    B, K = x.shape
    Kw, N = w.shape
    assert K == Kw
    tn_eff = min(tn, N)
    assert N % tn_eff == 0
    # largest K tile <= tk that is a multiple of 128 and divides K (else whole K).
    tk_eff = K
    if K % 128 == 0:
        t, best = 128, 128
        while t <= min(tk, K):
            if K % t == 0:
                best = t
            t += 128
        tk_eff = best
    grid = (N // tn_eff, K // tk_eff)
    return pl.pallas_call(
        _fc_kernel,
        out_shape=jax.ShapeDtypeStruct((B, N), jnp.float32),
        grid_spec=pltpu.PrefetchScalarGridSpec(
            num_scalar_prefetch=0,
            grid=grid,
            in_specs=[
                pl.BlockSpec((B, tk_eff), lambda n, k: (0, k)),
                pl.BlockSpec((tk_eff, tn_eff), lambda n, k: (k, n)),
                pl.BlockSpec((1, tn_eff), lambda n, k: (0, n)),
            ],
            out_specs=pl.BlockSpec((B, tn_eff), lambda n, k: (0, n)),
            scratch_shapes=[pltpu.VMEM((B, tn_eff), jnp.float32)],
        ),
        compiler_params=pltpu.CompilerParams(
            dimension_semantics=("parallel", "arbitrary"),
            vmem_limit_bytes=32 * 1024 * 1024,
        ),
    )(x, w, b)


# ------------------------------------------------------------------- host-side prep
def _deinterleave_pad(audio):
    """(B, H, W) -> (B, H+2, W+8, 1): even columns at [0, W/2), odd columns at
    [W/2+8, W+8), zero gap in between, 1-row zero halo top/bottom."""
    B, H, W = audio.shape
    Wh = W // 2
    xin = jnp.zeros((B, H + 2, W + 8, 1), jnp.float32)
    xin = xin.at[:, 1:H + 1, 0:Wh, 0].set(audio[:, :, 0::2].astype(jnp.float32))
    xin = xin.at[:, 1:H + 1, Wh + 8:W + 8, 0].set(audio[:, :, 1::2].astype(jnp.float32))
    return xin


def prepare_params(params, *, H, W, eps=1e-5, act_dtype=jnp.bfloat16):
    """One-time parameter preparation (done at init, not per forward):
      * fold conv bias + eval-mode BatchNorm into the conv weights and one shift,
      * lay conv weights out as (kh, kw, Cin, Cout),
      * permute FC weight columns from torch's NCHW-flatten order to the kernel's
        channels-last order, pre-transpose to (K, hidden), pad hidden to a
        lane-dense multiple of 128, and cast it to bf16."""
    C1 = params["w1"].shape[0]
    C2 = params["w2"].shape[0]

    def fold(w, b, g, beta, m, v):
        s = g / jnp.sqrt(v + eps)                         # (Cout,)
        wf = jnp.transpose(w, (2, 3, 1, 0)) * s           # (kh, kw, Cin, Cout) scaled
        shift = (b - m) * s + beta                        # conv bias + BN shift
        return wf.astype(jnp.float32), shift.astype(jnp.float32)

    w1f, sh1 = fold(params["w1"], params["b1"], params["g1"], params["be1"],
                    params["m1"], params["v1"])
    w2f, sh2 = fold(params["w2"], params["b2"], params["g2"], params["be2"],
                    params["m2"], params["v2"])

    Hh, Wh = H // 2, W // 2
    S = Hh * Wh
    wfc = params["wfc"]                                   # (hidden, C2*S), NCHW order
    hidden = wfc.shape[0]
    hidden_p = ((hidden + 127) // 128) * 128
    w_k = wfc.reshape(hidden, C2, S).transpose(2, 1, 0).reshape(S * C2, hidden)
    w_k = jnp.pad(w_k, ((0, 0), (0, hidden_p - hidden))).astype(act_dtype)
    b_k = jnp.pad(params["bfc"], (0, hidden_p - hidden)).reshape(1, hidden_p)
    b_k = b_k.astype(jnp.float32)

    return {"w1": w1f, "s1": sh1.reshape(1, C1),
            "w2": w2f, "s2": sh2.reshape(1, C2),
            "wfc": w_k, "bfc": b_k, "hidden": hidden}


def mnist_audio_forward(audio, prep, *, fc_block_k=8192):
    B, H, W = audio.shape
    assert H % 2 == 0 and W % 16 == 0, "kernel assumes H even and W a multiple of 16"
    xin = _deinterleave_pad(audio)
    pooled = _audio_conv_block(xin, prep["w1"], prep["s1"], prep["w2"], prep["s2"],
                               H=H, W=W)
    feats = pooled.reshape(B, -1)                 # free reshape, (B, S*C2), bf16
    out = linear(feats, prep["wfc"], prep["bfc"], tk=fc_block_k)
    return out[:, :prep["hidden"]]                # drop the lane padding of hidden


# ----------------------------------------------------------------------- reference
def _reference_forward(audio, params, eps=1e-5):
    x = audio[:, None, :, :].astype(jnp.float32)
    hi = jax.lax.Precision.HIGHEST

    def block(x, w, b, g, be, m, v):
        y = jax.lax.conv_general_dilated(
            x, w, window_strides=(1, 1), padding="SAME",
            dimension_numbers=("NCHW", "OIHW", "NCHW"), precision=hi)
        y = y + b[None, :, None, None]
        y = (y - m[None, :, None, None]) / jnp.sqrt(v[None, :, None, None] + eps)
        y = y * g[None, :, None, None] + be[None, :, None, None]
        return jnp.maximum(y, 0.0)

    x = block(x, params["w1"], params["b1"], params["g1"], params["be1"],
              params["m1"], params["v1"])
    x = block(x, params["w2"], params["b2"], params["g2"], params["be2"],
              params["m2"], params["v2"])
    x = jnp.maximum(jnp.maximum(x[:, :, 0::2, 0::2], x[:, :, 0::2, 1::2]),
                    jnp.maximum(x[:, :, 1::2, 0::2], x[:, :, 1::2, 1::2]))
    x = x.reshape(x.shape[0], -1)
    return jnp.dot(x, params["wfc"].T, precision=hi) + params["bfc"]


# ------------------------------------------------------------------------------ main
def _init_params(key, c1, c2, feat, hidden):
    ks = jax.random.split(key, 8)
    p = {
        "w1": 0.1 * jax.random.normal(ks[0], (c1, 1, 3, 3), jnp.float32),
        "b1": 0.1 * jax.random.normal(ks[1], (c1,), jnp.float32),
        "g1": 1.0 + 0.1 * jax.random.normal(ks[2], (c1,), jnp.float32),
        "be1": 0.05 * jax.random.normal(ks[3], (c1,), jnp.float32),
        "m1": 0.05 * jax.random.normal(ks[4], (c1,), jnp.float32),
        "v1": 1.0 + 0.1 * jax.random.uniform(ks[5], (c1,), jnp.float32),
        "w2": 0.1 * jax.random.normal(ks[6], (c2, c1, 3, 3), jnp.float32),
        "b2": 0.1 * jax.random.normal(ks[7], (c2,), jnp.float32),
    }
    ks2 = jax.random.split(jax.random.fold_in(key, 1), 6)
    p.update({
        "g2": 1.0 + 0.1 * jax.random.normal(ks2[0], (c2,), jnp.float32),
        "be2": 0.05 * jax.random.normal(ks2[1], (c2,), jnp.float32),
        "m2": 0.05 * jax.random.normal(ks2[2], (c2,), jnp.float32),
        "v2": 1.0 + 0.1 * jax.random.uniform(ks2[3], (c2,), jnp.float32),
        "wfc": 0.05 * jax.random.normal(ks2[4], (hidden, feat), jnp.float32),
        "bfc": 0.05 * jax.random.normal(ks2[5], (hidden,), jnp.float32),
    })
    return p


if __name__ == "__main__":
    # Small synthetic shapes consistent with the module's forward
    # (real AVMNIST uses 112x112 spectrograms and conv_block_out_dim=24064;
    #  the Linear input dim here is derived from the small shapes instead).
    B, H, W = 2, 16, 16
    C1, C2 = 4, 8
    HIDDEN = 32
    FEAT = C2 * (H // 2) * (W // 2)          # 8 * 8 * 8 = 512

    key = jax.random.PRNGKey(0)
    k_in, k_p = jax.random.split(key)
    audio = jax.random.normal(k_in, (B, H, W), jnp.float32)
    params = _init_params(k_p, C1, C2, FEAT, HIDDEN)

    prep = prepare_params(params, H=H, W=W)                      # one-time init work
    # fc_block_k=256 so the toy FC exercises the multi-step K accumulation path.
    out = jax.block_until_ready(mnist_audio_forward(audio, prep, fc_block_k=256))
    assert out.shape == (B, HIDDEN), out.shape

    ref = jax.block_until_ready(_reference_forward(audio, params))
    # Tolerance sized for bf16 MXU passes / bf16-stored activations and FC weights.
    np.testing.assert_allclose(np.asarray(out), np.asarray(ref),
                               rtol=2e-2, atol=2e-2)

    print("KERNEL_OK")
</pallas_src>

<mosaic_0001>
module attributes {stable_mosaic.version = 11 : i64} {
  func.func @_audio_conv_block_kernel(%arg0: i32, %arg1: memref<1x18x24x1xf32, #tpu.memory_space<vmem>>, %arg2: memref<3x3x1x4xf32, #tpu.memory_space<vmem>>, %arg3: memref<1x4xf32, #tpu.memory_space<vmem>>, %arg4: memref<3x3x4x8xf32, #tpu.memory_space<vmem>>, %arg5: memref<1x8xf32, #tpu.memory_space<vmem>>, %arg6: memref<1x64x8xbf16, #tpu.memory_space<vmem>>, %arg7: memref<18x24x4xf32, #tpu.memory_space<vmem>>) attributes {dimension_semantics = [#tpu.dimension_semantics<parallel>], iteration_bounds = array<i64: 2>, scalar_prefetch = 0 : i64, scratch_operands = 1 : i64, tpu.core_type = #tpu.core_type<tc>, window_params = [{transform_indices = @transform_0, window_bounds = array<i64: 1, 18, 24, 1>}, {pipeline_mode = #tpu.pipeline_mode<synchronous>, transform_indices = @transform_1, window_bounds = array<i64: 3, 3, 1, 4>}, {pipeline_mode = #tpu.pipeline_mode<synchronous>, transform_indices = @transform_2, window_bounds = array<i64: 1, 4>}, {pipeline_mode = #tpu.pipeline_mode<synchronous>, transform_indices = @transform_3, window_bounds = array<i64: 3, 3, 4, 8>}, {pipeline_mode = #tpu.pipeline_mode<synchronous>, transform_indices = @transform_4, window_bounds = array<i64: 1, 8>}, {transform_indices = @transform_5, window_bounds = array<i64: 1, 64, 8>}]} {
    %cst = arith.constant 0.000000e+00 : f32
    %0 = vector.broadcast %cst : f32 to vector<16x8x4xf32>
    %cst_0 = arith.constant 0.000000e+00 : f32
    %1 = vector.broadcast %cst_0 : f32 to vector<16x8x4xf32>
    %c0 = arith.constant 0 : index
    %c0_1 = arith.constant 0 : index
    %c0_2 = arith.constant 0 : index
    %c0_3 = arith.constant 0 : index
    %2 = vector.load %arg2[%c0, %c0_1, %c0_2, %c0_3] : memref<3x3x1x4xf32, #tpu.memory_space<vmem>>, vector<1x1x1x4xf32>
    %3 = vector.shape_cast %2 : vector<1x1x1x4xf32> to vector<1x4xf32>
    %4 = vector.shape_cast %3 : vector<1x4xf32> to vector<1x1x4xf32>
    %c0_4 = arith.constant 0 : index
    %c0_5 = arith.constant 0 : index
    %c15 = arith.constant 15 : index
    %c0_6 = arith.constant 0 : index
    %5 = vector.load %arg1[%c0_4, %c0_5, %c15, %c0_6] : memref<1x18x24x1xf32, #tpu.memory_space<vmem>>, vector<1x16x8x1xf32>
    %6 = vector.shape_cast %5 : vector<1x16x8x1xf32> to vector<16x8x1xf32>
    %7 = vector.broadcast %6 : vector<16x8x1xf32> to vector<16x8x4xf32>
    %8 = vector.broadcast %4 : vector<1x1x4xf32> to vector<16x8x4xf32>
    %9 = arith.mulf %7, %8 : vector<16x8x4xf32>
    %10 = arith.addf %0, %9 : vector<16x8x4xf32>
    %c0_7 = arith.constant 0 : index
    %c0_8 = arith.constant 0 : index
    %c0_9 = arith.constant 0 : index
    %c0_10 = arith.constant 0 : index
    %11 = vector.load %arg1[%c0_7, %c0_8, %c0_9, %c0_10] : memref<1x18x24x1xf32, #tpu.memory_space<vmem>>, vector<1x16x8x1xf32>
    %12 = vector.shape_cast %11 : vector<1x16x8x1xf32> to vector<16x8x1xf32>
    %13 = vector.broadcast %12 : vector<16x8x1xf32> to vector<16x8x4xf32>
    %14 = vector.broadcast %4 : vector<1x1x4xf32> to vector<16x8x4xf32>
    %15 = arith.mulf %13, %14 : vector<16x8x4xf32>
    %16 = arith.addf %1, %15 : vector<16x8x4xf32>
    %c0_11 = arith.constant 0 : index
    %c1 = arith.constant 1 : index
    %c0_12 = arith.constant 0 : index
    %c0_13 = arith.constant 0 : index
    %17 = vector.load %arg2[%c0_11, %c1, %c0_12, %c0_13] : memref<3x3x1x4xf32, #tpu.memory_space<vmem>>, vector<1x1x1x4xf32>
    %18 = vector.shape_cast %17 : vector<1x1x1x4xf32> to vector<1x4xf32>
    %19 = vector.shape_cast %18 : vector<1x4xf32> to vector<1x1x4xf32>
    %c0_14 = arith.constant 0 : index
    %c0_15 = arith.constant 0 : index
    %c0_16 = arith.constant 0 : index
    %c0_17 = arith.constant 0 : index
    %20 = vector.load %arg1[%c0_14, %c0_15, %c0_16, %c0_17] : memref<1x18x24x1xf32, #tpu.memory_space<vmem>>, vector<1x16x8x1xf32>
    %21 = vector.shape_cast %20 : vector<1x16x8x1xf32> to vector<16x8x1xf32>
    %22 = vector.broadcast %21 : vector<16x8x1xf32> to vector<16x8x4xf32>
    %23 = vector.broadcast %19 : vector<1x1x4xf32> to vector<16x8x4xf32>
    %24 = arith.mulf %22, %23 : vector<16x8x4xf32>
    %25 = arith.addf %10, %24 : vector<16x8x4xf32>
    %c0_18 = arith.constant 0 : index
    %c0_19 = arith.constant 0 : index
    %c16 = arith.constant 16 : index
    %c0_20 = arith.constant 0 : index
    %26 = vector.load %arg1[%c0_18, %c0_19, %c16, %c0_20] : memref<1x18x24x1xf32, #tpu.memory_space<vmem>>, vector<1x16x8x1xf32>
    %27 = vector.shape_cast %26 : vector<1x16x8x1xf32> to vector<16x8x1xf32>
    %28 = vector.broadcast %27 : vector<16x8x1xf32> to vector<16x8x4xf32>
    %29 = vector.broadcast %19 : vector<1x1x4xf32> to vector<16x8x4xf32>
    %30 = arith.mulf %28, %29 : vector<16x8x4xf32>
    %31 = arith.addf %16, %30 : vector<16x8x4xf32>
    %c0_21 = arith.constant 0 : index
    %c2 = arith.constant 2 : index
    %c0_22 = arith.constant 0 : index
    %c0_23 = arith.constant 0 : index
    %32 = vector.load %arg2[%c0_21, %c2, %c0_22, %c0_23] : memref<3x3x1x4xf32, #tpu.memory_space<vmem>>, vector<1x1x1x4xf32>
    %33 = vector.shape_cast %32 : vector<1x1x1x4xf32> to vector<1x4xf32>
    %34 = vector.shape_cast %33 : vector<1x4xf32> to vector<1x1x4xf32>
    %c0_24 = arith.constant 0 : index
    %c0_25 = arith.constant 0 : index
    %c16_26 = arith.constant 16 : index
    %c0_27 = arith.constant 0 : index
    %35 = vector.load %arg1[%c0_24, %c0_25, %c16_26, %c0_27] : memref<1x18x24x1xf32, #tpu.memory_space<vmem>>, vector<1x16x8x1xf32>
    %36 = vector.shape_cast %35 : vector<1x16x8x1xf32> to vector<16x8x1xf32>
    %37 = vector.broadcast %36 : vector<16x8x1xf32> to vector<16x8x4xf32>
    %38 = vector.broadcast %34 : vector<1x1x4xf32> to vector<16x8x4xf32>
    %39 = arith.mulf %37, %38 : vector<16x8x4xf32>
    %40 = arith.addf %25, %39 : vector<16x8x4xf32>
    %c0_28 = arith.constant 0 : index
    %c0_29 = arith.constant 0 : index
    %c1_30 = arith.constant 1 : index
    %c0_31 = arith.constant 0 : index
    %41 = vector.load %arg1[%c0_28, %c0_29, %c1_30, %c0_31] : memref<1x18x24x1xf32, #tpu.memory_space<vmem>>, vector<1x16x8x1xf32>
    %42 = vector.shape_cast %41 : vector<1x16x8x1xf32> to vector<16x8x1xf32>
    %43 = vector.broadcast %42 : vector<16x8x1xf32> to vector<16x8x4xf32>
    %44 = vector.broadcast %34 : vector<1x1x4xf32> to vector<16x8x4xf32>
    %45 = arith.mulf %43, %44 : vector<16x8x4xf32>
    %46 = arith.addf %31, %45 : vector<16x8x4xf32>
    %c1_32 = arith.constant 1 : index
    %c0_33 = arith.constant 0 : index
    %c0_34 = arith.constant 0 : index
    %c0_35 = arith.constant 0 : index
    %47 = vector.load %arg2[%c1_32, %c0_33, %c0_34, %c0_35] : memref<3x3x1x4xf32, #tpu.memory_space<vmem>>, vector<1x1x1x4xf32>
    %48 = vector.shape_cast %47 : vector<1x1x1x4xf32> to vector<1x4xf32>
    %49 = vector.shape_cast %48 : vector<1x4xf32> to vector<1x1x4xf32>
    %c0_36 = arith.constant 0 : index
    %c1_37 = arith.constant 1 : index
    %c15_38 = arith.constant 15 : index
    %c0_39 = arith.constant 0 : index
    %50 = vector.load %arg1[%c0_36, %c1_37, %c15_38, %c0_39] : memref<1x18x24x1xf32, #tpu.memory_space<vmem>>, vector<1x16x8x1xf32>
    %51 = vector.shape_cast %50 : vector<1x16x8x1xf32> to vector<16x8x1xf32>
    %52 = vector.broadcast %51 : vector<16x8x1xf32> to vector<16x8x4xf32>
    %53 = vector.broadcast %49 : vector<1x1x4xf32> to vector<16x8x4xf32>
    %54 = arith.mulf %52, %53 : vector<16x8x4xf32>
    %55 = arith.addf %40, %54 : vector<16x8x4xf32>
    %c0_40 = arith.constant 0 : index
    %c1_41 = arith.constant 1 : index
    %c0_42 = arith.constant 0 : index
    %c0_43 = arith.constant 0 : index
    %56 = vector.load %arg1[%c0_40, %c1_41, %c0_42, %c0_43] : memref<1x18x24x1xf32, #tpu.memory_space<vmem>>, vector<1x16x8x1xf32>
    %57 = vector.shape_cast %56 : vector<1x16x8x1xf32> to vector<16x8x1xf32>
    %58 = vector.broadcast %57 : vector<16x8x1xf32> to vector<16x8x4xf32>
    %59 = vector.broadcast %49 : vector<1x1x4xf32> to vector<16x8x4xf32>
    %60 = arith.mulf %58, %59 : vector<16x8x4xf32>
    %61 = arith.addf %46, %60 : vector<16x8x4xf32>
    %c1_44 = arith.constant 1 : index
    %c1_45 = arith.constant 1 : index
    %c0_46 = arith.constant 0 : index
    %c0_47 = arith.constant 0 : index
    %62 = vector.load %arg2[%c1_44, %c1_45, %c0_46, %c0_47] : memref<3x3x1x4xf32, #tpu.memory_space<vmem>>, vector<1x1x1x4xf32>
    %63 = vector.shape_cast %62 : vector<1x1x1x4xf32> to vector<1x4xf32>
    %64 = vector.shape_cast %63 : vector<1x4xf32> to vector<1x1x4xf32>
    %c0_48 = arith.constant 0 : index
    %c1_49 = arith.constant 1 : index
    %c0_50 = arith.constant 0 : index
    %c0_51 = arith.constant 0 : index
    %65 = vector.load %arg1[%c0_48, %c1_49, %c0_50, %c0_51] : memref<1x18x24x1xf32, #tpu.memory_space<vmem>>, vector<1x16x8x1xf32>
    %66 = vector.shape_cast %65 : vector<1x16x8x1xf32> to vector<16x8x1xf32>
    %67 = vector.broadcast %66 : vector<16x8x1xf32> to vector<16x8x4xf32>
    %68 = vector.broadcast %64 : vector<1x1x4xf32> to vector<16x8x4xf32>
    %69 = arith.mulf %67, %68 : vector<16x8x4xf32>
    %70 = arith.addf %55, %69 : vector<16x8x4xf32>
    %c0_52 = arith.constant 0 : index
    %c1_53 = arith.constant 1 : index
    %c16_54 = arith.constant 16 : index
    %c0_55 = arith.constant 0 : index
    %71 = vector.load %arg1[%c0_52, %c1_53, %c16_54, %c0_55] : memref<1x18x24x1xf32, #tpu.memory_space<vmem>>, vector<1x16x8x1xf32>
    %72 = vector.shape_cast %71 : vector<1x16x8x1xf32> to vector<16x8x1xf32>
    %73 = vector.broadcast %72 : vector<16x8x1xf32> to vector<16x8x4xf32>
    %74 = vector.broadcast %64 : vector<1x1x4xf32> to vector<16x8x4xf32>
    %75 = arith.mulf %73, %74 : vector<16x8x4xf32>
    %76 = arith.addf %61, %75 : vector<16x8x4xf32>
    %c1_56 = arith.constant 1 : index
    %c2_57 = arith.constant 2 : index
    %c0_58 = arith.constant 0 : index
    %c0_59 = arith.constant 0 : index
    %77 = vector.load %arg2[%c1_56, %c2_57, %c0_58, %c0_59] : memref<3x3x1x4xf32, #tpu.memory_space<vmem>>, vector<1x1x1x4xf32>
    %78 = vector.shape_cast %77 : vector<1x1x1x4xf32> to vector<1x4xf32>
    %79 = vector.shape_cast %78 : vector<1x4xf32> to vector<1x1x4xf32>
    %c0_60 = arith.constant 0 : index
    %c1_61 = arith.constant 1 : index
    %c16_62 = arith.constant 16 : index
    %c0_63 = arith.constant 0 : index
    %80 = vector.load %arg1[%c0_60, %c1_61, %c16_62, %c0_63] : memref<1x18x24x1xf32, #tpu.memory_space<vmem>>, vector<1x16x8x1xf32>
    %81 = vector.shape_cast %80 : vector<1x16x8x1xf32> to vector<16x8x1xf32>
    %82 = vector.broadcast %81 : vector<16x8x1xf32> to vector<16x8x4xf32>
    %83 = vector.broadcast %79 : vector<1x1x4xf32> to vector<16x8x4xf32>
    %84 = arith.mulf %82, %83 : vector<16x8x4xf32>
    %85 = arith.addf %70, %84 : vector<16x8x4xf32>
    %c0_64 = arith.constant 0 : index
    %c1_65 = arith.constant 1 : index
    %c1_66 = arith.constant 1 : index
    %c0_67 = arith.constant 0 : index
    %86 = vector.load %arg1[%c0_64, %c1_65, %c1_66, %c0_67] : memref<1x18x24x1xf32, #tpu.memory_space<vmem>>, vector<1x16x8x1xf32>
    %87 = vector.shape_cast %86 : vector<1x16x8x1xf32> to vector<16x8x1xf32>
    %88 = vector.broadcast %87 : vector<16x8x1xf32> to vector<16x8x4xf32>
    %89 = vector.broadcast %79 : vector<1x1x4xf32> to vector<16x8x4xf32>
    %90 = arith.mulf %88, %89 : vector<16x8x4xf32>
    %91 = arith.addf %76, %90 : vector<16x8x4xf32>
    %c2_68 = arith.constant 2 : index
    %c0_69 = arith.constant 0 : index
    %c0_70 = arith.constant 0 : index
    %c0_71 = arith.constant 0 : index
    %92 = vector.load %arg2[%c2_68, %c0_69, %c0_70, %c0_71] : memref<3x3x1x4xf32, #tpu.memory_space<vmem>>, vector<1x1x1x4xf32>
    %93 = vector.shape_cast %92 : vector<1x1x1x4xf32> to vector<1x4xf32>
    %94 = vector.shape_cast %93 : vector<1x4xf32> to vector<1x1x4xf32>
    %c0_72 = arith.constant 0 : index
    %c2_73 = arith.constant 2 : index
    %c15_74 = arith.constant 15 : index
    %c0_75 = arith.constant 0 : index
    %95 = vector.load %arg1[%c0_72, %c2_73, %c15_74, %c0_75] : memref<1x18x24x1xf32, #tpu.memory_space<vmem>>, vector<1x16x8x1xf32>
    %96 = vector.shape_cast %95 : vector<1x16x8x1xf32> to vector<16x8x1xf32>
    %97 = vector.broadcast %96 : vector<16x8x1xf32> to vector<16x8x4xf32>
    %98 = vector.broadcast %94 : vector<1x1x4xf32> to vector<16x8x4xf32>
    %99 = arith.mulf %97, %98 : vector<16x8x4xf32>
    %100 = arith.addf %85, %99 : vector<16x8x4xf32>
    %c0_76 = arith.constant 0 : index
    %c2_77 = arith.constant 2 : index
    %c0_78 = arith.constant 0 : index
    %c0_79 = arith.constant 0 : index
    %101 = vector.load %arg1[%c0_76, %c2_77, %c0_78, %c0_79] : memref<1x18x24x1xf32, #tpu.memory_space<vmem>>, vector<1x16x8x1xf32>
    %102 = vector.shape_cast %101 : vector<1x16x8x1xf32> to vector<16x8x1xf32>
    %103 = vector.broadcast %102 : vector<16x8x1xf32> to vector<16x8x4xf32>
    %104 = vector.broadcast %94 : vector<1x1x4xf32> to vector<16x8x4xf32>
    %105 = arith.mulf %103, %104 : vector<16x8x4xf32>
    %106 = arith.addf %91, %105 : vector<16x8x4xf32>
    %c2_80 = arith.constant 2 : index
    %c1_81 = arith.constant 1 : index
    %c0_82 = arith.constant 0 : index
    %c0_83 = arith.constant 0 : index
    %107 = vector.load %arg2[%c2_80, %c1_81, %c0_82, %c0_83] : memref<3x3x1x4xf32, #tpu.memory_space<vmem>>, vector<1x1x1x4xf32>
    %108 = vector.shape_cast %107 : vector<1x1x1x4xf32> to vector<1x4xf32>
    %109 = vector.shape_cast %108 : vector<1x4xf32> to vector<1x1x4xf32>
    %c0_84 = arith.constant 0 : index
    %c2_85 = arith.constant 2 : index
    %c0_86 = arith.constant 0 : index
    %c0_87 = arith.constant 0 : index
    %110 = vector.load %arg1[%c0_84, %c2_85, %c0_86, %c0_87] : memref<1x18x24x1xf32, #tpu.memory_space<vmem>>, vector<1x16x8x1xf32>
    %111 = vector.shape_cast %110 : vector<1x16x8x1xf32> to vector<16x8x1xf32>
    %112 = vector.broadcast %111 : vector<16x8x1xf32> to vector<16x8x4xf32>
    %113 = vector.broadcast %109 : vector<1x1x4xf32> to vector<16x8x4xf32>
    %114 = arith.mulf %112, %113 : vector<16x8x4xf32>
    %115 = arith.addf %100, %114 : vector<16x8x4xf32>
    %c0_88 = arith.constant 0 : index
    %c2_89 = arith.constant 2 : index
    %c16_90 = arith.constant 16 : index
    %c0_91 = arith.constant 0 : index
    %116 = vector.load %arg1[%c0_88, %c2_89, %c16_90, %c0_91] : memref<1x18x24x1xf32, #tpu.memory_space<vmem>>, vector<1x16x8x1xf32>
    %117 = vector.shape_cast %116 : vector<1x16x8x1xf32> to vector<16x8x1xf32>
    %118 = vector.broadcast %117 : vector<16x8x1xf32> to vector<16x8x4xf32>
    %119 = vector.broadcast %109 : vector<1x1x4xf32> to vector<16x8x4xf32>
    %120 = arith.mulf %118, %119 : vector<16x8x4xf32>
    %121 = arith.addf %106, %120 : vector<16x8x4xf32>
    %c2_92 = arith.constant 2 : index
    %c2_93 = arith.constant 2 : index
    %c0_94 = arith.constant 0 : index
    %c0_95 = arith.constant 0 : index
    %122 = vector.load %arg2[%c2_92, %c2_93, %c0_94, %c0_95] : memref<3x3x1x4xf32, #tpu.memory_space<vmem>>, vector<1x1x1x4xf32>
    %123 = vector.shape_cast %122 : vector<1x1x1x4xf32> to vector<1x4xf32>
    %124 = vector.shape_cast %123 : vector<1x4xf32> to vector<1x1x4xf32>
    %c0_96 = arith.constant 0 : index
    %c2_97 = arith.constant 2 : index
    %c16_98 = arith.constant 16 : index
    %c0_99 = arith.constant 0 : index
    %125 = vector.load %arg1[%c0_96, %c2_97, %c16_98, %c0_99] : memref<1x18x24x1xf32, #tpu.memory_space<vmem>>, vector<1x16x8x1xf32>
    %126 = vector.shape_cast %125 : vector<1x16x8x1xf32> to vector<16x8x1xf32>
    %127 = vector.broadcast %126 : vector<16x8x1xf32> to vector<16x8x4xf32>
    %128 = vector.broadcast %124 : vector<1x1x4xf32> to vector<16x8x4xf32>
    %129 = arith.mulf %127, %128 : vector<16x8x4xf32>
    %130 = arith.addf %115, %129 : vector<16x8x4xf32>
    %c0_100 = arith.constant 0 : index
    %c2_101 = arith.constant 2 : index
    %c1_102 = arith.constant 1 : index
    %c0_103 = arith.constant 0 : index
    %131 = vector.load %arg1[%c0_100, %c2_101, %c1_102, %c0_103] : memref<1x18x24x1xf32, #tpu.memory_space<vmem>>, vector<1x16x8x1xf32>
    %132 = vector.shape_cast %131 : vector<1x16x8x1xf32> to vector<16x8x1xf32>
    %133 = vector.broadcast %132 : vector<16x8x1xf32> to vector<16x8x4xf32>
    %134 = vector.broadcast %124 : vector<1x1x4xf32> to vector<16x8x4xf32>
    %135 = arith.mulf %133, %134 : vector<16x8x4xf32>
    %136 = arith.addf %121, %135 : vector<16x8x4xf32>
    %c0_104 = arith.constant 0 : index
    %c0_105 = arith.constant 0 : index
    %137 = vector.load %arg3[%c0_104, %c0_105] : memref<1x4xf32, #tpu.memory_space<vmem>>, vector<1x4xf32>
    %138 = vector.shape_cast %137 : vector<1x4xf32> to vector<1x1x4xf32>
    %139 = vector.broadcast %138 : vector<1x1x4xf32> to vector<16x8x4xf32>
    %140 = arith.addf %130, %139 : vector<16x8x4xf32>
    %cst_106 = arith.constant 0.000000e+00 : f32
    %141 = vector.broadcast %cst_106 : f32 to vector<16x8x4xf32>
    %142 = arith.maximumf %140, %141 : vector<16x8x4xf32>
    %143 = vector.broadcast %138 : vector<1x1x4xf32> to vector<16x8x4xf32>
    %144 = arith.addf %136, %143 : vector<16x8x4xf32>
    %cst_107 = arith.constant 0.000000e+00 : f32
    %145 = vector.broadcast %cst_107 : f32 to vector<16x8x4xf32>
    %146 = arith.maximumf %144, %145 : vector<16x8x4xf32>
    %cst_108 = arith.constant 0.000000e+00 : f32
    %147 = vector.broadcast %cst_108 : f32 to vector<18x24x4xf32>
    %c0_109 = arith.constant 0 : index
    %c0_110 = arith.constant 0 : index
    %c0_111 = arith.constant 0 : index
    %148 = vector.load %arg7[%c0_109, %c0_110, %c0_111] : memref<18x24x4xf32, #tpu.memory_space<vmem>>, vector<18x24x4xf32>
    tpu.vector_store %arg7[%c0_109, %c0_110, %c0_111], %147 {strides = array<i32>} : memref<18x24x4xf32, #tpu.memory_space<vmem>>, vector<18x24x4xf32>,
    %c1_112 = arith.constant 1 : index
    %c0_113 = arith.constant 0 : index
    %c0_114 = arith.constant 0 : index
    %149 = vector.load %arg7[%c1_112, %c0_113, %c0_114] : memref<18x24x4xf32, #tpu.memory_space<vmem>>, vector<16x8x4xf32>
    tpu.vector_store %arg7[%c1_112, %c0_113, %c0_114], %142 {strides = array<i32>} : memref<18x24x4xf32, #tpu.memory_space<vmem>>, vector<16x8x4xf32>,
    %c1_115 = arith.constant 1 : index
    %c16_116 = arith.constant 16 : index
    %c0_117 = arith.constant 0 : index
    %150 = vector.load %arg7[%c1_115, %c16_116, %c0_117] : memref<18x24x4xf32, #tpu.memory_space<vmem>>, vector<16x8x4xf32>
    tpu.vector_store %arg7[%c1_115, %c16_116, %c0_117], %146 {strides = array<i32>} : memref<18x24x4xf32, #tpu.memory_space<vmem>>, vector<16x8x4xf32>,
    %cst_118 = arith.constant 0.000000e+00 : f32
    %151 = vector.broadcast %cst_118 : f32 to vector<128x8xf32>
    %cst_119 = arith.constant 0.000000e+00 : f32
    %152 = vector.broadcast %cst_119 : f32 to vector<128x8xf32>
    %c0_120 = arith.constant 0 : index
    %c0_121 = arith.constant 0 : index
    %c0_122 = arith.constant 0 : index
    %c0_123 = arith.constant 0 : index
    %153 = vector.load %arg4[%c0_120, %c0_121, %c0_122, %c0_123] : memref<3x3x4x8xf32, #tpu.memory_space<vmem>>, vector<1x1x4x8xf32>
    %154 = vector.shape_cast %153 : vector<1x1x4x8xf32> to vector<4x8xf32>
    %c0_124 = arith.constant 0 : index
    %c15_125 = arith.constant 15 : index
    %c0_126 = arith.constant 0 : index
    %155 = vector.load %arg7[%c0_124, %c15_125, %c0_126] : memref<18x24x4xf32, #tpu.memory_space<vmem>>, vector<16x8x4xf32>
    %156 = vector.shape_cast %155 : vector<16x8x4xf32> to vector<128x4xf32>
    %c0_127 = arith.constant 0 : index
    %c0_128 = arith.constant 0 : index
    %c0_129 = arith.constant 0 : index
    %157 = vector.load %arg7[%c0_127, %c0_128, %c0_129] : memref<18x24x4xf32, #tpu.memory_space<vmem>>, vector<16x8x4xf32>
    %158 = vector.shape_cast %157 : vector<16x8x4xf32> to vector<128x4xf32>
    %cst_130 = arith.constant dense<0.000000e+00> : vector<128x8xf32>
    %159 = tpu.matmul %156, %154, %cst_130 {dimension_numbers = #tpu.dot_dimension_numbers<[1], [0], [0], [1], [0, 0, 1, 1], [], []>} : vector<128x4xf32>, vector<4x8xf32>, vector<128x8xf32> -> vector<128x8xf32>
    %160 = arith.addf %151, %159 : vector<128x8xf32>
    %cst_131 = arith.constant dense<0.000000e+00> : vector<128x8xf32>
    %161 = tpu.matmul %158, %154, %cst_131 {dimension_numbers = #tpu.dot_dimension_numbers<[1], [0], [0], [1], [0, 0, 1, 1], [], []>} : vector<128x4xf32>, vector<4x8xf32>, vector<128x8xf32> -> vector<128x8xf32>
    %162 = arith.addf %152, %161 : vector<128x8xf32>
    %c0_132 = arith.constant 0 : index
    %c1_133 = arith.constant 1 : index
    %c0_134 = arith.constant 0 : index
    %c0_135 = arith.constant 0 : index
    %163 = vector.load %arg4[%c0_132, %c1_133, %c0_134, %c0_135] : memref<3x3x4x8xf32, #tpu.memory_space<vmem>>, vector<1x1x4x8xf32>
    %164 = vector.shape_cast %163 : vector<1x1x4x8xf32> to vector<4x8xf32>
    %c0_136 = arith.constant 0 : index
    %c0_137 = arith.constant 0 : index
    %c0_138 = arith.constant 0 : index
    %165 = vector.load %arg7[%c0_136, %c0_137, %c0_138] : memref<18x24x4xf32, #tpu.memory_space<vmem>>, vector<16x8x4xf32>
    %166 = vector.shape_cast %165 : vector<16x8x4xf32> to vector<128x4xf32>
    %c0_139 = arith.constant 0 : index
    %c16_140 = arith.constant 16 : index
    %c0_141 = arith.constant 0 : index
    %167 = vector.load %arg7[%c0_139, %c16_140, %c0_141] : memref<18x24x4xf32, #tpu.memory_space<vmem>>, vector<16x8x4xf32>
    %168 = vector.shape_cast %167 : vector<16x8x4xf32> to vector<128x4xf32>
    %cst_142 = arith.constant dense<0.000000e+00> : vector<128x8xf32>
    %169 = tpu.matmul %166, %164, %cst_142 {dimension_numbers = #tpu.dot_dimension_numbers<[1], [0], [0], [1], [0, 0, 1, 1], [], []>} : vector<128x4xf32>, vector<4x8xf32>, vector<128x8xf32> -> vector<128x8xf32>
    %170 = arith.addf %160, %169 : vector<128x8xf32>
    %cst_143 = arith.constant dense<0.000000e+00> : vector<128x8xf32>
    %171 = tpu.matmul %168, %164, %cst_143 {dimension_numbers = #tpu.dot_dimension_numbers<[1], [0], [0], [1], [0, 0, 1, 1], [], []>} : vector<128x4xf32>, vector<4x8xf32>, vector<128x8xf32> -> vector<128x8xf32>
    %172 = arith.addf %162, %171 : vector<128x8xf32>
    %c0_144 = arith.constant 0 : index
    %c2_145 = arith.constant 2 : index
    %c0_146 = arith.constant 0 : index
    %c0_147 = arith.constant 0 : index
    %173 = vector.load %arg4[%c0_144, %c2_145, %c0_146, %c0_147] : memref<3x3x4x8xf32, #tpu.memory_space<vmem>>, vector<1x1x4x8xf32>
    %174 = vector.shape_cast %173 : vector<1x1x4x8xf32> to vector<4x8xf32>
    %c0_148 = arith.constant 0 : index
    %c16_149 = arith.constant 16 : index
    %c0_150 = arith.constant 0 : index
    %175 = vector.load %arg7[%c0_148, %c16_149, %c0_150] : memref<18x24x4xf32, #tpu.memory_space<vmem>>, vector<16x8x4xf32>
    %176 = vector.shape_cast %175 : vector<16x8x4xf32> to vector<128x4xf32>
    %c0_151 = arith.constant 0 : index
    %c1_152 = arith.constant 1 : index
    %c0_153 = arith.constant 0 : index
    %177 = vector.load %arg7[%c0_151, %c1_152, %c0_153] : memref<18x24x4xf32, #tpu.memory_space<vmem>>, vector<16x8x4xf32>
    %178 = vector.shape_cast %177 : vector<16x8x4xf32> to vector<128x4xf32>
    %cst_154 = arith.constant dense<0.000000e+00> : vector<128x8xf32>
    %179 = tpu.matmul %176, %174, %cst_154 {dimension_numbers = #tpu.dot_dimension_numbers<[1], [0], [0], [1], [0, 0, 1, 1], [], []>} : vector<128x4xf32>, vector<4x8xf32>, vector<128x8xf32> -> vector<128x8xf32>
    %180 = arith.addf %170, %179 : vector<128x8xf32>
    %cst_155 = arith.constant dense<0.000000e+00> : vector<128x8xf32>
    %181 = tpu.matmul %178, %174, %cst_155 {dimension_numbers = #tpu.dot_dimension_numbers<[1], [0], [0], [1], [0, 0, 1, 1], [], []>} : vector<128x4xf32>, vector<4x8xf32>, vector<128x8xf32> -> vector<128x8xf32>
    %182 = arith.addf %172, %181 : vector<128x8xf32>
    %c1_156 = arith.constant 1 : index
    %c0_157 = arith.constant 0 : index
    %c0_158 = arith.constant 0 : index
    %c0_159 = arith.constant 0 : index
    %183 = vector.load %arg4[%c1_156, %c0_157, %c0_158, %c0_159] : memref<3x3x4x8xf32, #tpu.memory_space<vmem>>, vector<1x1x4x8xf32>
    %184 = vector.shape_cast %183 : vector<1x1x4x8xf32> to vector<4x8xf32>
    %c1_160 = arith.constant 1 : index
    %c15_161 = arith.constant 15 : index
    %c0_162 = arith.constant 0 : index
    %185 = vector.load %arg7[%c1_160, %c15_161, %c0_162] : memref<18x24x4xf32, #tpu.memory_space<vmem>>, vector<16x8x4xf32>
    %186 = vector.shape_cast %185 : vector<16x8x4xf32> to vector<128x4xf32>
    %c1_163 = arith.constant 1 : index
    %c0_164 = arith.constant 0 : index
    %c0_165 = arith.constant 0 : index
    %187 = vector.load %arg7[%c1_163, %c0_164, %c0_165] : memref<18x24x4xf32, #tpu.memory_space<vmem>>, vector<16x8x4xf32>
    %188 = vector.shape_cast %187 : vector<16x8x4xf32> to vector<128x4xf32>
    %cst_166 = arith.constant dense<0.000000e+00> : vector<128x8xf32>
    %189 = tpu.matmul %186, %184, %cst_166 {dimension_numbers = #tpu.dot_dimension_numbers<[1], [0], [0], [1], [0, 0, 1, 1], [], []>} : vector<128x4xf32>, vector<4x8xf32>, vector<128x8xf32> -> vector<128x8xf32>
    %190 = arith.addf %180, %189 : vector<128x8xf32>
    %cst_167 = arith.constant dense<0.000000e+00> : vector<128x8xf32>
    %191 = tpu.matmul %188, %184, %cst_167 {dimension_numbers = #tpu.dot_dimension_numbers<[1], [0], [0], [1], [0, 0, 1, 1], [], []>} : vector<128x4xf32>, vector<4x8xf32>, vector<128x8xf32> -> vector<128x8xf32>
    %192 = arith.addf %182, %191 : vector<128x8xf32>
    %c1_168 = arith.constant 1 : index
    %c1_169 = arith.constant 1 : index
    %c0_170 = arith.constant 0 : index
    %c0_171 = arith.constant 0 : index
    %193 = vector.load %arg4[%c1_168, %c1_169, %c0_170, %c0_171] : memref<3x3x4x8xf32, #tpu.memory_space<vmem>>, vector<1x1x4x8xf32>
    %194 = vector.shape_cast %193 : vector<1x1x4x8xf32> to vector<4x8xf32>
    %c1_172 = arith.constant 1 : index
    %c0_173 = arith.constant 0 : index
    %c0_174 = arith.constant 0 : index
    %195 = vector.load %arg7[%c1_172, %c0_173, %c0_174] : memref<18x24x4xf32, #tpu.memory_space<vmem>>, vector<16x8x4xf32>
    %196 = vector.shape_cast %195 : vector<16x8x4xf32> to vector<128x4xf32>
    %c1_175 = arith.constant 1 : index
    %c16_176 = arith.constant 16 : index
    %c0_177 = arith.constant 0 : index
    %197 = vector.load %arg7[%c1_175, %c16_176, %c0_177] : memref<18x24x4xf32, #tpu.memory_space<vmem>>, vector<16x8x4xf32>
    %198 = vector.shape_cast %197 : vector<16x8x4xf32> to vector<128x4xf32>
    %cst_178 = arith.constant dense<0.000000e+00> : vector<128x8xf32>
    %199 = tpu.matmul %196, %194, %cst_178 {dimension_numbers = #tpu.dot_dimension_numbers<[1], [0], [0], [1], [0, 0, 1, 1], [], []>} : vector<128x4xf32>, vector<4x8xf32>, vector<128x8xf32> -> vector<128x8xf32>
    %200 = arith.addf %190, %199 : vector<128x8xf32>
    %cst_179 = arith.constant dense<0.000000e+00> : vector<128x8xf32>
    %201 = tpu.matmul %198, %194, %cst_179 {dimension_numbers = #tpu.dot_dimension_numbers<[1], [0], [0], [1], [0, 0, 1, 1], [], []>} : vector<128x4xf32>, vector<4x8xf32>, vector<128x8xf32> -> vector<128x8xf32>
    %202 = arith.addf %192, %201 : vector<128x8xf32>
    %c1_180 = arith.constant 1 : index
    %c2_181 = arith.constant 2 : index
    %c0_182 = arith.constant 0 : index
    %c0_183 = arith.constant 0 : index
    %203 = vector.load %arg4[%c1_180, %c2_181, %c0_182, %c0_183] : memref<3x3x4x8xf32, #tpu.memory_space<vmem>>, vector<1x1x4x8xf32>
    %204 = vector.shape_cast %203 : vector<1x1x4x8xf32> to vector<4x8xf32>
    %c1_184 = arith.constant 1 : index
    %c16_185 = arith.constant 16 : index
    %c0_186 = arith.constant 0 : index
    %205 = vector.load %arg7[%c1_184, %c16_185, %c0_186] : memref<18x24x4xf32, #tpu.memory_space<vmem>>, vector<16x8x4xf32>
    %206 = vector.shape_cast %205 : vector<16x8x4xf32> to vector<128x4xf32>
    %c1_187 = arith.constant 1 : index
    %c1_188 = arith.constant 1 : index
    %c0_189 = arith.constant 0 : index
    %207 = vector.load %arg7[%c1_187, %c1_188, %c0_189] : memref<18x24x4xf32, #tpu.memory_space<vmem>>, vector<16x8x4xf32>
    %208 = vector.shape_cast %207 : vector<16x8x4xf32> to vector<128x4xf32>
    %cst_190 = arith.constant dense<0.000000e+00> : vector<128x8xf32>
    %209 = tpu.matmul %206, %204, %cst_190 {dimension_numbers = #tpu.dot_dimension_numbers<[1], [0], [0], [1], [0, 0, 1, 1], [], []>} : vector<128x4xf32>, vector<4x8xf32>, vector<128x8xf32> -> vector<128x8xf32>
    %210 = arith.addf %200, %209 : vector<128x8xf32>
    %cst_191 = arith.constant dense<0.000000e+00> : vector<128x8xf32>
    %211 = tpu.matmul %208, %204, %cst_191 {dimension_numbers = #tpu.dot_dimension_numbers<[1], [0], [0], [1], [0, 0, 1, 1], [], []>} : vector<128x4xf32>, vector<4x8xf32>, vector<128x8xf32> -> vector<128x8xf32>
    %212 = arith.addf %202, %211 : vector<128x8xf32>
    %c2_192 = arith.constant 2 : index
    %c0_193 = arith.constant 0 : index
    %c0_194 = arith.constant 0 : index
    %c0_195 = arith.constant 0 : index
    %213 = vector.load %arg4[%c2_192, %c0_193, %c0_194, %c0_195] : memref<3x3x4x8xf32, #tpu.memory_space<vmem>>, vector<1x1x4x8xf32>
    %214 = vector.shape_cast %213 : vector<1x1x4x8xf32> to vector<4x8xf32>
    %c2_196 = arith.constant 2 : index
    %c15_197 = arith.constant 15 : index
    %c0_198 = arith.constant 0 : index
    %215 = vector.load %arg7[%c2_196, %c15_197, %c0_198] : memref<18x24x4xf32, #tpu.memory_space<vmem>>, vector<16x8x4xf32>
    %216 = vector.shape_cast %215 : vector<16x8x4xf32> to vector<128x4xf32>
    %c2_199 = arith.constant 2 : index
    %c0_200 = arith.constant 0 : index
    %c0_201 = arith.constant 0 : index
    %217 = vector.load %arg7[%c2_199, %c0_200, %c0_201] : memref<18x24x4xf32, #tpu.memory_space<vmem>>, vector<16x8x4xf32>
    %218 = vector.shape_cast %217 : vector<16x8x4xf32> to vector<128x4xf32>
    %cst_202 = arith.constant dense<0.000000e+00> : vector<128x8xf32>
    %219 = tpu.matmul %216, %214, %cst_202 {dimension_numbers = #tpu.dot_dimension_numbers<[1], [0], [0], [1], [0, 0, 1, 1], [], []>} : vector<128x4xf32>, vector<4x8xf32>, vector<128x8xf32> -> vector<128x8xf32>
    %220 = arith.addf %210, %219 : vector<128x8xf32>
    %cst_203 = arith.constant dense<0.000000e+00> : vector<128x8xf32>
    %221 = tpu.matmul %218, %214, %cst_203 {dimension_numbers = #tpu.dot_dimension_numbers<[1], [0], [0], [1], [0, 0, 1, 1], [], []>} : vector<128x4xf32>, vector<4x8xf32>, vector<128x8xf32> -> vector<128x8xf32>
    %222 = arith.addf %212, %221 : vector<128x8xf32>
    %c2_204 = arith.constant 2 : index
    %c1_205 = arith.constant 1 : index
    %c0_206 = arith.constant 0 : index
    %c0_207 = arith.constant 0 : index
    %223 = vector.load %arg4[%c2_204, %c1_205, %c0_206, %c0_207] : memref<3x3x4x8xf32, #tpu.memory_space<vmem>>, vector<1x1x4x8xf32>
    %224 = vector.shape_cast %223 : vector<1x1x4x8xf32> to vector<4x8xf32>
    %c2_208 = arith.constant 2 : index
    %c0_209 = arith.constant 0 : index
    %c0_210 = arith.constant 0 : index
    %225 = vector.load %arg7[%c2_208, %c0_209, %c0_210] : memref<18x24x4xf32, #tpu.memory_space<vmem>>, vector<16x8x4xf32>
    %226 = vector.shape_cast %225 : vector<16x8x4xf32> to vector<128x4xf32>
    %c2_211 = arith.constant 2 : index
    %c16_212 = arith.constant 16 : index
    %c0_213 = arith.constant 0 : index
    %227 = vector.load %arg7[%c2_211, %c16_212, %c0_213] : memref<18x24x4xf32, #tpu.memory_space<vmem>>, vector<16x8x4xf32>
    %228 = vector.shape_cast %227 : vector<16x8x4xf32> to vector<128x4xf32>
    %cst_214 = arith.constant dense<0.000000e+00> : vector<128x8xf32>
    %229 = tpu.matmul %226, %224, %cst_214 {dimension_numbers = #tpu.dot_dimension_numbers<[1], [0], [0], [1], [0, 0, 1, 1], [], []>} : vector<128x4xf32>, vector<4x8xf32>, vector<128x8xf32> -> vector<128x8xf32>
    %230 = arith.addf %220, %229 : vector<128x8xf32>
    %cst_215 = arith.constant dense<0.000000e+00> : vector<128x8xf32>
    %231 = tpu.matmul %228, %224, %cst_215 {dimension_numbers = #tpu.dot_dimension_numbers<[1], [0], [0], [1], [0, 0, 1, 1], [], []>} : vector<128x4xf32>, vector<4x8xf32>, vector<128x8xf32> -> vector<128x8xf32>
    %232 = arith.addf %222, %231 : vector<128x8xf32>
    %c2_216 = arith.constant 2 : index
    %c2_217 = arith.constant 2 : index
    %c0_218 = arith.constant 0 : index
    %c0_219 = arith.constant 0 : index
    %233 = vector.load %arg4[%c2_216, %c2_217, %c0_218, %c0_219] : memref<3x3x4x8xf32, #tpu.memory_space<vmem>>, vector<1x1x4x8xf32>
    %234 = vector.shape_cast %233 : vector<1x1x4x8xf32> to vector<4x8xf32>
    %c2_220 = arith.constant 2 : index
    %c16_221 = arith.constant 16 : index
    %c0_222 = arith.constant 0 : index
    %235 = vector.load %arg7[%c2_220, %c16_221, %c0_222] : memref<18x24x4xf32, #tpu.memory_space<vmem>>, vector<16x8x4xf32>
    %236 = vector.shape_cast %235 : vector<16x8x4xf32> to vector<128x4xf32>
    %c2_223 = arith.constant 2 : index
    %c1_224 = arith.constant 1 : index
    %c0_225 = arith.constant 0 : index
    %237 = vector.load %arg7[%c2_223, %c1_224, %c0_225] : memref<18x24x4xf32, #tpu.memory_space<vmem>>, vector<16x8x4xf32>
    %238 = vector.shape_cast %237 : vector<16x8x4xf32> to vector<128x4xf32>
    %cst_226 = arith.constant dense<0.000000e+00> : vector<128x8xf32>
    %239 = tpu.matmul %236, %234, %cst_226 {dimension_numbers = #tpu.dot_dimension_numbers<[1], [0], [0], [1], [0, 0, 1, 1], [], []>} : vector<128x4xf32>, vector<4x8xf32>, vector<128x8xf32> -> vector<128x8xf32>
    %240 = arith.addf %230, %239 : vector<128x8xf32>
    %cst_227 = arith.constant dense<0.000000e+00> : vector<128x8xf32>
    %241 = tpu.matmul %238, %234, %cst_227 {dimension_numbers = #tpu.dot_dimension_numbers<[1], [0], [0], [1], [0, 0, 1, 1], [], []>} : vector<128x4xf32>, vector<4x8xf32>, vector<128x8xf32> -> vector<128x8xf32>
    %242 = arith.addf %232, %241 : vector<128x8xf32>
    %c0_228 = arith.constant 0 : index
    %c0_229 = arith.constant 0 : index
    %243 = vector.load %arg5[%c0_228, %c0_229] : memref<1x8xf32, #tpu.memory_space<vmem>>, vector<1x8xf32>
    %244 = vector.broadcast %243 : vector<1x8xf32> to vector<128x8xf32>
    %245 = arith.addf %240, %244 : vector<128x8xf32>
    %cst_230 = arith.constant 0.000000e+00 : f32
    %246 = vector.broadcast %cst_230 : f32 to vector<128x8xf32>
    %247 = arith.maximumf %245, %246 : vector<128x8xf32>
    %c0_231 = arith.constant 0 : index
    %c0_232 = arith.constant 0 : index
    %248 = vector.load %arg5[%c0_231, %c0_232] : memref<1x8xf32, #tpu.memory_space<vmem>>, vector<1x8xf32>
    %249 = vector.broadcast %248 : vector<1x8xf32> to vector<128x8xf32>
    %250 = arith.addf %242, %249 : vector<128x8xf32>
    %cst_233 = arith.constant 0.000000e+00 : f32
    %251 = vector.broadcast %cst_233 : f32 to vector<128x8xf32>
    %252 = arith.maximumf %250, %251 : vector<128x8xf32>
    %253 = arith.maximumf %247, %252 : vector<128x8xf32>
    %254 = vector.shape_cast %253 : vector<128x8xf32> to vector<8x2x8x8xf32>
    %255 = vector.extract_strided_slice %254 {offsets = [0, 0, 0, 0], sizes = [8, 1, 8, 8], strides = [1, 1, 1, 1]} : vector<8x2x8x8xf32> to vector<8x1x8x8xf32>
    %256 = vector.shape_cast %255 : vector<8x1x8x8xf32> to vector<8x8x8xf32>
    %257 = vector.extract_strided_slice %254 {offsets = [0, 1, 0, 0], sizes = [8, 1, 8, 8], strides = [1, 1, 1, 1]} : vector<8x2x8x8xf32> to vector<8x1x8x8xf32>
    %258 = vector.shape_cast %257 : vector<8x1x8x8xf32> to vector<8x8x8xf32>
    %259 = arith.maximumf %256, %258 : vector<8x8x8xf32>
    %260 = vector.shape_cast %259 : vector<8x8x8xf32> to vector<64x8xf32>
    %261 = arith.truncf %260 : vector<64x8xf32> to vector<64x8xbf16>
    %c0_234 = arith.constant 0 : index
    %c0_235 = arith.constant 0 : index
    %c0_236 = arith.constant 0 : index
    %262 = vector.load %arg6[%c0_234, %c0_235, %c0_236] : memref<1x64x8xbf16, #tpu.memory_space<vmem>>, vector<1x64x8xbf16>
    %263 = vector.shape_cast %262 : vector<1x64x8xbf16> to vector<64x8xbf16>
    %264 = vector.shape_cast %261 : vector<64x8xbf16> to vector<1x64x8xbf16>
    tpu.vector_store %arg6[%c0_234, %c0_235, %c0_236], %264 {strides = array<i32>} : memref<1x64x8xbf16, #tpu.memory_space<vmem>>, vector<1x64x8xbf16>,
    return
  }
  func.func @transform_0(%arg0: i32) -> (i32, i32, i32, i32) {
    %c0_i32 = arith.constant 0 : i32
    %c0_i32_0 = arith.constant 0 : i32
    %c0_i32_1 = arith.constant 0 : i32
    %c0_i32_2 = arith.constant 0 : i32
    return %arg0, %c0_i32, %c0_i32_0, %c0_i32_1 : i32, i32, i32, i32
  }
  func.func @transform_1(%arg0: i32) -> (i32, i32, i32, i32) {
    %c0_i32 = arith.constant 0 : i32
    %c0_i32_0 = arith.constant 0 : i32
    %c0_i32_1 = arith.constant 0 : i32
    %c0_i32_2 = arith.constant 0 : i32
    %c0_i32_3 = arith.constant 0 : i32
    return %c0_i32, %c0_i32_0, %c0_i32_1, %c0_i32_2 : i32, i32, i32, i32
  }
  func.func @transform_2(%arg0: i32) -> (i32, i32) {
    %c0_i32 = arith.constant 0 : i32
    %c0_i32_0 = arith.constant 0 : i32
    %c0_i32_1 = arith.constant 0 : i32
    return %c0_i32, %c0_i32_0 : i32, i32
  }
  func.func @transform_3(%arg0: i32) -> (i32, i32, i32, i32) {
    %c0_i32 = arith.constant 0 : i32
    %c0_i32_0 = arith.constant 0 : i32
    %c0_i32_1 = arith.constant 0 : i32
    %c0_i32_2 = arith.constant 0 : i32
    %c0_i32_3 = arith.constant 0 : i32
    return %c0_i32, %c0_i32_0, %c0_i32_1, %c0_i32_2 : i32, i32, i32, i32
  }
  func.func @transform_4(%arg0: i32) -> (i32, i32) {
    %c0_i32 = arith.constant 0 : i32
    %c0_i32_0 = arith.constant 0 : i32
    %c0_i32_1 = arith.constant 0 : i32
    return %c0_i32, %c0_i32_0 : i32, i32
  }
  func.func @transform_5(%arg0: i32) -> (i32, i32, i32) {
    %c0_i32 = arith.constant 0 : i32
    %c0_i32_0 = arith.constant 0 : i32
    %c0_i32_1 = arith.constant 0 : i32
    return %arg0, %c0_i32, %c0_i32_0 : i32, i32, i32
  }
}

</mosaic_0001>

<llo_original>
// kernel: tpu_custom_call.1
$region0: #{tpu_custom_call.1}
  #allocation0 [shape = 'u32[]', space=smem, size = 0x4, offset = 0x4, fixed_abs, tag = 'smem constant byte address 0x4 - core index']
  #allocation1 [shape = 'u32[144,128]{1,0:T(1,128)}', space=vmem, size = 0x12000, scoped, tag = 'internal scratch']
  #allocation2 [shape = 'f32[18,24,4]{2,1,0:T(8,128)}', space=vmem, size = 0x36000, scoped, tag = 'scratch operand']
  %s0 = inlined_call_operand.vmem [shape: f32[2,18,24,1], index: 0, kind: input, shape index: {}]
  %s1 = inlined_call_operand.vmem [shape: f32[3,3,1,4], index: 1, kind: input, shape index: {}]
  %s2 = inlined_call_operand.vmem [shape: f32[1,4], index: 2, kind: input, shape index: {}]
  %s3 = inlined_call_operand.vmem [shape: f32[3,3,4,8], index: 3, kind: input, shape index: {}]
  %s4 = inlined_call_operand.vmem [shape: f32[1,8], index: 4, kind: input, shape index: {}]
  %s5 = inlined_call_operand.vmem [shape: bf16[2,64,8], index: 5, kind: output, shape index: {}]
  %s6 = sld [smem:[#allocation0]]
  $region53: #{tpu_custom_call.1} parent=0
    _
  %s8 = ssub.s32 1, %s6
  %s9 = scalar_select 0, %s8, %s6
  loop: start=0, step=1, limit=4
  $region2: #{tpu_custom_call.1} parent=0 // loop_pre_header
    _
  $region3: #{tpu_custom_call.1} parent=0 // loop_header
    %s11 = sphi 0, %s15
    %p12 = scmp.ge.s32.totalorder %s11, 4
    %s21 = sphi 0, %s23
    %s24 = sphi 0, %s21
    %s25 = sphi 0, %s24
    %s41 = sphi 0, %s25
    %s45 = sphi 0, %s45
    %s47 = sphi 0, %s45
    %s48 = sphi 0, %s47
    %s62 = sphi 0, %s48
    %s66 = sphi 0, %s66
    %s68 = sphi 0, %s66
    %s69 = sphi 0, %s68
    %s83 = sphi 0, %s69
    %s87 = sphi 0, %s87
    %s89 = sphi 0, %s87
    %s90 = sphi 0, %s89
    %s104 = sphi 0, %s90
    %s108 = sphi 0, %s108
    %s110 = sphi 0, %s108
    %s111 = sphi 0, %s110
    %s125 = sphi 0, %s111
    %s131 = sphi 0, %s133
    %s134 = sphi 0, %s131
    %s135 = sphi 0, %s134
    %s151 = sphi 0, %s135
  $region4: #{tpu_custom_call.1} parent=0 // loop_header_branch
    %14 = sbr.rel (%p12) target = $region8
  $region5: #{tpu_custom_call.1} parent=0 // loop_body
    %s16 = ssub.s32 %s11, 1
    %s17 = ssub.s32 %s11, 2
    %s18 = sadd.s32 %s11, 1
    %s19 = ssub.s32 %s11, %s18
    %p20 = scmp.eq.s32.totalorder %s19, 0
    %s22 = sadd.s32 %s21, 1
    %s23 = scalar_select %p20, %s21, %s22
    %p26 = pneg %p20
    %p27 = scmp.eq.s32.totalorder %s11, 1
    %p28 = por %p26, %p27
    %p29 = scmp.ne.s32.totalorder %s21, %s24
    %p30 = scmp.eq.s32.totalorder %s11, 0
    %p31 = por %p29, %p30
    %p32 = scmp.ne.s32.totalorder %s21, %s24
    %p33 = scmp.eq.s32.totalorder %s16, 1
    %p34 = por %p32, %p33
    %p35 = scmp.ne.s32.totalorder %s24, %s25
    %p36 = scmp.eq.s32.totalorder %s16, 0
    %p37 = por %p35, %p36
    %p38 = scmp.ne.s32.totalorder %s24, %s25
    %p39 = scmp.eq.s32.totalorder %s17, 1
    %p40 = por %p38, %p39
    %p42 = scmp.ne.s32.totalorder %s25, %s41
    %p43 = scmp.eq.s32.totalorder %s17, 0
    %p44 = por %p42, %p43
    %s46 = sadd.s32 %s45, 1
    %p49 = scmp.eq.s32.totalorder %s11, 1
    %p50 = scmp.ne.s32.totalorder %s45, %s47
    %p51 = scmp.eq.s32.totalorder %s11, 0
    %p52 = por %p50, %p51
    %p53 = scmp.ne.s32.totalorder %s45, %s47
    %p54 = scmp.eq.s32.totalorder %s16, 1
    %p55 = por %p53, %p54
    %p56 = scmp.ne.s32.totalorder %s47, %s48
    %p57 = scmp.eq.s32.totalorder %s16, 0
    %p58 = por %p56, %p57
    %p59 = scmp.ne.s32.totalorder %s47, %s48
    %p60 = scmp.eq.s32.totalorder %s17, 1
    %p61 = por %p59, %p60
    %p63 = scmp.ne.s32.totalorder %s48, %s62
    %p64 = scmp.eq.s32.totalorder %s17, 0
    %p65 = por %p63, %p64
    %s67 = sadd.s32 %s66, 1
    %p70 = scmp.eq.s32.totalorder %s11, 1
    %p71 = scmp.ne.s32.totalorder %s66, %s68
    %p72 = scmp.eq.s32.totalorder %s11, 0
    %p73 = por %p71, %p72
    %p74 = scmp.ne.s32.totalorder %s66, %s68
    %p75 = scmp.eq.s32.totalorder %s16, 1
    %p76 = por %p74, %p75
    %p77 = scmp.ne.s32.totalorder %s68, %s69
    %p78 = scmp.eq.s32.totalorder %s16, 0
    %p79 = por %p77, %p78
    %p80 = scmp.ne.s32.totalorder %s68, %s69
    %p81 = scmp.eq.s32.totalorder %s17, 1
    %p82 = por %p80, %p81
    %p84 = scmp.ne.s32.totalorder %s69, %s83
    %p85 = scmp.eq.s32.totalorder %s17, 0
    %p86 = por %p84, %p85
    %s88 = sadd.s32 %s87, 1
    %p91 = scmp.eq.s32.totalorder %s11, 1
    %p92 = scmp.ne.s32.totalorder %s87, %s89
    %p93 = scmp.eq.s32.totalorder %s11, 0
    %p94 = por %p92, %p93
    %p95 = scmp.ne.s32.totalorder %s87, %s89
    %p96 = scmp.eq.s32.totalorder %s16, 1
    %p97 = por %p95, %p96
    %p98 = scmp.ne.s32.totalorder %s89, %s90
    %p99 = scmp.eq.s32.totalorder %s16, 0
    %p100 = por %p98, %p99
    %p101 = scmp.ne.s32.totalorder %s89, %s90
    %p102 = scmp.eq.s32.totalorder %s17, 1
    %p103 = por %p101, %p102
    %p105 = scmp.ne.s32.totalorder %s90, %s104
    %p106 = scmp.eq.s32.totalorder %s17, 0
    %p107 = por %p105, %p106
    %s109 = sadd.s32 %s108, 1
    %p112 = scmp.eq.s32.totalorder %s11, 1
    %p113 = scmp.ne.s32.totalorder %s108, %s110
    %p114 = scmp.eq.s32.totalorder %s11, 0
    %p115 = por %p113, %p114
    %p116 = scmp.ne.s32.totalorder %s108, %s110
    %p117 = scmp.eq.s32.totalorder %s16, 1
    %p118 = por %p116, %p117
    %p119 = scmp.ne.s32.totalorder %s110, %s111
    %p120 = scmp.eq.s32.totalorder %s16, 0
    %p121 = por %p119, %p120
    %p122 = scmp.ne.s32.totalorder %s110, %s111
    %p123 = scmp.eq.s32.totalorder %s17, 1
    %p124 = por %p122, %p123
    %p126 = scmp.ne.s32.totalorder %s111, %s125
    %p127 = scmp.eq.s32.totalorder %s17, 0
    %p128 = por %p126, %p127
    %s129 = ssub.s32 %s11, %s18
    %p130 = scmp.eq.s32.totalorder %s129, 0
    %s132 = sadd.s32 %s131, 1
    %s133 = scalar_select %p130, %s131, %s132
    %p136 = pneg %p130
    %p137 = scmp.eq.s32.totalorder %s11, 1
    %p138 = por %p136, %p137
    %p139 = scmp.ne.s32.totalorder %s131, %s134
    %p140 = scmp.eq.s32.totalorder %s11, 0
    %p141 = por %p139, %p140
    %p142 = scmp.ne.s32.totalorder %s131, %s134
    %p143 = scmp.eq.s32.totalorder %s16, 1
    %p144 = por %p142, %p143
    %p145 = scmp.ne.s32.totalorder %s134, %s135
    %p146 = scmp.eq.s32.totalorder %s16, 0
    %p147 = por %p145, %p146
    %p148 = scmp.ne.s32.totalorder %s134, %s135
    %p149 = scmp.eq.s32.totalorder %s17, 1
    %p150 = por %p148, %p149
    %p152 = scmp.ne.s32.totalorder %s135, %s151
    %p153 = scmp.eq.s32.totalorder %s17, 0
    %p154 = por %p152, %p153
    %p155 = scmp.le.s32.totalorder 1, %s11
    %p156 = scmp.lt.s32.totalorder %s11, 3
    %p157 = pnand %p155, %p156
    %p158 = pneg %p157
    // Predicated region
    $region9: #{tpu_custom_call.1} parent=5 // pred_check
      _
    $region10: #{tpu_custom_call.1} parent=5 // pred_check_branch
      %160 = sbr.rel (%p157) target = $region12
    $region11: #{tpu_custom_call.1} parent=5 // pred_region
      %s161 = ssub.s32 %s11, 1
      // Predicated region
      $region13: #{tpu_custom_call.1} parent=11 // pred_check
        %p162 = pneg %p58
      $region14: #{tpu_custom_call.1} parent=11 // pred_check_branch
        %164 = sbr.rel (%p162) target = $region16
      $region15: #{tpu_custom_call.1} parent=11 // pred_region
        _
      $region16: #{tpu_custom_call.1} parent=11 // pred_fallthru
        _
      // Predicated region
      $region17: #{tpu_custom_call.1} parent=11 // pred_check
        %p165 = pneg %p79
      $region18: #{tpu_custom_call.1} parent=11 // pred_check_branch
        %167 = sbr.rel (%p165) target = $region20
      $region19: #{tpu_custom_call.1} parent=11 // pred_region
        _
      $region20: #{tpu_custom_call.1} parent=11 // pred_fallthru
        _
      // Predicated region
      $region21: #{tpu_custom_call.1} parent=11 // pred_check
        %p168 = pneg %p100
      $region22: #{tpu_custom_call.1} parent=11 // pred_check_branch
        %170 = sbr.rel (%p168) target = $region24
      $region23: #{tpu_custom_call.1} parent=11 // pred_region
        _
      $region24: #{tpu_custom_call.1} parent=11 // pred_fallthru
        _
      // Predicated region
      $region25: #{tpu_custom_call.1} parent=11 // pred_check
        %p171 = pneg %p121
      $region26: #{tpu_custom_call.1} parent=11 // pred_check_branch
        %173 = sbr.rel (%p171) target = $region28
      $region27: #{tpu_custom_call.1} parent=11 // pred_region
        _
      $region28: #{tpu_custom_call.1} parent=11 // pred_fallthru
        _
    $region12: #{tpu_custom_call.1} parent=5 // pred_fallthru
      _
    %p174 = scmp.lt.s32.totalorder %s11, 2
    // Predicated region
    $region29: #{tpu_custom_call.1} parent=5 // pred_check
      %p175 = pneg %p174
    $region30: #{tpu_custom_call.1} parent=5 // pred_check_branch
      %177 = sbr.rel (%p175) target = $region32
    $region31: #{tpu_custom_call.1} parent=5 // pred_region
      // Predicated region
      $region33: #{tpu_custom_call.1} parent=31 // pred_check
        %p178 = pneg %p31
      $region34: #{tpu_custom_call.1} parent=31 // pred_check_branch
        %180 = sbr.rel (%p178) target = $region36
      $region35: #{tpu_custom_call.1} parent=31 // pred_region
        %p181 = scmp.lt.s32.totalorder %s11, 1
        %s182 = scalar_select %p181, %s11, 1
        %s183 = smul.addr %s182, 54
        %s184 = smul.addr %s183, 8
        %s185 = scalar_lea.vmem %s0, %s184
      $region36: #{tpu_custom_call.1} parent=31 // pred_fallthru
        _
    $region32: #{tpu_custom_call.1} parent=5 // pred_fallthru
      _
    %p186 = scmp.le.s32.totalorder 1, %s11
    %p187 = scmp.lt.s32.totalorder %s11, 3
    %p188 = pnand %p186, %p187
    %p189 = pneg %p188
    // Predicated region
    $region37: #{tpu_custom_call.1} parent=5 // pred_check
      _
    $region38: #{tpu_custom_call.1} parent=5 // pred_check_branch
      %191 = sbr.rel (%p188) target = $region40
    $region39: #{tpu_custom_call.1} parent=5 // pred_region
      %s192 = ssub.s32 %s11, 1
      %p193 = scmp.lt.s32.totalorder %s16, 1
      %s194 = scalar_select %p193, %s16, 1
      %s195 = smul.addr %s194, 54
      %s196 = smul.addr %s195, 8
      %s197 = scalar_lea.vmem %s0, %s196
      %p198 = pneg %p37
      %p199 = pneg %p34
      %p200 = pneg %p58
      %p201 = pneg %p55
      %p202 = pneg %p79
      %p203 = pneg %p76
      %p204 = pneg %p100
      %p205 = pneg %p97
      %p206 = pneg %p121
      %p207 = pneg %p118
      %p208 = pneg %p147
      %p209 = pneg %p144
      %p210 = scmp.lt.s32.totalorder %s16, 1
      %s211 = scalar_select %p210, %s16, 1
      %s212 = smul.addr %s211, 8
      %s213 = smul.addr %s212, 4
      %s214 = scalar_lea.vmem %s5, %s213
      %p215 = scmp.lt.s32.totalorder %s16, 1
      %s216 = scalar_select %p215, %s16, 1
      %s217 = smul.addr %s216, 54
      %s218 = smul.addr %s217, 8
      %s219 = scalar_lea.vmem %s0, %s218
      %p220 = scmp.lt.s32.totalorder %s16, 1
      %s221 = scalar_select %p220, %s16, 1
      %s222 = smul.addr %s221, 8
      %s223 = smul.addr %s222, 4
      %s224 = scalar_lea.vmem %s5, %s223
      %v225 = vld [vmem:[%s1] sm:$0x1]
      %v226 = vld [vmem:[%s219 + $0xf] sm:$0xff]
      %v227 = vld [vmem:[%s219 + $0x27] sm:$0xff]
      %v228 = vld [vmem:[%s219 + $0x3f] sm:$0xff]
      %v229 = vld [vmem:[%s219 + $0x57] sm:$0xff]
      %v230 = vld [vmem:[%s219 + $0x6f] sm:$0xff]
      %v231 = vld [vmem:[%s219 + $0x87] sm:$0xff]
      %v232 = vld [vmem:[%s219 + $0x9f] sm:$0xff]
      %v233 = vld [vmem:[%s219 + $0xb7] sm:$0xff]
      %v234 = vld [vmem:[%s219 + $0xcf] sm:$0xff]
      %v235 = vld [vmem:[%s219 + $0xe7] sm:$0xff]
      %v236 = vld [vmem:[%s219 + $0xff] sm:$0xff]
      %v237 = vld [vmem:[%s219 + $0x117] sm:$0xff]
      %v238 = vld [vmem:[%s219 + $0x12f] sm:$0xff]
      %v239 = vld [vmem:[%s219 + $0x147] sm:$0xff]
      %v240 = vld [vmem:[%s219 + $0x15f] sm:$0xff]
      %v241 = vld [vmem:[%s219 + $0x177] sm:$0xff]
      %243 = vset.pattern.permute.xlu0 0
      %244 = vperm.xlu0 %243, %v226
      %v245 = vpop.permute.xlu0 %244
      %248 = vset.pattern.permute.xlu0 0
      %249 = vperm.xlu0 %248, %v227
      %v250 = vpop.permute.xlu0 %249
      %253 = vset.pattern.permute.xlu0 0
      %254 = vperm.xlu0 %253, %v228
      %v255 = vpop.permute.xlu0 %254
      %258 = vset.pattern.permute.xlu0 0
      %259 = vperm.xlu0 %258, %v229
      %v260 = vpop.permute.xlu0 %259
      %263 = vset.pattern.permute.xlu0 0
      %264 = vperm.xlu0 %263, %v230
      %v265 = vpop.permute.xlu0 %264
      %268 = vset.pattern.permute.xlu0 0
      %269 = vperm.xlu0 %268, %v231
      %v270 = vpop.permute.xlu0 %269
      %273 = vset.pattern.permute.xlu0 0
      %274 = vperm.xlu0 %273, %v232
      %v275 = vpop.permute.xlu0 %274
      %278 = vset.pattern.permute.xlu0 0
      %279 = vperm.xlu0 %278, %v233
      %v280 = vpop.permute.xlu0 %279
      %283 = vset.pattern.permute.xlu0 0
      %284 = vperm.xlu0 %283, %v234
      %v285 = vpop.permute.xlu0 %284
      %288 = vset.pattern.permute.xlu0 0
      %289 = vperm.xlu0 %288, %v235
      %v290 = vpop.permute.xlu0 %289
      %293 = vset.pattern.permute.xlu0 0
      %294 = vperm.xlu0 %293, %v236
      %v295 = vpop.permute.xlu0 %294
      %298 = vset.pattern.permute.xlu0 0
      %299 = vperm.xlu0 %298, %v237
      %v300 = vpop.permute.xlu0 %299
      %303 = vset.pattern.permute.xlu0 0
      %304 = vperm.xlu0 %303, %v238
      %v305 = vpop.permute.xlu0 %304
      %308 = vset.pattern.permute.xlu0 0
      %309 = vperm.xlu0 %308, %v239
      %v310 = vpop.permute.xlu0 %309
      %313 = vset.pattern.permute.xlu0 0
      %314 = vperm.xlu0 %313, %v240
      %v315 = vpop.permute.xlu0 %314
      %318 = vset.pattern.permute.xlu0 0
      %319 = vperm.xlu0 %318, %v241
      %v320 = vpop.permute.xlu0 %319
      %v323 = vlaneseq
      %v324 = vshrl.u32 %v323, 7
      %v325 = vsub.s32 0, %v324
      %v326 = vrot.slane %v225, %v325
      %v328 = vmul.f32 %v245, %v326
      %v329 = vmul.f32 %v250, %v326
      %v330 = vmul.f32 %v255, %v326
      %v331 = vmul.f32 %v260, %v326
      %v332 = vmul.f32 %v265, %v326
      %v333 = vmul.f32 %v270, %v326
      %v334 = vmul.f32 %v275, %v326
      %v335 = vmul.f32 %v280, %v326
      %v336 = vmul.f32 %v285, %v326
      %v337 = vmul.f32 %v290, %v326
      %v338 = vmul.f32 %v295, %v326
      %v339 = vmul.f32 %v300, %v326
      %v340 = vmul.f32 %v305, %v326
      %v341 = vmul.f32 %v310, %v326
      %v342 = vmul.f32 %v315, %v326
      %v343 = vmul.f32 %v320, %v326
      %v344 = vadd.f32 %v328, 0.0
      %v345 = vadd.f32 %v329, 0.0
      %v346 = vadd.f32 %v330, 0.0
      %v347 = vadd.f32 %v331, 0.0
      %v348 = vadd.f32 %v332, 0.0
      %v349 = vadd.f32 %v333, 0.0
      %v350 = vadd.f32 %v334, 0.0
      %v351 = vadd.f32 %v335, 0.0
      %v352 = vadd.f32 %v336, 0.0
      %v353 = vadd.f32 %v337, 0.0
      %v354 = vadd.f32 %v338, 0.0
      %v355 = vadd.f32 %v339, 0.0
      %v356 = vadd.f32 %v340, 0.0
      %v357 = vadd.f32 %v341, 0.0
      %v358 = vadd.f32 %v342, 0.0
      %v359 = vadd.f32 %v343, 0.0
      %v360 = vld [vmem:[%s219] sm:$0xff]
      %v361 = vld [vmem:[%s219 + $0x18] sm:$0xff]
      %v362 = vld [vmem:[%s219 + $0x30] sm:$0xff]
      %v363 = vld [vmem:[%s219 + $0x48] sm:$0xff]
      %v364 = vld [vmem:[%s219 + $0x60] sm:$0xff]
      %v365 = vld [vmem:[%s219 + $0x78] sm:$0xff]
      %v366 = vld [vmem:[%s219 + $0x90] sm:$0xff]
      %v367 = vld [vmem:[%s219 + $0xa8] sm:$0xff]
      %v368 = vld [vmem:[%s219 + $0xc0] sm:$0xff]
      %v369 = vld [vmem:[%s219 + $0xd8] sm:$0xff]
      %v370 = vld [vmem:[%s219 + $0xf0] sm:$0xff]
      %v371 = vld [vmem:[%s219 + $0x108] sm:$0xff]
      %v372 = vld [vmem:[%s219 + $0x120] sm:$0xff]
      %v373 = vld [vmem:[%s219 + $0x138] sm:$0xff]
      %v374 = vld [vmem:[%s219 + $0x150] sm:$0xff]
      %v375 = vld [vmem:[%s219 + $0x168] sm:$0xff]
      %377 = vset.pattern.permute.xlu0 0
      %378 = vperm.xlu0 %377, %v360
      %v379 = vpop.permute.xlu0 %378
      %382 = vset.pattern.permute.xlu0 0
      %383 = vperm.xlu0 %382, %v361
      %v384 = vpop.permute.xlu0 %383
      %387 = vset.pattern.permute.xlu0 0
      %388 = vperm.xlu0 %387, %v362
      %v389 = vpop.permute.xlu0 %388
      %392 = vset.pattern.permute.xlu0 0
      %393 = vperm.xlu0 %392, %v363
      %v394 = vpop.permute.xlu0 %393
      %397 = vset.pattern.permute.xlu0 0
      %398 = vperm.xlu0 %397, %v364
      %v399 = vpop.permute.xlu0 %398
      %402 = vset.pattern.permute.xlu0 0
      %403 = vperm.xlu0 %402, %v365
      %v404 = vpop.permute.xlu0 %403
      %407 = vset.pattern.permute.xlu0 0
      %408 = vperm.xlu0 %407, %v366
      %v409 = vpop.permute.xlu0 %408
      %412 = vset.pattern.permute.xlu0 0
      %413 = vperm.xlu0 %412, %v367
      %v414 = vpop.permute.xlu0 %413
      %417 = vset.pattern.permute.xlu0 0
      %418 = vperm.xlu0 %417, %v368
      %v419 = vpop.permute.xlu0 %418
      %422 = vset.pattern.permute.xlu0 0
      %423 = vperm.xlu0 %422, %v369
      %v424 = vpop.permute.xlu0 %423
      %427 = vset.pattern.permute.xlu0 0
      %428 = vperm.xlu0 %427, %v370
      %v429 = vpop.permute.xlu0 %428
      %432 = vset.pattern.permute.xlu0 0
      %433 = vperm.xlu0 %432, %v371
      %v434 = vpop.permute.xlu0 %433
      %437 = vset.pattern.permute.xlu0 0
      %438 = vperm.xlu0 %437, %v372
      %v439 = vpop.permute.xlu0 %438
      %442 = vset.pattern.permute.xlu0 0
      %443 = vperm.xlu0 %442, %v373
      %v444 = vpop.permute.xlu0 %443
      %447 = vset.pattern.permute.xlu0 0
      %448 = vperm.xlu0 %447, %v374
      %v449 = vpop.permute.xlu0 %448
      %452 = vset.pattern.permute.xlu0 0
      %453 = vperm.xlu0 %452, %v375
      %v454 = vpop.permute.xlu0 %453
      %v456 = vmul.f32 %v379, %v326
      %v457 = vmul.f32 %v384, %v326
      %v458 = vmul.f32 %v389, %v326
      %v459 = vmul.f32 %v394, %v326
      %v460 = vmul.f32 %v399, %v326
      %v461 = vmul.f32 %v404, %v326
      %v462 = vmul.f32 %v409, %v326
      %v463 = vmul.f32 %v414, %v326
      %v464 = vmul.f32 %v419, %v326
      %v465 = vmul.f32 %v424, %v326
      %v466 = vmul.f32 %v429, %v326
      %v467 = vmul.f32 %v434, %v326
      %v468 = vmul.f32 %v439, %v326
      %v469 = vmul.f32 %v444, %v326
      %v470 = vmul.f32 %v449, %v326
      %v471 = vmul.f32 %v454, %v326
      %v472 = vadd.f32 %v456, 0.0
      %v473 = vadd.f32 %v457, 0.0
      %v474 = vadd.f32 %v458, 0.0
      %v475 = vadd.f32 %v459, 0.0
      %v476 = vadd.f32 %v460, 0.0
      %v477 = vadd.f32 %v461, 0.0
      %v478 = vadd.f32 %v462, 0.0
      %v479 = vadd.f32 %v463, 0.0
      %v480 = vadd.f32 %v464, 0.0
      %v481 = vadd.f32 %v465, 0.0
      %v482 = vadd.f32 %v466, 0.0
      %v483 = vadd.f32 %v467, 0.0
      %v484 = vadd.f32 %v468, 0.0
      %v485 = vadd.f32 %v469, 0.0
      %v486 = vadd.f32 %v470, 0.0
      %v487 = vadd.f32 %v471, 0.0
      %s488 = scalar_lea.vmem %s1, 1
      %v489 = vld [vmem:[%s488] sm:$0x1]
      %v491 = vlaneseq
      %v492 = vshrl.u32 %v491, 7
      %v493 = vsub.s32 0, %v492
      %v494 = vrot.slane %v489, %v493
      %v496 = vmul.f32 %v379, %v494
      %v497 = vmul.f32 %v384, %v494
      %v498 = vmul.f32 %v389, %v494
      %v499 = vmul.f32 %v394, %v494
      %v500 = vmul.f32 %v399, %v494
      %v501 = vmul.f32 %v404, %v494
      %v502 = vmul.f32 %v409, %v494
      %v503 = vmul.f32 %v414, %v494
      %v504 = vmul.f32 %v419, %v494
      %v505 = vmul.f32 %v424, %v494
      %v506 = vmul.f32 %v429, %v494
      %v507 = vmul.f32 %v434, %v494
      %v508 = vmul.f32 %v439, %v494
      %v509 = vmul.f32 %v444, %v494
      %v510 = vmul.f32 %v449, %v494
      %v511 = vmul.f32 %v454, %v494
      %v512 = vadd.f32 %v344, %v496
      %v513 = vadd.f32 %v345, %v497
      %v514 = vadd.f32 %v346, %v498
      %v515 = vadd.f32 %v347, %v499
      %v516 = vadd.f32 %v348, %v500
      %v517 = vadd.f32 %v349, %v501
      %v518 = vadd.f32 %v350, %v502
      %v519 = vadd.f32 %v351, %v503
      %v520 = vadd.f32 %v352, %v504
      %v521 = vadd.f32 %v353, %v505
      %v522 = vadd.f32 %v354, %v506
      %v523 = vadd.f32 %v355, %v507
      %v524 = vadd.f32 %v356, %v508
      %v525 = vadd.f32 %v357, %v509
      %v526 = vadd.f32 %v358, %v510
      %v527 = vadd.f32 %v359, %v511
      %v528 = vld [vmem:[%s219 + $0x10] sm:$0xff]
      %v529 = vld [vmem:[%s219 + $0x28] sm:$0xff]
      %v530 = vld [vmem:[%s219 + $0x40] sm:$0xff]
      %v531 = vld [vmem:[%s219 + $0x58] sm:$0xff]
      %v532 = vld [vmem:[%s219 + $0x70] sm:$0xff]
      %v533 = vld [vmem:[%s219 + $0x88] sm:$0xff]
      %v534 = vld [vmem:[%s219 + $0xa0] sm:$0xff]
      %v535 = vld [vmem:[%s219 + $0xb8] sm:$0xff]
      %v536 = vld [vmem:[%s219 + $0xd0] sm:$0xff]
      %v537 = vld [vmem:[%s219 + $0xe8] sm:$0xff]
      %v538 = vld [vmem:[%s219 + $0x100] sm:$0xff]
      %v539 = vld [vmem:[%s219 + $0x118] sm:$0xff]
      %v540 = vld [vmem:[%s219 + $0x130] sm:$0xff]
      %v541 = vld [vmem:[%s219 + $0x148] sm:$0xff]
      %v542 = vld [vmem:[%s219 + $0x160] sm:$0xff]
      %v543 = vld [vmem:[%s219 + $0x178] sm:$0xff]
      %545 = vset.pattern.permute.xlu0 0
      %546 = vperm.xlu0 %545, %v528
      %v547 = vpop.permute.xlu0 %546
      %550 = vset.pattern.permute.xlu0 0
      %551 = vperm.xlu0 %550, %v529
      %v552 = vpop.permute.xlu0 %551
      %555 = vset.pattern.permute.xlu0 0
      %556 = vperm.xlu0 %555, %v530
      %v557 = vpop.permute.xlu0 %556
      %560 = vset.pattern.permute.xlu0 0
      %561 = vperm.xlu0 %560, %v531
      %v562 = vpop.permute.xlu0 %561
      %565 = vset.pattern.permute.xlu0 0
      %566 = vperm.xlu0 %565, %v532
      %v567 = vpop.permute.xlu0 %566
      %570 = vset.pattern.permute.xlu0 0
      %571 = vperm.xlu0 %570, %v533
      %v572 = vpop.permute.xlu0 %571
      %575 = vset.pattern.permute.xlu0 0
      %576 = vperm.xlu0 %575, %v534
      %v577 = vpop.permute.xlu0 %576
      %580 = vset.pattern.permute.xlu0 0
      %581 = vperm.xlu0 %580, %v535
      %v582 = vpop.permute.xlu0 %581
      %585 = vset.pattern.permute.xlu0 0
      %586 = vperm.xlu0 %585, %v536
      %v587 = vpop.permute.xlu0 %586
      %590 = vset.pattern.permute.xlu0 0
      %591 = vperm.xlu0 %590, %v537
      %v592 = vpop.permute.xlu0 %591
      %595 = vset.pattern.permute.xlu0 0
      %596 = vperm.xlu0 %595, %v538
      %v597 = vpop.permute.xlu0 %596
      %600 = vset.pattern.permute.xlu0 0
      %601 = vperm.xlu0 %600, %v539
      %v602 = vpop.permute.xlu0 %601
      %605 = vset.pattern.permute.xlu0 0
      %606 = vperm.xlu0 %605, %v540
      %v607 = vpop.permute.xlu0 %606
      %610 = vset.pattern.permute.xlu0 0
      %611 = vperm.xlu0 %610, %v541
      %v612 = vpop.permute.xlu0 %611
      %615 = vset.pattern.permute.xlu0 0
      %616 = vperm.xlu0 %615, %v542
      %v617 = vpop.permute.xlu0 %616
      %620 = vset.pattern.permute.xlu0 0
      %621 = vperm.xlu0 %620, %v543
      %v622 = vpop.permute.xlu0 %621
      %v624 = vmul.f32 %v547, %v494
      %v625 = vmul.f32 %v552, %v494
      %v626 = vmul.f32 %v557, %v494
      %v627 = vmul.f32 %v562, %v494
      %v628 = vmul.f32 %v567, %v494
      %v629 = vmul.f32 %v572, %v494
      %v630 = vmul.f32 %v577, %v494
      %v631 = vmul.f32 %v582, %v494
      %v632 = vmul.f32 %v587, %v494
      %v633 = vmul.f32 %v592, %v494
      %v634 = vmul.f32 %v597, %v494
      %v635 = vmul.f32 %v602, %v494
      %v636 = vmul.f32 %v607, %v494
      %v637 = vmul.f32 %v612, %v494
      %v638 = vmul.f32 %v617, %v494
      %v639 = vmul.f32 %v622, %v494
      %v640 = vadd.f32 %v472, %v624
      %v641 = vadd.f32 %v473, %v625
      %v642 = vadd.f32 %v474, %v626
      %v643 = vadd.f32 %v475, %v627
      %v644 = vadd.f32 %v476, %v628
      %v645 = vadd.f32 %v477, %v629
      %v646 = vadd.f32 %v478, %v630
      %v647 = vadd.f32 %v479, %v631
      %v648 = vadd.f32 %v480, %v632
      %v649 = vadd.f32 %v481, %v633
      %v650 = vadd.f32 %v482, %v634
      %v651 = vadd.f32 %v483, %v635
      %v652 = vadd.f32 %v484, %v636
      %v653 = vadd.f32 %v485, %v637
      %v654 = vadd.f32 %v486, %v638
      %v655 = vadd.f32 %v487, %v639
      %s656 = scalar_lea.vmem %s1, 2
      %v657 = vld [vmem:[%s656] sm:$0x1]
      %v659 = vlaneseq
      %v660 = vshrl.u32 %v659, 7
      %v661 = vsub.s32 0, %v660
      %v662 = vrot.slane %v657, %v661
      %v664 = vmul.f32 %v547, %v662
      %v665 = vmul.f32 %v552, %v662
      %v666 = vmul.f32 %v557, %v662
      %v667 = vmul.f32 %v562, %v662
      %v668 = vmul.f32 %v567, %v662
      %v669 = vmul.f32 %v572, %v662
      %v670 = vmul.f32 %v577, %v662
      %v671 = vmul.f32 %v582, %v662
      %v672 = vmul.f32 %v587, %v662
      %v673 = vmul.f32 %v592, %v662
      %v674 = vmul.f32 %v597, %v662
      %v675 = vmul.f32 %v602, %v662
      %v676 = vmul.f32 %v607, %v662
      %v677 = vmul.f32 %v612, %v662
      %v678 = vmul.f32 %v617, %v662
      %v679 = vmul.f32 %v622, %v662
      %v680 = vadd.f32 %v512, %v664
      %v681 = vadd.f32 %v513, %v665
      %v682 = vadd.f32 %v514, %v666
      %v683 = vadd.f32 %v515, %v667
      %v684 = vadd.f32 %v516, %v668
      %v685 = vadd.f32 %v517, %v669
      %v686 = vadd.f32 %v518, %v670
      %v687 = vadd.f32 %v519, %v671
      %v688 = vadd.f32 %v520, %v672
      %v689 = vadd.f32 %v521, %v673
      %v690 = vadd.f32 %v522, %v674
      %v691 = vadd.f32 %v523, %v675
      %v692 = vadd.f32 %v524, %v676
      %v693 = vadd.f32 %v525, %v677
      %v694 = vadd.f32 %v526, %v678
      %v695 = vadd.f32 %v527, %v679
      %v696 = vld [vmem:[%s219 + $0x1] sm:$0xff]
      %v697 = vld [vmem:[%s219 + $0x19] sm:$0xff]
      %v698 = vld [vmem:[%s219 + $0x31] sm:$0xff]
      %v699 = vld [vmem:[%s219 + $0x49] sm:$0xff]
      %v700 = vld [vmem:[%s219 + $0x61] sm:$0xff]
      %v701 = vld [vmem:[%s219 + $0x79] sm:$0xff]
      %v702 = vld [vmem:[%s219 + $0x91] sm:$0xff]
      %v703 = vld [vmem:[%s219 + $0xa9] sm:$0xff]
      %v704 = vld [vmem:[%s219 + $0xc1] sm:$0xff]
      %v705 = vld [vmem:[%s219 + $0xd9] sm:$0xff]
      %v706 = vld [vmem:[%s219 + $0xf1] sm:$0xff]
      %v707 = vld [vmem:[%s219 + $0x109] sm:$0xff]
      %v708 = vld [vmem:[%s219 + $0x121] sm:$0xff]
      %v709 = vld [vmem:[%s219 + $0x139] sm:$0xff]
      %v710 = vld [vmem:[%s219 + $0x151] sm:$0xff]
      %v711 = vld [vmem:[%s219 + $0x169] sm:$0xff]
      %713 = vset.pattern.permute.xlu0 0
      %714 = vperm.xlu0 %713, %v696
      %v715 = vpop.permute.xlu0 %714
      %718 = vset.pattern.permute.xlu0 0
      %719 = vperm.xlu0 %718, %v697
      %v720 = vpop.permute.xlu0 %719
      %723 = vset.pattern.permute.xlu0 0
      %724 = vperm.xlu0 %723, %v698
      %v725 = vpop.permute.xlu0 %724
      %728 = vset.pattern.permute.xlu0 0
      %729 = vperm.xlu0 %728, %v699
      %v730 = vpop.permute.xlu0 %729
      %733 = vset.pattern.permute.xlu0 0
      %734 = vperm.xlu0 %733, %v700
      %v735 = vpop.permute.xlu0 %734
      %738 = vset.pattern.permute.xlu0 0
      %739 = vperm.xlu0 %738, %v701
      %v740 = vpop.permute.xlu0 %739
      %743 = vset.pattern.permute.xlu0 0
      %744 = vperm.xlu0 %743, %v702
      %v745 = vpop.permute.xlu0 %744
      %748 = vset.pattern.permute.xlu0 0
      %749 = vperm.xlu0 %748, %v703
      %v750 = vpop.permute.xlu0 %749
      %753 = vset.pattern.permute.xlu0 0
      %754 = vperm.xlu0 %753, %v704
      %v755 = vpop.permute.xlu0 %754
      %758 = vset.pattern.permute.xlu0 0
      %759 = vperm.xlu0 %758, %v705
      %v760 = vpop.permute.xlu0 %759
      %763 = vset.pattern.permute.xlu0 0
      %764 = vperm.xlu0 %763, %v706
      %v765 = vpop.permute.xlu0 %764
      %768 = vset.pattern.permute.xlu0 0
      %769 = vperm.xlu0 %768, %v707
      %v770 = vpop.permute.xlu0 %769
      %773 = vset.pattern.permute.xlu0 0
      %774 = vperm.xlu0 %773, %v708
      %v775 = vpop.permute.xlu0 %774
      %778 = vset.pattern.permute.xlu0 0
      %779 = vperm.xlu0 %778, %v709
      %v780 = vpop.permute.xlu0 %779
      %783 = vset.pattern.permute.xlu0 0
      %784 = vperm.xlu0 %783, %v710
      %v785 = vpop.permute.xlu0 %784
      %788 = vset.pattern.permute.xlu0 0
      %789 = vperm.xlu0 %788, %v711
      %v790 = vpop.permute.xlu0 %789
      %v792 = vmul.f32 %v715, %v662
      %v793 = vmul.f32 %v720, %v662
      %v794 = vmul.f32 %v725, %v662
      %v795 = vmul.f32 %v730, %v662
      %v796 = vmul.f32 %v735, %v662
      %v797 = vmul.f32 %v740, %v662
      %v798 = vmul.f32 %v745, %v662
      %v799 = vmul.f32 %v750, %v662
      %v800 = vmul.f32 %v755, %v662
      %v801 = vmul.f32 %v760, %v662
      %v802 = vmul.f32 %v765, %v662
      %v803 = vmul.f32 %v770, %v662
      %v804 = vmul.f32 %v775, %v662
      %v805 = vmul.f32 %v780, %v662
      %v806 = vmul.f32 %v785, %v662
      %v807 = vmul.f32 %v790, %v662
      %v808 = vadd.f32 %v640, %v792
      %v809 = vadd.f32 %v641, %v793
      %v810 = vadd.f32 %v642, %v794
      %v811 = vadd.f32 %v643, %v795
      %v812 = vadd.f32 %v644, %v796
      %v813 = vadd.f32 %v645, %v797
      %v814 = vadd.f32 %v646, %v798
      %v815 = vadd.f32 %v647, %v799
      %v816 = vadd.f32 %v648, %v800
      %v817 = vadd.f32 %v649, %v801
      %v818 = vadd.f32 %v650, %v802
      %v819 = vadd.f32 %v651, %v803
      %v820 = vadd.f32 %v652, %v804
      %v821 = vadd.f32 %v653, %v805
      %v822 = vadd.f32 %v654, %v806
      %v823 = vadd.f32 %v655, %v807
      %s824 = scalar_lea.vmem %s1, 3
      %v825 = vld [vmem:[%s824] sm:$0x1]
      %s826 = scalar_lea.vmem %s219, 24
      %v827 = vld [vmem:[%s826 + $0xf] sm:$0xff]
      %v828 = vld [vmem:[%s826 + $0x27] sm:$0xff]
      %v829 = vld [vmem:[%s826 + $0x3f] sm:$0xff]
      %v830 = vld [vmem:[%s826 + $0x57] sm:$0xff]
      %v831 = vld [vmem:[%s826 + $0x6f] sm:$0xff]
      %v832 = vld [vmem:[%s826 + $0x87] sm:$0xff]
      %v833 = vld [vmem:[%s826 + $0x9f] sm:$0xff]
      %v834 = vld [vmem:[%s826 + $0xb7] sm:$0xff]
      %v835 = vld [vmem:[%s826 + $0xcf] sm:$0xff]
      %v836 = vld [vmem:[%s826 + $0xe7] sm:$0xff]
      %v837 = vld [vmem:[%s826 + $0xff] sm:$0xff]
      %v838 = vld [vmem:[%s826 + $0x117] sm:$0xff]
      %v839 = vld [vmem:[%s826 + $0x12f] sm:$0xff]
      %v840 = vld [vmem:[%s826 + $0x147] sm:$0xff]
      %v841 = vld [vmem:[%s826 + $0x15f] sm:$0xff]
      %v842 = vld [vmem:[%s826 + $0x177] sm:$0xff]
      %844 = vset.pattern.permute.xlu0 0
      %845 = vperm.xlu0 %844, %v827
      %v846 = vpop.permute.xlu0 %845
      %849 = vset.pattern.permute.xlu0 0
      %850 = vperm.xlu0 %849, %v828
      %v851 = vpop.permute.xlu0 %850
      %854 = vset.pattern.permute.xlu0 0
      %855 = vperm.xlu0 %854, %v829
      %v856 = vpop.permute.xlu0 %855
      %859 = vset.pattern.permute.xlu0 0
      %860 = vperm.xlu0 %859, %v830
      %v861 = vpop.permute.xlu0 %860
      %864 = vset.pattern.permute.xlu0 0
      %865 = vperm.xlu0 %864, %v831
      %v866 = vpop.permute.xlu0 %865
      %869 = vset.pattern.permute.xlu0 0
      %870 = vperm.xlu0 %869, %v832
      %v871 = vpop.permute.xlu0 %870
      %874 = vset.pattern.permute.xlu0 0
      %875 = vperm.xlu0 %874, %v833
      %v876 = vpop.permute.xlu0 %875
      %879 = vset.pattern.permute.xlu0 0
      %880 = vperm.xlu0 %879, %v834
      %v881 = vpop.permute.xlu0 %880
      %884 = vset.pattern.permute.xlu0 0
      %885 = vperm.xlu0 %884, %v835
      %v886 = vpop.permute.xlu0 %885
      %889 = vset.pattern.permute.xlu0 0
      %890 = vperm.xlu0 %889, %v836
      %v891 = vpop.permute.xlu0 %890
      %894 = vset.pattern.permute.xlu0 0
      %895 = vperm.xlu0 %894, %v837
      %v896 = vpop.permute.xlu0 %895
      %899 = vset.pattern.permute.xlu0 0
      %900 = vperm.xlu0 %899, %v838
      %v901 = vpop.permute.xlu0 %900
      %904 = vset.pattern.permute.xlu0 0
      %905 = vperm.xlu0 %904, %v839
      %v906 = vpop.permute.xlu0 %905
      %909 = vset.pattern.permute.xlu0 0
      %910 = vperm.xlu0 %909, %v840
      %v911 = vpop.permute.xlu0 %910
      %914 = vset.pattern.permute.xlu0 0
      %915 = vperm.xlu0 %914, %v841
      %v916 = vpop.permute.xlu0 %915
      %919 = vset.pattern.permute.xlu0 0
      %920 = vperm.xlu0 %919, %v842
      %v921 = vpop.permute.xlu0 %920
      %v924 = vlaneseq
      %v925 = vshrl.u32 %v924, 7
      %v926 = vsub.s32 0, %v925
      %v927 = vrot.slane %v825, %v926
      %v929 = vmul.f32 %v846, %v927
      %v930 = vmul.f32 %v851, %v927
      %v931 = vmul.f32 %v856, %v927
      %v932 = vmul.f32 %v861, %v927
      %v933 = vmul.f32 %v866, %v927
      %v934 = vmul.f32 %v871, %v927
      %v935 = vmul.f32 %v876, %v927
      %v936 = vmul.f32 %v881, %v927
      %v937 = vmul.f32 %v886, %v927
      %v938 = vmul.f32 %v891, %v927
      %v939 = vmul.f32 %v896, %v927
      %v940 = vmul.f32 %v901, %v927
      %v941 = vmul.f32 %v906, %v927
      %v942 = vmul.f32 %v911, %v927
      %v943 = vmul.f32 %v916, %v927
      %v944 = vmul.f32 %v921, %v927
      %v945 = vadd.f32 %v680, %v929
      %v946 = vadd.f32 %v681, %v930
      %v947 = vadd.f32 %v682, %v931
      %v948 = vadd.f32 %v683, %v932
      %v949 = vadd.f32 %v684, %v933
      %v950 = vadd.f32 %v685, %v934
      %v951 = vadd.f32 %v686, %v935
      %v952 = vadd.f32 %v687, %v936
      %v953 = vadd.f32 %v688, %v937
      %v954 = vadd.f32 %v689, %v938
      %v955 = vadd.f32 %v690, %v939
      %v956 = vadd.f32 %v691, %v940
      %v957 = vadd.f32 %v692, %v941
      %v958 = vadd.f32 %v693, %v942
      %v959 = vadd.f32 %v694, %v943
      %v960 = vadd.f32 %v695, %v944
      %v961 = vld [vmem:[%s826] sm:$0xff]
      %v962 = vld [vmem:[%s826 + $0x18] sm:$0xff]
      %v963 = vld [vmem:[%s826 + $0x30] sm:$0xff]
      %v964 = vld [vmem:[%s826 + $0x48] sm:$0xff]
      %v965 = vld [vmem:[%s826 + $0x60] sm:$0xff]
      %v966 = vld [vmem:[%s826 + $0x78] sm:$0xff]
      %v967 = vld [vmem:[%s826 + $0x90] sm:$0xff]
      %v968 = vld [vmem:[%s826 + $0xa8] sm:$0xff]
      %v969 = vld [vmem:[%s826 + $0xc0] sm:$0xff]
      %v970 = vld [vmem:[%s826 + $0xd8] sm:$0xff]
      %v971 = vld [vmem:[%s826 + $0xf0] sm:$0xff]
      %v972 = vld [vmem:[%s826 + $0x108] sm:$0xff]
      %v973 = vld [vmem:[%s826 + $0x120] sm:$0xff]
      %v974 = vld [vmem:[%s826 + $0x138] sm:$0xff]
      %v975 = vld [vmem:[%s826 + $0x150] sm:$0xff]
      %v976 = vld [vmem:[%s826 + $0x168] sm:$0xff]
      %978 = vset.pattern.permute.xlu0 0
      %979 = vperm.xlu0 %978, %v961
      %v980 = vpop.permute.xlu0 %979
      %983 = vset.pattern.permute.xlu0 0
      %984 = vperm.xlu0 %983, %v962
      %v985 = vpop.permute.xlu0 %984
      %988 = vset.pattern.permute.xlu0 0
      %989 = vperm.xlu0 %988, %v963
      %v990 = vpop.permute.xlu0 %989
      %993 = vset.pattern.permute.xlu0 0
      %994 = vperm.xlu0 %993, %v964
      %v995 = vpop.permute.xlu0 %994
      %998 = vset.pattern.permute.xlu0 0
      %999 = vperm.xlu0 %998, %v965
      %v1000 = vpop.permute.xlu0 %999
      %1003 = vset.pattern.permute.xlu0 0
      %1004 = vperm.xlu0 %1003, %v966
      %v1005 = vpop.permute.xlu0 %1004
      %1008 = vset.pattern.permute.xlu0 0
      %1009 = vperm.xlu0 %1008, %v967
      %v1010 = vpop.permute.xlu0 %1009
      %1013 = vset.pattern.permute.xlu0 0
      %1014 = vperm.xlu0 %1013, %v968
      %v1015 = vpop.permute.xlu0 %1014
      %1018 = vset.pattern.permute.xlu0 0
      %1019 = vperm.xlu0 %1018, %v969
      %v1020 = vpop.permute.xlu0 %1019
      %1023 = vset.pattern.permute.xlu0 0
      %1024 = vperm.xlu0 %1023, %v970
      %v1025 = vpop.permute.xlu0 %1024
      %1028 = vset.pattern.permute.xlu0 0
      %1029 = vperm.xlu0 %1028, %v971
      %v1030 = vpop.permute.xlu0 %1029
      %1033 = vset.pattern.permute.xlu0 0
      %1034 = vperm.xlu0 %1033, %v972
      %v1035 = vpop.permute.xlu0 %1034
      %1038 = vset.pattern.permute.xlu0 0
      %1039 = vperm.xlu0 %1038, %v973
      %v1040 = vpop.permute.xlu0 %1039
      %1043 = vset.pattern.permute.xlu0 0
      %1044 = vperm.xlu0 %1043, %v974
      %v1045 = vpop.permute.xlu0 %1044
      %1048 = vset.pattern.permute.xlu0 0
      %1049 = vperm.xlu0 %1048, %v975
      %v1050 = vpop.permute.xlu0 %1049
      %1053 = vset.pattern.permute.xlu0 0
      %1054 = vperm.xlu0 %1053, %v976
      %v1055 = vpop.permute.xlu0 %1054
      %v1057 = vmul.f32 %v980, %v927
      %v1058 = vmul.f32 %v985, %v927
      %v1059 = vmul.f32 %v990, %v927
      %v1060 = vmul.f32 %v995, %v927
      %v1061 = vmul.f32 %v1000, %v927
      %v1062 = vmul.f32 %v1005, %v927
      %v1063 = vmul.f32 %v1010, %v927
      %v1064 = vmul.f32 %v1015, %v927
      %v1065 = vmul.f32 %v1020, %v927
      %v1066 = vmul.f32 %v1025, %v927
      %v1067 = vmul.f32 %v1030, %v927
      %v1068 = vmul.f32 %v1035, %v927
      %v1069 = vmul.f32 %v1040, %v927
      %v1070 = vmul.f32 %v1045, %v927
      %v1071 = vmul.f32 %v1050, %v927
      %v1072 = vmul.f32 %v1055, %v927
      %v1073 = vadd.f32 %v808, %v1057
      %v1074 = vadd.f32 %v809, %v1058
      %v1075 = vadd.f32 %v810, %v1059
      %v1076 = vadd.f32 %v811, %v1060
      %v1077 = vadd.f32 %v812, %v1061
      %v1078 = vadd.f32 %v813, %v1062
      %v1079 = vadd.f32 %v814, %v1063
      %v1080 = vadd.f32 %v815, %v1064
      %v1081 = vadd.f32 %v816, %v1065
      %v1082 = vadd.f32 %v817, %v1066
      %v1083 = vadd.f32 %v818, %v1067
      %v1084 = vadd.f32 %v819, %v1068
      %v1085 = vadd.f32 %v820, %v1069
      %v1086 = vadd.f32 %v821, %v1070
      %v1087 = vadd.f32 %v822, %v1071
      %v1088 = vadd.f32 %v823, %v1072
      %s1089 = scalar_lea.vmem %s1, 4
      %v1090 = vld [vmem:[%s1089] sm:$0x1]
      %v1092 = vlaneseq
      %v1093 = vshrl.u32 %v1092, 7
      %v1094 = vsub.s32 0, %v1093
      %v1095 = vrot.slane %v1090, %v1094
      %v1097 = vmul.f32 %v980, %v1095
      %v1098 = vmul.f32 %v985, %v1095
      %v1099 = vmul.f32 %v990, %v1095
      %v1100 = vmul.f32 %v995, %v1095
      %v1101 = vmul.f32 %v1000, %v1095
      %v1102 = vmul.f32 %v1005, %v1095
      %v1103 = vmul.f32 %v1010, %v1095
      %v1104 = vmul.f32 %v1015, %v1095
      %v1105 = vmul.f32 %v1020, %v1095
      %v1106 = vmul.f32 %v1025, %v1095
      %v1107 = vmul.f32 %v1030, %v1095
      %v1108 = vmul.f32 %v1035, %v1095
      %v1109 = vmul.f32 %v1040, %v1095
      %v1110 = vmul.f32 %v1045, %v1095
      %v1111 = vmul.f32 %v1050, %v1095
      %v1112 = vmul.f32 %v1055, %v1095
      %v1113 = vadd.f32 %v945, %v1097
      %v1114 = vadd.f32 %v946, %v1098
      %v1115 = vadd.f32 %v947, %v1099
      %v1116 = vadd.f32 %v948, %v1100
      %v1117 = vadd.f32 %v949, %v1101
      %v1118 = vadd.f32 %v950, %v1102
      %v1119 = vadd.f32 %v951, %v1103
      %v1120 = vadd.f32 %v952, %v1104
      %v1121 = vadd.f32 %v953, %v1105
      %v1122 = vadd.f32 %v954, %v1106
      %v1123 = vadd.f32 %v955, %v1107
      %v1124 = vadd.f32 %v956, %v1108
      %v1125 = vadd.f32 %v957, %v1109
      %v1126 = vadd.f32 %v958, %v1110
      %v1127 = vadd.f32 %v959, %v1111
      %v1128 = vadd.f32 %v960, %v1112
      %v1129 = vld [vmem:[%s826 + $0x10] sm:$0xff]
      %v1130 = vld [vmem:[%s826 + $0x28] sm:$0xff]
      %v1131 = vld [vmem:[%s826 + $0x40] sm:$0xff]
      %v1132 = vld [vmem:[%s826 + $0x58] sm:$0xff]
      %v1133 = vld [vmem:[%s826 + $0x70] sm:$0xff]
      %v1134 = vld [vmem:[%s826 + $0x88] sm:$0xff]
      %v1135 = vld [vmem:[%s826 + $0xa0] sm:$0xff]
      %v1136 = vld [vmem:[%s826 + $0xb8] sm:$0xff]
      %v1137 = vld [vmem:[%s826 + $0xd0] sm:$0xff]
      %v1138 = vld [vmem:[%s826 + $0xe8] sm:$0xff]
      %v1139 = vld [vmem:[%s826 + $0x100] sm:$0xff]
      %v1140 = vld [vmem:[%s826 + $0x118] sm:$0xff]
      %v1141 = vld [vmem:[%s826 + $0x130] sm:$0xff]
      %v1142 = vld [vmem:[%s826 + $0x148] sm:$0xff]
      %v1143 = vld [vmem:[%s826 + $0x160] sm:$0xff]
      %v1144 = vld [vmem:[%s826 + $0x178] sm:$0xff]
      %1146 = vset.pattern.permute.xlu0 0
      %1147 = vperm.xlu0 %1146, %v1129
      %v1148 = vpop.permute.xlu0 %1147
      %1151 = vset.pattern.permute.xlu0 0
      %1152 = vperm.xlu0 %1151, %v1130
      %v1153 = vpop.permute.xlu0 %1152
      %1156 = vset.pattern.permute.xlu0 0
      %1157 = vperm.xlu0 %1156, %v1131
      %v1158 = vpop.permute.xlu0 %1157
      %1161 = vset.pattern.permute.xlu0 0
      %1162 = vperm.xlu0 %1161, %v1132
      %v1163 = vpop.permute.xlu0 %1162
      %1166 = vset.pattern.permute.xlu0 0
      %1167 = vperm.xlu0 %1166, %v1133
      %v1168 = vpop.permute.xlu0 %1167
      %1171 = vset.pattern.permute.xlu0 0
      %1172 = vperm.xlu0 %1171, %v1134
      %v1173 = vpop.permute.xlu0 %1172
      %1176 = vset.pattern.permute.xlu0 0
      %1177 = vperm.xlu0 %1176, %v1135
      %v1178 = vpop.permute.xlu0 %1177
      %1181 = vset.pattern.permute.xlu0 0
      %1182 = vperm.xlu0 %1181, %v1136
      %v1183 = vpop.permute.xlu0 %1182
      %1186 = vset.pattern.permute.xlu0 0
      %1187 = vperm.xlu0 %1186, %v1137
      %v1188 = vpop.permute.xlu0 %1187
      %1191 = vset.pattern.permute.xlu0 0
      %1192 = vperm.xlu0 %1191, %v1138
      %v1193 = vpop.permute.xlu0 %1192
      %1196 = vset.pattern.permute.xlu0 0
      %1197 = vperm.xlu0 %1196, %v1139
      %v1198 = vpop.permute.xlu0 %1197
      %1201 = vset.pattern.permute.xlu0 0
      %1202 = vperm.xlu0 %1201, %v1140
      %v1203 = vpop.permute.xlu0 %1202
      %1206 = vset.pattern.permute.xlu0 0
      %1207 = vperm.xlu0 %1206, %v1141
      %v1208 = vpop.permute.xlu0 %1207
      %1211 = vset.pattern.permute.xlu0 0
      %1212 = vperm.xlu0 %1211, %v1142
      %v1213 = vpop.permute.xlu0 %1212
      %1216 = vset.pattern.permute.xlu0 0
      %1217 = vperm.xlu0 %1216, %v1143
      %v1218 = vpop.permute.xlu0 %1217
      %1221 = vset.pattern.permute.xlu0 0
      %1222 = vperm.xlu0 %1221, %v1144
      %v1223 = vpop.permute.xlu0 %1222
      %v1225 = vmul.f32 %v1148, %v1095
      %v1226 = vmul.f32 %v1153, %v1095
      %v1227 = vmul.f32 %v1158, %v1095
      %v1228 = vmul.f32 %v1163, %v1095
      %v1229 = vmul.f32 %v1168, %v1095
      %v1230 = vmul.f32 %v1173, %v1095
      %v1231 = vmul.f32 %v1178, %v1095
      %v1232 = vmul.f32 %v1183, %v1095
      %v1233 = vmul.f32 %v1188, %v1095
      %v1234 = vmul.f32 %v1193, %v1095
      %v1235 = vmul.f32 %v1198, %v1095
      %v1236 = vmul.f32 %v1203, %v1095
      %v1237 = vmul.f32 %v1208, %v1095
      %v1238 = vmul.f32 %v1213, %v1095
      %v1239 = vmul.f32 %v1218, %v1095
      %v1240 = vmul.f32 %v1223, %v1095
      %v1241 = vadd.f32 %v1073, %v1225
      %v1242 = vadd.f32 %v1074, %v1226
      %v1243 = vadd.f32 %v1075, %v1227
      %v1244 = vadd.f32 %v1076, %v1228
      %v1245 = vadd.f32 %v1077, %v1229
      %v1246 = vadd.f32 %v1078, %v1230
      %v1247 = vadd.f32 %v1079, %v1231
      %v1248 = vadd.f32 %v1080, %v1232
      %v1249 = vadd.f32 %v1081, %v1233
      %v1250 = vadd.f32 %v1082, %v1234
      %v1251 = vadd.f32 %v1083, %v1235
      %v1252 = vadd.f32 %v1084, %v1236
      %v1253 = vadd.f32 %v1085, %v1237
      %v1254 = vadd.f32 %v1086, %v1238
      %v1255 = vadd.f32 %v1087, %v1239
      %v1256 = vadd.f32 %v1088, %v1240
      %s1257 = scalar_lea.vmem %s1, 5
      %v1258 = vld [vmem:[%s1257] sm:$0x1]
      %v1260 = vlaneseq
      %v1261 = vshrl.u32 %v1260, 7
      %v1262 = vsub.s32 0, %v1261
      %v1263 = vrot.slane %v1258, %v1262
      %v1265 = vmul.f32 %v1148, %v1263
      %v1266 = vmul.f32 %v1153, %v1263
      %v1267 = vmul.f32 %v1158, %v1263
      %v1268 = vmul.f32 %v1163, %v1263
      %v1269 = vmul.f32 %v1168, %v1263
      %v1270 = vmul.f32 %v1173, %v1263
      %v1271 = vmul.f32 %v1178, %v1263
      %v1272 = vmul.f32 %v1183, %v1263
      %v1273 = vmul.f32 %v1188, %v1263
      %v1274 = vmul.f32 %v1193, %v1263
      %v1275 = vmul.f32 %v1198, %v1263
      %v1276 = vmul.f32 %v1203, %v1263
      %v1277 = vmul.f32 %v1208, %v1263
      %v1278 = vmul.f32 %v1213, %v1263
      %v1279 = vmul.f32 %v1218, %v1263
      %v1280 = vmul.f32 %v1223, %v1263
      %v1281 = vadd.f32 %v1113, %v1265
      %v1282 = vadd.f32 %v1114, %v1266
      %v1283 = vadd.f32 %v1115, %v1267
      %v1284 = vadd.f32 %v1116, %v1268
      %v1285 = vadd.f32 %v1117, %v1269
      %v1286 = vadd.f32 %v1118, %v1270
      %v1287 = vadd.f32 %v1119, %v1271
      %v1288 = vadd.f32 %v1120, %v1272
      %v1289 = vadd.f32 %v1121, %v1273
      %v1290 = vadd.f32 %v1122, %v1274
      %v1291 = vadd.f32 %v1123, %v1275
      %v1292 = vadd.f32 %v1124, %v1276
      %v1293 = vadd.f32 %v1125, %v1277
      %v1294 = vadd.f32 %v1126, %v1278
      %v1295 = vadd.f32 %v1127, %v1279
      %v1296 = vadd.f32 %v1128, %v1280
      %v1297 = vld [vmem:[%s826 + $0x1] sm:$0xff]
      %v1298 = vld [vmem:[%s826 + $0x19] sm:$0xff]
      %v1299 = vld [vmem:[%s826 + $0x31] sm:$0xff]
      %v1300 = vld [vmem:[%s826 + $0x49] sm:$0xff]
      %v1301 = vld [vmem:[%s826 + $0x61] sm:$0xff]
      %v1302 = vld [vmem:[%s826 + $0x79] sm:$0xff]
      %v1303 = vld [vmem:[%s826 + $0x91] sm:$0xff]
      %v1304 = vld [vmem:[%s826 + $0xa9] sm:$0xff]
      %v1305 = vld [vmem:[%s826 + $0xc1] sm:$0xff]
      %v1306 = vld [vmem:[%s826 + $0xd9] sm:$0xff]
      %v1307 = vld [vmem:[%s826 + $0xf1] sm:$0xff]
      %v1308 = vld [vmem:[%s826 + $0x109] sm:$0xff]
      %v1309 = vld [vmem:[%s826 + $0x121] sm:$0xff]
      %v1310 = vld [vmem:[%s826 + $0x139] sm:$0xff]
      %v1311 = vld [vmem:[%s826 + $0x151] sm:$0xff]
      %v1312 = vld [vmem:[%s826 + $0x169] sm:$0xff]
      %1314 = vset.pattern.permute.xlu0 0
      %1315 = vperm.xlu0 %1314, %v1297
      %v1316 = vpop.permute.xlu0 %1315
      %1319 = vset.pattern.permute.xlu0 0
      %1320 = vperm.xlu0 %1319, %v1298
      %v1321 = vpop.permute.xlu0 %1320
      %1324 = vset.pattern.permute.xlu0 0
      %1325 = vperm.xlu0 %1324, %v1299
      %v1326 = vpop.permute.xlu0 %1325
      %1329 = vset.pattern.permute.xlu0 0
      %1330 = vperm.xlu0 %1329, %v1300
      %v1331 = vpop.permute.xlu0 %1330
      %1334 = vset.pattern.permute.xlu0 0
      %1335 = vperm.xlu0 %1334, %v1301
      %v1336 = vpop.permute.xlu0 %1335
      %1339 = vset.pattern.permute.xlu0 0
      %1340 = vperm.xlu0 %1339, %v1302
      %v1341 = vpop.permute.xlu0 %1340
      %1344 = vset.pattern.permute.xlu0 0
      %1345 = vperm.xlu0 %1344, %v1303
      %v1346 = vpop.permute.xlu0 %1345
      %1349 = vset.pattern.permute.xlu0 0
      %1350 = vperm.xlu0 %1349, %v1304
      %v1351 = vpop.permute.xlu0 %1350
      %1354 = vset.pattern.permute.xlu0 0
      %1355 = vperm.xlu0 %1354, %v1305
      %v1356 = vpop.permute.xlu0 %1355
      %1359 = vset.pattern.permute.xlu0 0
      %1360 = vperm.xlu0 %1359, %v1306
      %v1361 = vpop.permute.xlu0 %1360
      %1364 = vset.pattern.permute.xlu0 0
      %1365 = vperm.xlu0 %1364, %v1307
      %v1366 = vpop.permute.xlu0 %1365
      %1369 = vset.pattern.permute.xlu0 0
      %1370 = vperm.xlu0 %1369, %v1308
      %v1371 = vpop.permute.xlu0 %1370
      %1374 = vset.pattern.permute.xlu0 0
      %1375 = vperm.xlu0 %1374, %v1309
      %v1376 = vpop.permute.xlu0 %1375
      %1379 = vset.pattern.permute.xlu0 0
      %1380 = vperm.xlu0 %1379, %v1310
      %v1381 = vpop.permute.xlu0 %1380
      %1384 = vset.pattern.permute.xlu0 0
      %1385 = vperm.xlu0 %1384, %v1311
      %v1386 = vpop.permute.xlu0 %1385
      %1389 = vset.pattern.permute.xlu0 0
      %1390 = vperm.xlu0 %1389, %v1312
      %v1391 = vpop.permute.xlu0 %1390
      %v1393 = vmul.f32 %v1316, %v1263
      %v1394 = vmul.f32 %v1321, %v1263
      %v1395 = vmul.f32 %v1326, %v1263
      %v1396 = vmul.f32 %v1331, %v1263
      %v1397 = vmul.f32 %v1336, %v1263
      %v1398 = vmul.f32 %v1341, %v1263
      %v1399 = vmul.f32 %v1346, %v1263
      %v1400 = vmul.f32 %v1351, %v1263
      %v1401 = vmul.f32 %v1356, %v1263
      %v1402 = vmul.f32 %v1361, %v1263
      %v1403 = vmul.f32 %v1366, %v1263
      %v1404 = vmul.f32 %v1371, %v1263
      %v1405 = vmul.f32 %v1376, %v1263
      %v1406 = vmul.f32 %v1381, %v1263
      %v1407 = vmul.f32 %v1386, %v1263
      %v1408 = vmul.f32 %v1391, %v1263
      %v1409 = vadd.f32 %v1241, %v1393
      %v1410 = vadd.f32 %v1242, %v1394
      %v1411 = vadd.f32 %v1243, %v1395
      %v1412 = vadd.f32 %v1244, %v1396
      %v1413 = vadd.f32 %v1245, %v1397
      %v1414 = vadd.f32 %v1246, %v1398
      %v1415 = vadd.f32 %v1247, %v1399
      %v1416 = vadd.f32 %v1248, %v1400
      %v1417 = vadd.f32 %v1249, %v1401
      %v1418 = vadd.f32 %v1250, %v1402
      %v1419 = vadd.f32 %v1251, %v1403
      %v1420 = vadd.f32 %v1252, %v1404
      %v1421 = vadd.f32 %v1253, %v1405
      %v1422 = vadd.f32 %v1254, %v1406
      %v1423 = vadd.f32 %v1255, %v1407
      %v1424 = vadd.f32 %v1256, %v1408
      %s1425 = scalar_lea.vmem %s1, 6
      %v1426 = vld [vmem:[%s1425] sm:$0x1]
      %s1427 = scalar_lea.vmem %s219, 48
      %v1428 = vld [vmem:[%s1427 + $0xf] sm:$0xff]
      %v1429 = vld [vmem:[%s1427 + $0x27] sm:$0xff]
      %v1430 = vld [vmem:[%s1427 + $0x3f] sm:$0xff]
      %v1431 = vld [vmem:[%s1427 + $0x57] sm:$0xff]
      %v1432 = vld [vmem:[%s1427 + $0x6f] sm:$0xff]
      %v1433 = vld [vmem:[%s1427 + $0x87] sm:$0xff]
      %v1434 = vld [vmem:[%s1427 + $0x9f] sm:$0xff]
      %v1435 = vld [vmem:[%s1427 + $0xb7] sm:$0xff]
      %v1436 = vld [vmem:[%s1427 + $0xcf] sm:$0xff]
      %v1437 = vld [vmem:[%s1427 + $0xe7] sm:$0xff]
      %v1438 = vld [vmem:[%s1427 + $0xff] sm:$0xff]
      %v1439 = vld [vmem:[%s1427 + $0x117] sm:$0xff]
      %v1440 = vld [vmem:[%s1427 + $0x12f] sm:$0xff]
      %v1441 = vld [vmem:[%s1427 + $0x147] sm:$0xff]
      %v1442 = vld [vmem:[%s1427 + $0x15f] sm:$0xff]
      %v1443 = vld [vmem:[%s1427 + $0x177] sm:$0xff]
      %1445 = vset.pattern.permute.xlu0 0
      %1446 = vperm.xlu0 %1445, %v1428
      %v1447 = vpop.permute.xlu0 %1446
      %1450 = vset.pattern.permute.xlu0 0
      %1451 = vperm.xlu0 %1450, %v1429
      %v1452 = vpop.permute.xlu0 %1451
      %1455 = vset.pattern.permute.xlu0 0
      %1456 = vperm.xlu0 %1455, %v1430
      %v1457 = vpop.permute.xlu0 %1456
      %1460 = vset.pattern.permute.xlu0 0
      %1461 = vperm.xlu0 %1460, %v1431
      %v1462 = vpop.permute.xlu0 %1461
      %1465 = vset.pattern.permute.xlu0 0
      %1466 = vperm.xlu0 %1465, %v1432
      %v1467 = vpop.permute.xlu0 %1466
      %1470 = vset.pattern.permute.xlu0 0
      %1471 = vperm.xlu0 %1470, %v1433
      %v1472 = vpop.permute.xlu0 %1471
      %1475 = vset.pattern.permute.xlu0 0
      %1476 = vperm.xlu0 %1475, %v1434
      %v1477 = vpop.permute.xlu0 %1476
      %1480 = vset.pattern.permute.xlu0 0
      %1481 = vperm.xlu0 %1480, %v1435
      %v1482 = vpop.permute.xlu0 %1481
      %1485 = vset.pattern.permute.xlu0 0
      %1486 = vperm.xlu0 %1485, %v1436
      %v1487 = vpop.permute.xlu0 %1486
      %1490 = vset.pattern.permute.xlu0 0
      %1491 = vperm.xlu0 %1490, %v1437
      %v1492 = vpop.permute.xlu0 %1491
      %1495 = vset.pattern.permute.xlu0 0
      %1496 = vperm.xlu0 %1495, %v1438
      %v1497 = vpop.permute.xlu0 %1496
      %1500 = vset.pattern.permute.xlu0 0
      %1501 = vperm.xlu0 %1500, %v1439
      %v1502 = vpop.permute.xlu0 %1501
      %1505 = vset.pattern.permute.xlu0 0
      %1506 = vperm.xlu0 %1505, %v1440
      %v1507 = vpop.permute.xlu0 %1506
      %1510 = vset.pattern.permute.xlu0 0
      %1511 = vperm.xlu0 %1510, %v1441
      %v1512 = vpop.permute.xlu0 %1511
      %1515 = vset.pattern.permute.xlu0 0
      %1516 = vperm.xlu0 %1515, %v1442
      %v1517 = vpop.permute.xlu0 %1516
      %1520 = vset.pattern.permute.xlu0 0
      %1521 = vperm.xlu0 %1520, %v1443
      %v1522 = vpop.permute.xlu0 %1521
      %v1525 = vlaneseq
      %v1526 = vshrl.u32 %v1525, 7
      %v1527 = vsub.s32 0, %v1526
      %v1528 = vrot.slane %v1426, %v1527
      %v1530 = vmul.f32 %v1447, %v1528
      %v1531 = vmul.f32 %v1452, %v1528
      %v1532 = vmul.f32 %v1457, %v1528
      %v1533 = vmul.f32 %v1462, %v1528
      %v1534 = vmul.f32 %v1467, %v1528
      %v1535 = vmul.f32 %v1472, %v1528
      %v1536 = vmul.f32 %v1477, %v1528
      %v1537 = vmul.f32 %v1482, %v1528
      %v1538 = vmul.f32 %v1487, %v1528
      %v1539 = vmul.f32 %v1492, %v1528
      %v1540 = vmul.f32 %v1497, %v1528
      %v1541 = vmul.f32 %v1502, %v1528
      %v1542 = vmul.f32 %v1507, %v1528
      %v1543 = vmul.f32 %v1512, %v1528
      %v1544 = vmul.f32 %v1517, %v1528
      %v1545 = vmul.f32 %v1522, %v1528
      %v1546 = vadd.f32 %v1281, %v1530
      %v1547 = vadd.f32 %v1282, %v1531
      %v1548 = vadd.f32 %v1283, %v1532
      %v1549 = vadd.f32 %v1284, %v1533
      %v1550 = vadd.f32 %v1285, %v1534
      %v1551 = vadd.f32 %v1286, %v1535
      %v1552 = vadd.f32 %v1287, %v1536
      %v1553 = vadd.f32 %v1288, %v1537
      %v1554 = vadd.f32 %v1289, %v1538
      %v1555 = vadd.f32 %v1290, %v1539
      %v1556 = vadd.f32 %v1291, %v1540
      %v1557 = vadd.f32 %v1292, %v1541
      %v1558 = vadd.f32 %v1293, %v1542
      %v1559 = vadd.f32 %v1294, %v1543
      %v1560 = vadd.f32 %v1295, %v1544
      %v1561 = vadd.f32 %v1296, %v1545
      %v1562 = vld [vmem:[%s1427] sm:$0xff]
      %v1563 = vld [vmem:[%s1427 + $0x18] sm:$0xff]
      %v1564 = vld [vmem:[%s1427 + $0x30] sm:$0xff]
      %v1565 = vld [vmem:[%s1427 + $0x48] sm:$0xff]
      %v1566 = vld [vmem:[%s1427 + $0x60] sm:$0xff]
      %v1567 = vld [vmem:[%s1427 + $0x78] sm:$0xff]
      %v1568 = vld [vmem:[%s1427 + $0x90] sm:$0xff]
      %v1569 = vld [vmem:[%s1427 + $0xa8] sm:$0xff]
      %v1570 = vld [vmem:[%s1427 + $0xc0] sm:$0xff]
      %v1571 = vld [vmem:[%s1427 + $0xd8] sm:$0xff]
      %v1572 = vld [vmem:[%s1427 + $0xf0] sm:$0xff]
      %v1573 = vld [vmem:[%s1427 + $0x108] sm:$0xff]
      %v1574 = vld [vmem:[%s1427 + $0x120] sm:$0xff]
      %v1575 = vld [vmem:[%s1427 + $0x138] sm:$0xff]
      %v1576 = vld [vmem:[%s1427 + $0x150] sm:$0xff]
      %v1577 = vld [vmem:[%s1427 + $0x168] sm:$0xff]
      %1579 = vset.pattern.permute.xlu0 0
      %1580 = vperm.xlu0 %1579, %v1562
      %v1581 = vpop.permute.xlu0 %1580
      %1584 = vset.pattern.permute.xlu0 0
      %1585 = vperm.xlu0 %1584, %v1563
      %v1586 = vpop.permute.xlu0 %1585
      %1589 = vset.pattern.permute.xlu0 0
      %1590 = vperm.xlu0 %1589, %v1564
      %v1591 = vpop.permute.xlu0 %1590
      %1594 = vset.pattern.permute.xlu0 0
      %1595 = vperm.xlu0 %1594, %v1565
      %v1596 = vpop.permute.xlu0 %1595
      %1599 = vset.pattern.permute.xlu0 0
      %1600 = vperm.xlu0 %1599, %v1566
      %v1601 = vpop.permute.xlu0 %1600
      %1604 = vset.pattern.permute.xlu0 0
      %1605 = vperm.xlu0 %1604, %v1567
      %v1606 = vpop.permute.xlu0 %1605
      %1609 = vset.pattern.permute.xlu0 0
      %1610 = vperm.xlu0 %1609, %v1568
      %v1611 = vpop.permute.xlu0 %1610
      %1614 = vset.pattern.permute.xlu0 0
      %1615 = vperm.xlu0 %1614, %v1569
      %v1616 = vpop.permute.xlu0 %1615
      %1619 = vset.pattern.permute.xlu0 0
      %1620 = vperm.xlu0 %1619, %v1570
      %v1621 = vpop.permute.xlu0 %1620
      %1624 = vset.pattern.permute.xlu0 0
      %1625 = vperm.xlu0 %1624, %v1571
      %v1626 = vpop.permute.xlu0 %1625
      %1629 = vset.pattern.permute.xlu0 0
      %1630 = vperm.xlu0 %1629, %v1572
      %v1631 = vpop.permute.xlu0 %1630
      %1634 = vset.pattern.permute.xlu0 0
      %1635 = vperm.xlu0 %1634, %v1573
      %v1636 = vpop.permute.xlu0 %1635
      %1639 = vset.pattern.permute.xlu0 0
      %1640 = vperm.xlu0 %1639, %v1574
      %v1641 = vpop.permute.xlu0 %1640
      %1644 = vset.pattern.permute.xlu0 0
      %1645 = vperm.xlu0 %1644, %v1575
      %v1646 = vpop.permute.xlu0 %1645
      %1649 = vset.pattern.permute.xlu0 0
      %1650 = vperm.xlu0 %1649, %v1576
      %v1651 = vpop.permute.xlu0 %1650
      %1654 = vset.pattern.permute.xlu0 0
      %1655 = vperm.xlu0 %1654, %v1577
      %v1656 = vpop.permute.xlu0 %1655
      %v1658 = vmul.f32 %v1581, %v1528
      %v1659 = vmul.f32 %v1586, %v1528
      %v1660 = vmul.f32 %v1591, %v1528
      %v1661 = vmul.f32 %v1596, %v1528
      %v1662 = vmul.f32 %v1601, %v1528
      %v1663 = vmul.f32 %v1606, %v1528
      %v1664 = vmul.f32 %v1611, %v1528
      %v1665 = vmul.f32 %v1616, %v1528
      %v1666 = vmul.f32 %v1621, %v1528
      %v1667 = vmul.f32 %v1626, %v1528
      %v1668 = vmul.f32 %v1631, %v1528
      %v1669 = vmul.f32 %v1636, %v1528
      %v1670 = vmul.f32 %v1641, %v1528
      %v1671 = vmul.f32 %v1646, %v1528
      %v1672 = vmul.f32 %v1651, %v1528
      %v1673 = vmul.f32 %v1656, %v1528
      %v1674 = vadd.f32 %v1409, %v1658
      %v1675 = vadd.f32 %v1410, %v1659
      %v1676 = vadd.f32 %v1411, %v1660
      %v1677 = vadd.f32 %v1412, %v1661
      %v1678 = vadd.f32 %v1413, %v1662
      %v1679 = vadd.f32 %v1414, %v1663
      %v1680 = vadd.f32 %v1415, %v1664
      %v1681 = vadd.f32 %v1416, %v1665
      %v1682 = vadd.f32 %v1417, %v1666
      %v1683 = vadd.f32 %v1418, %v1667
      %v1684 = vadd.f32 %v1419, %v1668
      %v1685 = vadd.f32 %v1420, %v1669
      %v1686 = vadd.f32 %v1421, %v1670
      %v1687 = vadd.f32 %v1422, %v1671
      %v1688 = vadd.f32 %v1423, %v1672
      %v1689 = vadd.f32 %v1424, %v1673
      %s1690 = scalar_lea.vmem %s1, 7
      %v1691 = vld [vmem:[%s1690] sm:$0x1]
      %v1693 = vlaneseq
      %v1694 = vshrl.u32 %v1693, 7
      %v1695 = vsub.s32 0, %v1694
      %v1696 = vrot.slane %v1691, %v1695
      %v1698 = vmul.f32 %v1581, %v1696
      %v1699 = vmul.f32 %v1586, %v1696
      %v1700 = vmul.f32 %v1591, %v1696
      %v1701 = vmul.f32 %v1596, %v1696
      %v1702 = vmul.f32 %v1601, %v1696
      %v1703 = vmul.f32 %v1606, %v1696
      %v1704 = vmul.f32 %v1611, %v1696
      %v1705 = vmul.f32 %v1616, %v1696
      %v1706 = vmul.f32 %v1621, %v1696
      %v1707 = vmul.f32 %v1626, %v1696
      %v1708 = vmul.f32 %v1631, %v1696
      %v1709 = vmul.f32 %v1636, %v1696
      %v1710 = vmul.f32 %v1641, %v1696
      %v1711 = vmul.f32 %v1646, %v1696
      %v1712 = vmul.f32 %v1651, %v1696
      %v1713 = vmul.f32 %v1656, %v1696
      %v1714 = vadd.f32 %v1546, %v1698
      %v1715 = vadd.f32 %v1547, %v1699
      %v1716 = vadd.f32 %v1548, %v1700
      %v1717 = vadd.f32 %v1549, %v1701
      %v1718 = vadd.f32 %v1550, %v1702
      %v1719 = vadd.f32 %v1551, %v1703
      %v1720 = vadd.f32 %v1552, %v1704
      %v1721 = vadd.f32 %v1553, %v1705
      %v1722 = vadd.f32 %v1554, %v1706
      %v1723 = vadd.f32 %v1555, %v1707
      %v1724 = vadd.f32 %v1556, %v1708
      %v1725 = vadd.f32 %v1557, %v1709
      %v1726 = vadd.f32 %v1558, %v1710
      %v1727 = vadd.f32 %v1559, %v1711
      %v1728 = vadd.f32 %v1560, %v1712
      %v1729 = vadd.f32 %v1561, %v1713
      %v1730 = vld [vmem:[%s1427 + $0x10] sm:$0xff]
      %v1731 = vld [vmem:[%s1427 + $0x28] sm:$0xff]
      %v1732 = vld [vmem:[%s1427 + $0x40] sm:$0xff]
      %v1733 = vld [vmem:[%s1427 + $0x58] sm:$0xff]
      %v1734 = vld [vmem:[%s1427 + $0x70] sm:$0xff]
      %v1735 = vld [vmem:[%s1427 + $0x88] sm:$0xff]
      %v1736 = vld [vmem:[%s1427 + $0xa0] sm:$0xff]
      %v1737 = vld [vmem:[%s1427 + $0xb8] sm:$0xff]
      %v1738 = vld [vmem:[%s1427 + $0xd0] sm:$0xff]
      %v1739 = vld [vmem:[%s1427 + $0xe8] sm:$0xff]
      %v1740 = vld [vmem:[%s1427 + $0x100] sm:$0xff]
      %v1741 = vld [vmem:[%s1427 + $0x118] sm:$0xff]
      %v1742 = vld [vmem:[%s1427 + $0x130] sm:$0xff]
      %v1743 = vld [vmem:[%s1427 + $0x148] sm:$0xff]
      %v1744 = vld [vmem:[%s1427 + $0x160] sm:$0xff]
      %v1745 = vld [vmem:[%s1427 + $0x178] sm:$0xff]
      %1747 = vset.pattern.permute.xlu0 0
      %1748 = vperm.xlu0 %1747, %v1730
      %v1749 = vpop.permute.xlu0 %1748
      %1752 = vset.pattern.permute.xlu0 0
      %1753 = vperm.xlu0 %1752, %v1731
      %v1754 = vpop.permute.xlu0 %1753
      %1757 = vset.pattern.permute.xlu0 0
      %1758 = vperm.xlu0 %1757, %v1732
      %v1759 = vpop.permute.xlu0 %1758
      %1762 = vset.pattern.permute.xlu0 0
      %1763 = vperm.xlu0 %1762, %v1733
      %v1764 = vpop.permute.xlu0 %1763
      %1767 = vset.pattern.permute.xlu0 0
      %1768 = vperm.xlu0 %1767, %v1734
      %v1769 = vpop.permute.xlu0 %1768
      %1772 = vset.pattern.permute.xlu0 0
      %1773 = vperm.xlu0 %1772, %v1735
      %v1774 = vpop.permute.xlu0 %1773
      %1777 = vset.pattern.permute.xlu0 0
      %1778 = vperm.xlu0 %1777, %v1736
      %v1779 = vpop.permute.xlu0 %1778
      %1782 = vset.pattern.permute.xlu0 0
      %1783 = vperm.xlu0 %1782, %v1737
      %v1784 = vpop.permute.xlu0 %1783
      %1787 = vset.pattern.permute.xlu0 0
      %1788 = vperm.xlu0 %1787, %v1738
      %v1789 = vpop.permute.xlu0 %1788
      %1792 = vset.pattern.permute.xlu0 0
      %1793 = vperm.xlu0 %1792, %v1739
      %v1794 = vpop.permute.xlu0 %1793
      %1797 = vset.pattern.permute.xlu0 0
      %1798 = vperm.xlu0 %1797, %v1740
      %v1799 = vpop.permute.xlu0 %1798
      %1802 = vset.pattern.permute.xlu0 0
      %1803 = vperm.xlu0 %1802, %v1741
      %v1804 = vpop.permute.xlu0 %1803
      %1807 = vset.pattern.permute.xlu0 0
      %1808 = vperm.xlu0 %1807, %v1742
      %v1809 = vpop.permute.xlu0 %1808
      %1812 = vset.pattern.permute.xlu0 0
      %1813 = vperm.xlu0 %1812, %v1743
      %v1814 = vpop.permute.xlu0 %1813
      %1817 = vset.pattern.permute.xlu0 0
      %1818 = vperm.xlu0 %1817, %v1744
      %v1819 = vpop.permute.xlu0 %1818
      %1822 = vset.pattern.permute.xlu0 0
      %1823 = vperm.xlu0 %1822, %v1745
      %v1824 = vpop.permute.xlu0 %1823
      %v1826 = vmul.f32 %v1749, %v1696
      %v1827 = vmul.f32 %v1754, %v1696
      %v1828 = vmul.f32 %v1759, %v1696
      %v1829 = vmul.f32 %v1764, %v1696
      %v1830 = vmul.f32 %v1769, %v1696
      %v1831 = vmul.f32 %v1774, %v1696
      %v1832 = vmul.f32 %v1779, %v1696
      %v1833 = vmul.f32 %v1784, %v1696
      %v1834 = vmul.f32 %v1789, %v1696
      %v1835 = vmul.f32 %v1794, %v1696
      %v1836 = vmul.f32 %v1799, %v1696
      %v1837 = vmul.f32 %v1804, %v1696
      %v1838 = vmul.f32 %v1809, %v1696
      %v1839 = vmul.f32 %v1814, %v1696
      %v1840 = vmul.f32 %v1819, %v1696
      %v1841 = vmul.f32 %v1824, %v1696
      %v1842 = vadd.f32 %v1674, %v1826
      %v1843 = vadd.f32 %v1675, %v1827
      %v1844 = vadd.f32 %v1676, %v1828
      %v1845 = vadd.f32 %v1677, %v1829
      %v1846 = vadd.f32 %v1678, %v1830
      %v1847 = vadd.f32 %v1679, %v1831
      %v1848 = vadd.f32 %v1680, %v1832
      %v1849 = vadd.f32 %v1681, %v1833
      %v1850 = vadd.f32 %v1682, %v1834
      %v1851 = vadd.f32 %v1683, %v1835
      %v1852 = vadd.f32 %v1684, %v1836
      %v1853 = vadd.f32 %v1685, %v1837
      %v1854 = vadd.f32 %v1686, %v1838
      %v1855 = vadd.f32 %v1687, %v1839
      %v1856 = vadd.f32 %v1688, %v1840
      %v1857 = vadd.f32 %v1689, %v1841
      %s1858 = scalar_lea.vmem %s1, 8
      %v1859 = vld [vmem:[%s1858] sm:$0x1]
      %v1861 = vlaneseq
      %v1862 = vshrl.u32 %v1861, 7
      %v1863 = vsub.s32 0, %v1862
      %v1864 = vrot.slane %v1859, %v1863
      %v1866 = vmul.f32 %v1749, %v1864
      %v1867 = vmul.f32 %v1754, %v1864
      %v1868 = vmul.f32 %v1759, %v1864
      %v1869 = vmul.f32 %v1764, %v1864
      %v1870 = vmul.f32 %v1769, %v1864
      %v1871 = vmul.f32 %v1774, %v1864
      %v1872 = vmul.f32 %v1779, %v1864
      %v1873 = vmul.f32 %v1784, %v1864
      %v1874 = vmul.f32 %v1789, %v1864
      %v1875 = vmul.f32 %v1794, %v1864
      %v1876 = vmul.f32 %v1799, %v1864
      %v1877 = vmul.f32 %v1804, %v1864
      %v1878 = vmul.f32 %v1809, %v1864
      %v1879 = vmul.f32 %v1814, %v1864
      %v1880 = vmul.f32 %v1819, %v1864
      %v1881 = vmul.f32 %v1824, %v1864
      %v1882 = vadd.f32 %v1714, %v1866
      %v1883 = vadd.f32 %v1715, %v1867
      %v1884 = vadd.f32 %v1716, %v1868
      %v1885 = vadd.f32 %v1717, %v1869
      %v1886 = vadd.f32 %v1718, %v1870
      %v1887 = vadd.f32 %v1719, %v1871
      %v1888 = vadd.f32 %v1720, %v1872
      %v1889 = vadd.f32 %v1721, %v1873
      %v1890 = vadd.f32 %v1722, %v1874
      %v1891 = vadd.f32 %v1723, %v1875
      %v1892 = vadd.f32 %v1724, %v1876
      %v1893 = vadd.f32 %v1725, %v1877
      %v1894 = vadd.f32 %v1726, %v1878
      %v1895 = vadd.f32 %v1727, %v1879
      %v1896 = vadd.f32 %v1728, %v1880
      %v1897 = vadd.f32 %v1729, %v1881
      %v1898 = vld [vmem:[%s1427 + $0x1] sm:$0xff]
      %v1899 = vld [vmem:[%s1427 + $0x19] sm:$0xff]
      %v1900 = vld [vmem:[%s1427 + $0x31] sm:$0xff]
      %v1901 = vld [vmem:[%s1427 + $0x49] sm:$0xff]
      %v1902 = vld [vmem:[%s1427 + $0x61] sm:$0xff]
      %v1903 = vld [vmem:[%s1427 + $0x79] sm:$0xff]
      %v1904 = vld [vmem:[%s1427 + $0x91] sm:$0xff]
      %v1905 = vld [vmem:[%s1427 + $0xa9] sm:$0xff]
      %v1906 = vld [vmem:[%s1427 + $0xc1] sm:$0xff]
      %v1907 = vld [vmem:[%s1427 + $0xd9] sm:$0xff]
      %v1908 = vld [vmem:[%s1427 + $0xf1] sm:$0xff]
      %v1909 = vld [vmem:[%s1427 + $0x109] sm:$0xff]
      %v1910 = vld [vmem:[%s1427 + $0x121] sm:$0xff]
      %v1911 = vld [vmem:[%s1427 + $0x139] sm:$0xff]
      %v1912 = vld [vmem:[%s1427 + $0x151] sm:$0xff]
      %v1913 = vld [vmem:[%s1427 + $0x169] sm:$0xff]
      %1915 = vset.pattern.permute.xlu0 0
      %1916 = vperm.xlu0 %1915, %v1898
      %v1917 = vpop.permute.xlu0 %1916
      %1920 = vset.pattern.permute.xlu0 0
      %1921 = vperm.xlu0 %1920, %v1899
      %v1922 = vpop.permute.xlu0 %1921
      %1925 = vset.pattern.permute.xlu0 0
      %1926 = vperm.xlu0 %1925, %v1900
      %v1927 = vpop.permute.xlu0 %1926
      %1930 = vset.pattern.permute.xlu0 0
      %1931 = vperm.xlu0 %1930, %v1901
      %v1932 = vpop.permute.xlu0 %1931
      %1935 = vset.pattern.permute.xlu0 0
      %1936 = vperm.xlu0 %1935, %v1902
      %v1937 = vpop.permute.xlu0 %1936
      %1940 = vset.pattern.permute.xlu0 0
      %1941 = vperm.xlu0 %1940, %v1903
      %v1942 = vpop.permute.xlu0 %1941
      %1945 = vset.pattern.permute.xlu0 0
      %1946 = vperm.xlu0 %1945, %v1904
      %v1947 = vpop.permute.xlu0 %1946
      %1950 = vset.pattern.permute.xlu0 0
      %1951 = vperm.xlu0 %1950, %v1905
      %v1952 = vpop.permute.xlu0 %1951
      %1955 = vset.pattern.permute.xlu0 0
      %1956 = vperm.xlu0 %1955, %v1906
      %v1957 = vpop.permute.xlu0 %1956
      %1960 = vset.pattern.permute.xlu0 0
      %1961 = vperm.xlu0 %1960, %v1907
      %v1962 = vpop.permute.xlu0 %1961
      %1965 = vset.pattern.permute.xlu0 0
      %1966 = vperm.xlu0 %1965, %v1908
      %v1967 = vpop.permute.xlu0 %1966
      %1970 = vset.pattern.permute.xlu0 0
      %1971 = vperm.xlu0 %1970, %v1909
      %v1972 = vpop.permute.xlu0 %1971
      %1975 = vset.pattern.permute.xlu0 0
      %1976 = vperm.xlu0 %1975, %v1910
      %v1977 = vpop.permute.xlu0 %1976
      %1980 = vset.pattern.permute.xlu0 0
      %1981 = vperm.xlu0 %1980, %v1911
      %v1982 = vpop.permute.xlu0 %1981
      %1985 = vset.pattern.permute.xlu0 0
      %1986 = vperm.xlu0 %1985, %v1912
      %v1987 = vpop.permute.xlu0 %1986
      %1990 = vset.pattern.permute.xlu0 0
      %1991 = vperm.xlu0 %1990, %v1913
      %v1992 = vpop.permute.xlu0 %1991
      %v1994 = vmul.f32 %v1917, %v1864
      %v1995 = vmul.f32 %v1922, %v1864
      %v1996 = vmul.f32 %v1927, %v1864
      %v1997 = vmul.f32 %v1932, %v1864
      %v1998 = vmul.f32 %v1937, %v1864
      %v1999 = vmul.f32 %v1942, %v1864
      %v2000 = vmul.f32 %v1947, %v1864
      %v2001 = vmul.f32 %v1952, %v1864
      %v2002 = vmul.f32 %v1957, %v1864
      %v2003 = vmul.f32 %v1962, %v1864
      %v2004 = vmul.f32 %v1967, %v1864
      %v2005 = vmul.f32 %v1972, %v1864
      %v2006 = vmul.f32 %v1977, %v1864
      %v2007 = vmul.f32 %v1982, %v1864
      %v2008 = vmul.f32 %v1987, %v1864
      %v2009 = vmul.f32 %v1992, %v1864
      %v2010 = vadd.f32 %v1842, %v1994
      %v2011 = vadd.f32 %v1843, %v1995
      %v2012 = vadd.f32 %v1844, %v1996
      %v2013 = vadd.f32 %v1845, %v1997
      %v2014 = vadd.f32 %v1846, %v1998
      %v2015 = vadd.f32 %v1847, %v1999
      %v2016 = vadd.f32 %v1848, %v2000
      %v2017 = vadd.f32 %v1849, %v2001
      %v2018 = vadd.f32 %v1850, %v2002
      %v2019 = vadd.f32 %v1851, %v2003
      %v2020 = vadd.f32 %v1852, %v2004
      %v2021 = vadd.f32 %v1853, %v2005
      %v2022 = vadd.f32 %v1854, %v2006
      %v2023 = vadd.f32 %v1855, %v2007
      %v2024 = vadd.f32 %v1856, %v2008
      %v2025 = vadd.f32 %v1857, %v2009
      %v2026 = vld [vmem:[%s2] sm:$0x1]
      %v2028 = vlaneseq
      %v2029 = vshrl.u32 %v2028, 7
      %v2030 = vsub.s32 0, %v2029
      %v2031 = vrot.slane %v2026, %v2030
      %v2033 = vadd.f32 %v1882, %v2031
      %v2034 = vadd.f32 %v1883, %v2031
      %v2035 = vadd.f32 %v1884, %v2031
      %v2036 = vadd.f32 %v1885, %v2031
      %v2037 = vadd.f32 %v1886, %v2031
      %v2038 = vadd.f32 %v1887, %v2031
      %v2039 = vadd.f32 %v1888, %v2031
      %v2040 = vadd.f32 %v1889, %v2031
      %v2041 = vadd.f32 %v1890, %v2031
      %v2042 = vadd.f32 %v1891, %v2031
      %v2043 = vadd.f32 %v1892, %v2031
      %v2044 = vadd.f32 %v1893, %v2031
      %v2045 = vadd.f32 %v1894, %v2031
      %v2046 = vadd.f32 %v1895, %v2031
      %v2047 = vadd.f32 %v1896, %v2031
      %v2048 = vadd.f32 %v1897, %v2031
      %v2049 = vmax.f32 %v2033, 0.0
      %v2050 = vmax.f32 %v2034, 0.0
      %v2051 = vmax.f32 %v2035, 0.0
      %v2052 = vmax.f32 %v2036, 0.0
      %v2053 = vmax.f32 %v2037, 0.0
      %v2054 = vmax.f32 %v2038, 0.0
      %v2055 = vmax.f32 %v2039, 0.0
      %v2056 = vmax.f32 %v2040, 0.0
      %v2057 = vmax.f32 %v2041, 0.0
      %v2058 = vmax.f32 %v2042, 0.0
      %v2059 = vmax.f32 %v2043, 0.0
      %v2060 = vmax.f32 %v2044, 0.0
      %v2061 = vmax.f32 %v2045, 0.0
      %v2062 = vmax.f32 %v2046, 0.0
      %v2063 = vmax.f32 %v2047, 0.0
      %v2064 = vmax.f32 %v2048, 0.0
      %v2065 = vadd.f32 %v2010, %v2031
      %v2066 = vadd.f32 %v2011, %v2031
      %v2067 = vadd.f32 %v2012, %v2031
      %v2068 = vadd.f32 %v2013, %v2031
      %v2069 = vadd.f32 %v2014, %v2031
      %v2070 = vadd.f32 %v2015, %v2031
      %v2071 = vadd.f32 %v2016, %v2031
      %v2072 = vadd.f32 %v2017, %v2031
      %v2073 = vadd.f32 %v2018, %v2031
      %v2074 = vadd.f32 %v2019, %v2031
      %v2075 = vadd.f32 %v2020, %v2031
      %v2076 = vadd.f32 %v2021, %v2031
      %v2077 = vadd.f32 %v2022, %v2031
      %v2078 = vadd.f32 %v2023, %v2031
      %v2079 = vadd.f32 %v2024, %v2031
      %v2080 = vadd.f32 %v2025, %v2031
      %v2081 = vmax.f32 %v2065, 0.0
      %v2082 = vmax.f32 %v2066, 0.0
      %v2083 = vmax.f32 %v2067, 0.0
      %v2084 = vmax.f32 %v2068, 0.0
      %v2085 = vmax.f32 %v2069, 0.0
      %v2086 = vmax.f32 %v2070, 0.0
      %v2087 = vmax.f32 %v2071, 0.0
      %v2088 = vmax.f32 %v2072, 0.0
      %v2089 = vmax.f32 %v2073, 0.0
      %v2090 = vmax.f32 %v2074, 0.0
      %v2091 = vmax.f32 %v2075, 0.0
      %v2092 = vmax.f32 %v2076, 0.0
      %v2093 = vmax.f32 %v2077, 0.0
      %v2094 = vmax.f32 %v2078, 0.0
      %v2095 = vmax.f32 %v2079, 0.0
      %v2096 = vmax.f32 %v2080, 0.0
      %vm2097 = vcmask 31744
      %2098 = vst.msk [vmem:[#allocation2] sm:$0xff] %vm2097, 0.0
      %2099 = vst.msk [vmem:[#allocation2 + $0x8] sm:$0xff] %vm2097, 0.0
      %2100 = vst.msk [vmem:[#allocation2 + $0x10] sm:$0xff] %vm2097, 0.0
      %2101 = vst.msk [vmem:[#allocation2 + $0x18] sm:$0xff] %vm2097, 0.0
      %2102 = vst.msk [vmem:[#allocation2 + $0x20] sm:$0xff] %vm2097, 0.0
      %2103 = vst.msk [vmem:[#allocation2 + $0x28] sm:$0xff] %vm2097, 0.0
      %2104 = vst.msk [vmem:[#allocation2 + $0x30] sm:$0xff] %vm2097, 0.0
      %2105 = vst.msk [vmem:[#allocation2 + $0x38] sm:$0xff] %vm2097, 0.0
      %2106 = vst.msk [vmem:[#allocation2 + $0x40] sm:$0xff] %vm2097, 0.0
      %2107 = vst.msk [vmem:[#allocation2 + $0x48] sm:$0xff] %vm2097, 0.0
      %2108 = vst.msk [vmem:[#allocation2 + $0x50] sm:$0xff] %vm2097, 0.0
      %2109 = vst.msk [vmem:[#allocation2 + $0x58] sm:$0xff] %vm2097, 0.0
      %2110 = vst.msk [vmem:[#allocation2 + $0x60] sm:$0xff] %vm2097, 0.0
      %2111 = vst.msk [vmem:[#allocation2 + $0x68] sm:$0xff] %vm2097, 0.0
      %2112 = vst.msk [vmem:[#allocation2 + $0x70] sm:$0xff] %vm2097, 0.0
      %2113 = vst.msk [vmem:[#allocation2 + $0x78] sm:$0xff] %vm2097, 0.0
      %2114 = vst.msk [vmem:[#allocation2 + $0x80] sm:$0xff] %vm2097, 0.0
      %2115 = vst.msk [vmem:[#allocation2 + $0x88] sm:$0xff] %vm2097, 0.0
      %2116 = vst.msk [vmem:[#allocation2 + $0x90] sm:$0xff] %vm2097, 0.0
      %2117 = vst.msk [vmem:[#allocation2 + $0x98] sm:$0xff] %vm2097, 0.0
      %2118 = vst.msk [vmem:[#allocation2 + $0xa0] sm:$0xff] %vm2097, 0.0
      %2119 = vst.msk [vmem:[#allocation2 + $0xa8] sm:$0xff] %vm2097, 0.0
      %2120 = vst.msk [vmem:[#allocation2 + $0xb0] sm:$0xff] %vm2097, 0.0
      %2121 = vst.msk [vmem:[#allocation2 + $0xb8] sm:$0xff] %vm2097, 0.0
      %2122 = vst.msk [vmem:[#allocation2 + $0xc0] sm:$0xff] %vm2097, 0.0
      %2123 = vst.msk [vmem:[#allocation2 + $0xc8] sm:$0xff] %vm2097, 0.0
      %2124 = vst.msk [vmem:[#allocation2 + $0xd0] sm:$0xff] %vm2097, 0.0
      %2125 = vst.msk [vmem:[#allocation2 + $0xd8] sm:$0xff] %vm2097, 0.0
      %2126 = vst.msk [vmem:[#allocation2 + $0xe0] sm:$0xff] %vm2097, 0.0
      %2127 = vst.msk [vmem:[#allocation2 + $0xe8] sm:$0xff] %vm2097, 0.0
      %2128 = vst.msk [vmem:[#allocation2 + $0xf0] sm:$0xff] %vm2097, 0.0
      %2129 = vst.msk [vmem:[#allocation2 + $0xf8] sm:$0xff] %vm2097, 0.0
      %2130 = vst.msk [vmem:[#allocation2 + $0x100] sm:$0xff] %vm2097, 0.0
      %2131 = vst.msk [vmem:[#allocation2 + $0x108] sm:$0xff] %vm2097, 0.0
      %2132 = vst.msk [vmem:[#allocation2 + $0x110] sm:$0xff] %vm2097, 0.0
      %2133 = vst.msk [vmem:[#allocation2 + $0x118] sm:$0xff] %vm2097, 0.0
      %2134 = vst.msk [vmem:[#allocation2 + $0x120] sm:$0xff] %vm2097, 0.0
      %2135 = vst.msk [vmem:[#allocation2 + $0x128] sm:$0xff] %vm2097, 0.0
      %2136 = vst.msk [vmem:[#allocation2 + $0x130] sm:$0xff] %vm2097, 0.0
      %2137 = vst.msk [vmem:[#allocation2 + $0x138] sm:$0xff] %vm2097, 0.0
      %2138 = vst.msk [vmem:[#allocation2 + $0x140] sm:$0xff] %vm2097, 0.0
      %2139 = vst.msk [vmem:[#allocation2 + $0x148] sm:$0xff] %vm2097, 0.0
      %2140 = vst.msk [vmem:[#allocation2 + $0x150] sm:$0xff] %vm2097, 0.0
      %2141 = vst.msk [vmem:[#allocation2 + $0x158] sm:$0xff] %vm2097, 0.0
      %2142 = vst.msk [vmem:[#allocation2 + $0x160] sm:$0xff] %vm2097, 0.0
      %2143 = vst.msk [vmem:[#allocation2 + $0x168] sm:$0xff] %vm2097, 0.0
      %2144 = vst.msk [vmem:[#allocation2 + $0x170] sm:$0xff] %vm2097, 0.0
      %2145 = vst.msk [vmem:[#allocation2 + $0x178] sm:$0xff] %vm2097, 0.0
      %2146 = vst.msk [vmem:[#allocation2 + $0x180] sm:$0xff] %vm2097, 0.0
      %2147 = vst.msk [vmem:[#allocation2 + $0x188] sm:$0xff] %vm2097, 0.0
      %2148 = vst.msk [vmem:[#allocation2 + $0x190] sm:$0xff] %vm2097, 0.0
      %2149 = vst.msk [vmem:[#allocation2 + $0x198] sm:$0xff] %vm2097, 0.0
      %2150 = vst.msk [vmem:[#allocation2 + $0x1a0] sm:$0xff] %vm2097, 0.0
      %2151 = vst.msk [vmem:[#allocation2 + $0x1a8] sm:$0xff] %vm2097, 0.0
      %s2152 = scalar_lea.vmem [#allocation2], 24
      %2153 = vst.msk [vmem:[%s2152] sm:$0xff] %vm2097, %v2049
      %2154 = vst.msk [vmem:[%s2152 + $0x18] sm:$0xff] %vm2097, %v2050
      %2155 = vst.msk [vmem:[%s2152 + $0x30] sm:$0xff] %vm2097, %v2051
      %2156 = vst.msk [vmem:[%s2152 + $0x48] sm:$0xff] %vm2097, %v2052
      %2157 = vst.msk [vmem:[%s2152 + $0x60] sm:$0xff] %vm2097, %v2053
      %2158 = vst.msk [vmem:[%s2152 + $0x78] sm:$0xff] %vm2097, %v2054
      %2159 = vst.msk [vmem:[%s2152 + $0x90] sm:$0xff] %vm2097, %v2055
      %2160 = vst.msk [vmem:[%s2152 + $0xa8] sm:$0xff] %vm2097, %v2056
      %2161 = vst.msk [vmem:[%s2152 + $0xc0] sm:$0xff] %vm2097, %v2057
      %2162 = vst.msk [vmem:[%s2152 + $0xd8] sm:$0xff] %vm2097, %v2058
      %2163 = vst.msk [vmem:[%s2152 + $0xf0] sm:$0xff] %vm2097, %v2059
      %2164 = vst.msk [vmem:[%s2152 + $0x108] sm:$0xff] %vm2097, %v2060
      %2165 = vst.msk [vmem:[%s2152 + $0x120] sm:$0xff] %vm2097, %v2061
      %2166 = vst.msk [vmem:[%s2152 + $0x138] sm:$0xff] %vm2097, %v2062
      %2167 = vst.msk [vmem:[%s2152 + $0x150] sm:$0xff] %vm2097, %v2063
      %2168 = vst.msk [vmem:[%s2152 + $0x168] sm:$0xff] %vm2097, %v2064
      %2169 = vst.msk [vmem:[%s2152 + $0x10] sm:$0xff] %vm2097, %v2081
      %2170 = vst.msk [vmem:[%s2152 + $0x28] sm:$0xff] %vm2097, %v2082
      %2171 = vst.msk [vmem:[%s2152 + $0x40] sm:$0xff] %vm2097, %v2083
      %2172 = vst.msk [vmem:[%s2152 + $0x58] sm:$0xff] %vm2097, %v2084
      %2173 = vst.msk [vmem:[%s2152 + $0x70] sm:$0xff] %vm2097, %v2085
      %2174 = vst.msk [vmem:[%s2152 + $0x88] sm:$0xff] %vm2097, %v2086
      %2175 = vst.msk [vmem:[%s2152 + $0xa0] sm:$0xff] %vm2097, %v2087
      %2176 = vst.msk [vmem:[%s2152 + $0xb8] sm:$0xff] %vm2097, %v2088
      %2177 = vst.msk [vmem:[%s2152 + $0xd0] sm:$0xff] %vm2097, %v2089
      %2178 = vst.msk [vmem:[%s2152 + $0xe8] sm:$0xff] %vm2097, %v2090
      %2179 = vst.msk [vmem:[%s2152 + $0x100] sm:$0xff] %vm2097, %v2091
      %2180 = vst.msk [vmem:[%s2152 + $0x118] sm:$0xff] %vm2097, %v2092
      %2181 = vst.msk [vmem:[%s2152 + $0x130] sm:$0xff] %vm2097, %v2093
      %2182 = vst.msk [vmem:[%s2152 + $0x148] sm:$0xff] %vm2097, %v2094
      %2183 = vst.msk [vmem:[%s2152 + $0x160] sm:$0xff] %vm2097, %v2095
      %2184 = vst.msk [vmem:[%s2152 + $0x178] sm:$0xff] %vm2097, %v2096
      %v2185 = vld [vmem:[%s3] sm:$0xf]
      %v2186 = vld [vmem:[#allocation2 + $0xf] sm:$0xff]
      %v2187 = vld [vmem:[#allocation2 + $0x27] sm:$0xff]
      %v2188 = vld [vmem:[#allocation2 + $0x3f] sm:$0xff]
      %v2189 = vld [vmem:[#allocation2 + $0x57] sm:$0xff]
      %v2190 = vld [vmem:[#allocation2 + $0x6f] sm:$0xff]
      %v2191 = vld [vmem:[#allocation2 + $0x87] sm:$0xff]
      %v2192 = vld [vmem:[#allocation2 + $0x9f] sm:$0xff]
      %v2193 = vld [vmem:[#allocation2 + $0xb7] sm:$0xff]
      %v2194 = vld [vmem:[#allocation2 + $0xcf] sm:$0xff]
      %v2195 = vld [vmem:[#allocation2 + $0xe7] sm:$0xff]
      %v2196 = vld [vmem:[#allocation2 + $0xff] sm:$0xff]
      %v2197 = vld [vmem:[#allocation2 + $0x117] sm:$0xff]
      %v2198 = vld [vmem:[#allocation2 + $0x12f] sm:$0xff]
      %v2199 = vld [vmem:[#allocation2 + $0x147] sm:$0xff]
      %v2200 = vld [vmem:[#allocation2 + $0x15f] sm:$0xff]
      %v2201 = vld [vmem:[#allocation2 + $0x177] sm:$0xff]
      %v2202 = vld [vmem:[#allocation2] sm:$0xff]
      %v2203 = vld [vmem:[#allocation2 + $0x18] sm:$0xff]
      %v2204 = vld [vmem:[#allocation2 + $0x30] sm:$0xff]
      %v2205 = vld [vmem:[#allocation2 + $0x48] sm:$0xff]
      %v2206 = vld [vmem:[#allocation2 + $0x60] sm:$0xff]
      %v2207 = vld [vmem:[#allocation2 + $0x78] sm:$0xff]
      %v2208 = vld [vmem:[#allocation2 + $0x90] sm:$0xff]
      %v2209 = vld [vmem:[#allocation2 + $0xa8] sm:$0xff]
      %v2210 = vld [vmem:[#allocation2 + $0xc0] sm:$0xff]
      %v2211 = vld [vmem:[#allocation2 + $0xd8] sm:$0xff]
      %v2212 = vld [vmem:[#allocation2 + $0xf0] sm:$0xff]
      %v2213 = vld [vmem:[#allocation2 + $0x108] sm:$0xff]
      %v2214 = vld [vmem:[#allocation2 + $0x120] sm:$0xff]
      %v2215 = vld [vmem:[#allocation2 + $0x138] sm:$0xff]
      %v2216 = vld [vmem:[#allocation2 + $0x150] sm:$0xff]
      %v2217 = vld [vmem:[#allocation2 + $0x168] sm:$0xff]
      %s2218 = scalar_lea.vmem %s3, 4
      %v2219 = vld [vmem:[%s2218] sm:$0xf]
      %v2220 = vld [vmem:[#allocation2 + $0x10] sm:$0xff]
      %v2221 = vld [vmem:[#allocation2 + $0x28] sm:$0xff]
      %v2222 = vld [vmem:[#allocation2 + $0x40] sm:$0xff]
      %v2223 = vld [vmem:[#allocation2 + $0x58] sm:$0xff]
      %v2224 = vld [vmem:[#allocation2 + $0x70] sm:$0xff]
      %v2225 = vld [vmem:[#allocation2 + $0x88] sm:$0xff]
      %v2226 = vld [vmem:[#allocation2 + $0xa0] sm:$0xff]
      %v2227 = vld [vmem:[#allocation2 + $0xb8] sm:$0xff]
      %v2228 = vld [vmem:[#allocation2 + $0xd0] sm:$0xff]
      %v2229 = vld [vmem:[#allocation2 + $0xe8] sm:$0xff]
      %v2230 = vld [vmem:[#allocation2 + $0x100] sm:$0xff]
      %v2231 = vld [vmem:[#allocation2 + $0x118] sm:$0xff]
      %v2232 = vld [vmem:[#allocation2 + $0x130] sm:$0xff]
      %v2233 = vld [vmem:[#allocation2 + $0x148] sm:$0xff]
      %v2234 = vld [vmem:[#allocation2 + $0x160] sm:$0xff]
      %v2235 = vld [vmem:[#allocation2 + $0x178] sm:$0xff]
      %v2237 = vsel %vm2097, %v2202, 0
      %v2240 = vsel %vm2097, %v2203, 0
      %v2243 = vsel %vm2097, %v2204, 0
      %v2246 = vsel %vm2097, %v2205, 0
      %v2249 = vsel %vm2097, %v2206, 0
      %v2252 = vsel %vm2097, %v2207, 0
      %v2255 = vsel %vm2097, %v2208, 0
      %v2258 = vsel %vm2097, %v2209, 0
      %v2261 = vsel %vm2097, %v2210, 0
      %v2264 = vsel %vm2097, %v2211, 0
      %v2267 = vsel %vm2097, %v2212, 0
      %v2270 = vsel %vm2097, %v2213, 0
      %v2273 = vsel %vm2097, %v2214, 0
      %v2276 = vsel %vm2097, %v2215, 0
      %v2279 = vsel %vm2097, %v2216, 0
      %v2282 = vsel %vm2097, %v2217, 0
      %vm2284 = vcmask 1043456
      %v2286 = vsel %vm2284, %v2219, 0
      %2288 = vmatprep.subr.mxu0 0.0
      %2289 = vmatpush1.msra.mxu0 %v2286
      %2290 = vmatprep.subr.mxu0 0.0
      %2291 = vmatpush1.msra.mxu0 0.0
      %2292 = vmatprep.subr.mxu0 0.0
      %2293 = vmatpush1.msra.mxu0 0.0
      %2294 = vmatprep.subr.mxu0 0.0
      %2295 = vmatpush1.msra.mxu0 0.0
      %2296 = vmatprep.subr.mxu0 0.0
      %2297 = vmatpush1.msra.mxu0 0.0
      %2298 = vmatprep.subr.mxu0 0.0
      %2299 = vmatpush1.msra.mxu0 0.0
      %2300 = vmatprep.subr.mxu0 0.0
      %2301 = vmatpush1.msra.mxu0 0.0
      %2302 = vmatprep.subr.mxu0 0.0
      %2303 = vmatpush1.msra.mxu0 0.0
      %2304 = vmatprep.subr.mxu0 0.0
      %2305 = vmatpush1.msra.mxu0 0.0
      %2306 = vmatprep.subr.mxu0 0.0
      %2307 = vmatpush1.msra.mxu0 0.0
      %2308 = vmatprep.subr.mxu0 0.0
      %2309 = vmatpush1.msra.mxu0 0.0
      %2310 = vmatprep.subr.mxu0 0.0
      %2311 = vmatpush1.msra.mxu0 0.0
      %2312 = vmatprep.subr.mxu0 0.0
      %2313 = vmatpush1.msra.mxu0 0.0
      %2314 = vmatprep.subr.mxu0 0.0
      %2315 = vmatpush1.msra.mxu0 0.0
      %2316 = vmatprep.subr.mxu0 0.0
      %2317 = vmatpush1.msra.mxu0 0.0
      %2318 = vmatprep.subr.mxu0 0.0
      %2319 = vmatpush1.msra.mxu0 0.0
      %2320 = vmatprep.subr.mxu0 0.0
      %2321 = vmatpush1.msra.mxu0 0.0
      %2322 = vmatprep.subr.mxu0 0.0
      %2323 = vmatpush1.msra.mxu0 0.0
      %2324 = vmatprep.subr.mxu0 0.0
      %2325 = vmatpush1.msra.mxu0 0.0
      %2326 = vmatprep.subr.mxu0 0.0
      %2327 = vmatpush1.msra.mxu0 0.0
      %2328 = vmatprep.subr.mxu0 0.0
      %2329 = vmatpush1.msra.mxu0 0.0
      %2330 = vmatprep.subr.mxu0 0.0
      %2331 = vmatpush1.msra.mxu0 0.0
      %2332 = vmatprep.subr.mxu0 0.0
      %2333 = vmatpush1.msra.mxu0 0.0
      %2334 = vmatprep.subr.mxu0 0.0
      %2335 = vmatpush1.msra.mxu0 0.0
      %2336 = vmatprep.subr.mxu0 0.0
      %2337 = vmatpush1.msra.mxu0 0.0
      %2338 = vmatprep.subr.mxu0 0.0
      %2339 = vmatpush1.msra.mxu0 0.0
      %2340 = vmatprep.subr.mxu0 0.0
      %2341 = vmatpush1.msra.mxu0 0.0
      %2342 = vmatprep.subr.mxu0 0.0
      %2343 = vmatpush1.msra.mxu0 0.0
      %2344 = vmatprep.subr.mxu0 0.0
      %2345 = vmatpush1.msra.mxu0 0.0
      %2346 = vmatprep.subr.mxu0 0.0
      %2347 = vmatpush1.msra.mxu0 0.0
      %2348 = vmatprep.subr.mxu0 0.0
      %2349 = vmatpush1.msra.mxu0 0.0
      %2350 = vmatprep.subr.mxu0 0.0
      %2351 = vmatpush1.msra.mxu0 0.0
      %2352 = vmatprep.mubr.f32.mxu0 0.0
      %2353 = vmatmul.mubr.f32.gmra.mrb[0].mxu0 %v2237
      %v2354 = vpop.f32.mrb[0].mxu0
      %v2355 = vadd.f32 0.0, %v2354
      %v2356 = vpop.f32.mrb[0].mxu0
      %2357 = vmatprep.mubr.f32.mxu0 0.0
      %2358 = vmatmul.mubr.f32.gmra.mrb[0].mxu0 %v2240
      %v2359 = vpop.f32.mrb[0].mxu0
      %v2360 = vadd.f32 0.0, %v2359
      %v2361 = vpop.f32.mrb[0].mxu0
      %2362 = vmatprep.mubr.f32.mxu0 0.0
      %2363 = vmatmul.mubr.f32.gmra.mrb[0].mxu0 %v2243
      %v2364 = vpop.f32.mrb[0].mxu0
      %v2365 = vadd.f32 0.0, %v2364
      %v2366 = vpop.f32.mrb[0].mxu0
      %2367 = vmatprep.mubr.f32.mxu0 0.0
      %2368 = vmatmul.mubr.f32.gmra.mrb[0].mxu0 %v2246
      %v2369 = vpop.f32.mrb[0].mxu0
      %v2370 = vadd.f32 0.0, %v2369
      %v2371 = vpop.f32.mrb[0].mxu0
      %2372 = vmatprep.mubr.f32.mxu0 0.0
      %2373 = vmatmul.mubr.f32.gmra.mrb[0].mxu0 %v2249
      %v2374 = vpop.f32.mrb[0].mxu0
      %v2375 = vadd.f32 0.0, %v2374
      %v2376 = vpop.f32.mrb[0].mxu0
      %2377 = vmatprep.mubr.f32.mxu0 0.0
      %2378 = vmatmul.mubr.f32.gmra.mrb[0].mxu0 %v2252
      %v2379 = vpop.f32.mrb[0].mxu0
      %v2380 = vadd.f32 0.0, %v2379
      %v2381 = vpop.f32.mrb[0].mxu0
      %2382 = vmatprep.mubr.f32.mxu0 0.0
      %2383 = vmatmul.mubr.f32.gmra.mrb[0].mxu0 %v2255
      %v2384 = vpop.f32.mrb[0].mxu0
      %v2385 = vadd.f32 0.0, %v2384
      %v2386 = vpop.f32.mrb[0].mxu0
      %2387 = vmatprep.mubr.f32.mxu0 0.0
      %2388 = vmatmul.mubr.f32.gmra.mrb[0].mxu0 %v2258
      %v2389 = vpop.f32.mrb[0].mxu0
      %v2390 = vadd.f32 0.0, %v2389
      %v2391 = vpop.f32.mrb[0].mxu0
      %2392 = vmatprep.mubr.f32.mxu0 0.0
      %2393 = vmatmul.mubr.f32.gmra.mrb[0].mxu0 %v2261
      %v2394 = vpop.f32.mrb[0].mxu0
      %v2395 = vadd.f32 0.0, %v2394
      %v2396 = vpop.f32.mrb[0].mxu0
      %2397 = vmatprep.mubr.f32.mxu0 0.0
      %2398 = vmatmul.mubr.f32.gmra.mrb[0].mxu0 %v2264
      %v2399 = vpop.f32.mrb[0].mxu0
      %v2400 = vadd.f32 0.0, %v2399
      %v2401 = vpop.f32.mrb[0].mxu0
      %2402 = vmatprep.mubr.f32.mxu0 0.0
      %2403 = vmatmul.mubr.f32.gmra.mrb[0].mxu0 %v2267
      %v2404 = vpop.f32.mrb[0].mxu0
      %v2405 = vadd.f32 0.0, %v2404
      %v2406 = vpop.f32.mrb[0].mxu0
      %2407 = vmatprep.mubr.f32.mxu0 0.0
      %2408 = vmatmul.mubr.f32.gmra.mrb[0].mxu0 %v2270
      %v2409 = vpop.f32.mrb[0].mxu0
      %v2410 = vadd.f32 0.0, %v2409
      %v2411 = vpop.f32.mrb[0].mxu0
      %2412 = vmatprep.mubr.f32.mxu0 0.0
      %2413 = vmatmul.mubr.f32.gmra.mrb[0].mxu0 %v2273
      %v2414 = vpop.f32.mrb[0].mxu0
      %v2415 = vadd.f32 0.0, %v2414
      %v2416 = vpop.f32.mrb[0].mxu0
      %2417 = vmatprep.mubr.f32.mxu0 0.0
      %2418 = vmatmul.mubr.f32.gmra.mrb[0].mxu0 %v2276
      %v2419 = vpop.f32.mrb[0].mxu0
      %v2420 = vadd.f32 0.0, %v2419
      %v2421 = vpop.f32.mrb[0].mxu0
      %2422 = vmatprep.mubr.f32.mxu0 0.0
      %2423 = vmatmul.mubr.f32.gmra.mrb[0].mxu0 %v2279
      %v2424 = vpop.f32.mrb[0].mxu0
      %v2425 = vadd.f32 0.0, %v2424
      %v2426 = vpop.f32.mrb[0].mxu0
      %2427 = vmatprep.mubr.f32.mxu0 0.0
      %2428 = vmatmul.mubr.f32.gmra.mrb[0].mxu0 %v2282
      %v2429 = vpop.f32.mrb[0].mxu0
      %v2430 = vadd.f32 0.0, %v2429
      %v2431 = vpop.f32.mrb[0].mxu0
      %2432 = vdwg.mxu0
      %v2434 = vsel %vm2097, %v2186, 0
      %v2437 = vsel %vm2097, %v2187, 0
      %v2440 = vsel %vm2097, %v2188, 0
      %v2443 = vsel %vm2097, %v2189, 0
      %v2446 = vsel %vm2097, %v2190, 0
      %v2449 = vsel %vm2097, %v2191, 0
      %v2452 = vsel %vm2097, %v2192, 0
      %v2455 = vsel %vm2097, %v2193, 0
      %v2458 = vsel %vm2097, %v2194, 0
      %v2461 = vsel %vm2097, %v2195, 0
      %v2464 = vsel %vm2097, %v2196, 0
      %v2467 = vsel %vm2097, %v2197, 0
      %v2470 = vsel %vm2097, %v2198, 0
      %v2473 = vsel %vm2097, %v2199, 0
      %v2476 = vsel %vm2097, %v2200, 0
      %v2479 = vsel %vm2097, %v2201, 0
      %v2482 = vsel %vm2284, %v2185, 0
      %2484 = vmatprep.subr.mxu0 0.0
      %2485 = vmatpush1.msra.mxu0 %v2482
      %2486 = vmatprep.subr.mxu0 0.0
      %2487 = vmatpush1.msra.mxu0 0.0
      %2488 = vmatprep.subr.mxu0 0.0
      %2489 = vmatpush1.msra.mxu0 0.0
      %2490 = vmatprep.subr.mxu0 0.0
      %2491 = vmatpush1.msra.mxu0 0.0
      %2492 = vmatprep.subr.mxu0 0.0
      %2493 = vmatpush1.msra.mxu0 0.0
      %2494 = vmatprep.subr.mxu0 0.0
      %2495 = vmatpush1.msra.mxu0 0.0
      %2496 = vmatprep.subr.mxu0 0.0
      %2497 = vmatpush1.msra.mxu0 0.0
      %2498 = vmatprep.subr.mxu0 0.0
      %2499 = vmatpush1.msra.mxu0 0.0
      %2500 = vmatprep.subr.mxu0 0.0
      %2501 = vmatpush1.msra.mxu0 0.0
      %2502 = vmatprep.subr.mxu0 0.0
      %2503 = vmatpush1.msra.mxu0 0.0
      %2504 = vmatprep.subr.mxu0 0.0
      %2505 = vmatpush1.msra.mxu0 0.0
      %2506 = vmatprep.subr.mxu0 0.0
      %2507 = vmatpush1.msra.mxu0 0.0
      %2508 = vmatprep.subr.mxu0 0.0
      %2509 = vmatpush1.msra.mxu0 0.0
      %2510 = vmatprep.subr.mxu0 0.0
      %2511 = vmatpush1.msra.mxu0 0.0
      %2512 = vmatprep.subr.mxu0 0.0
      %2513 = vmatpush1.msra.mxu0 0.0
      %2514 = vmatprep.subr.mxu0 0.0
      %2515 = vmatpush1.msra.mxu0 0.0
      %2516 = vmatprep.subr.mxu0 0.0
      %2517 = vmatpush1.msra.mxu0 0.0
      %2518 = vmatprep.subr.mxu0 0.0
      %2519 = vmatpush1.msra.mxu0 0.0
      %2520 = vmatprep.subr.mxu0 0.0
      %2521 = vmatpush1.msra.mxu0 0.0
      %2522 = vmatprep.subr.mxu0 0.0
      %2523 = vmatpush1.msra.mxu0 0.0
      %2524 = vmatprep.subr.mxu0 0.0
      %2525 = vmatpush1.msra.mxu0 0.0
      %2526 = vmatprep.subr.mxu0 0.0
      %2527 = vmatpush1.msra.mxu0 0.0
      %2528 = vmatprep.subr.mxu0 0.0
      %2529 = vmatpush1.msra.mxu0 0.0
      %2530 = vmatprep.subr.mxu0 0.0
      %2531 = vmatpush1.msra.mxu0 0.0
      %2532 = vmatprep.subr.mxu0 0.0
      %2533 = vmatpush1.msra.mxu0 0.0
      %2534 = vmatprep.subr.mxu0 0.0
      %2535 = vmatpush1.msra.mxu0 0.0
      %2536 = vmatprep.subr.mxu0 0.0
      %2537 = vmatpush1.msra.mxu0 0.0
      %2538 = vmatprep.subr.mxu0 0.0
      %2539 = vmatpush1.msra.mxu0 0.0
      %2540 = vmatprep.subr.mxu0 0.0
      %2541 = vmatpush1.msra.mxu0 0.0
      %2542 = vmatprep.subr.mxu0 0.0
      %2543 = vmatpush1.msra.mxu0 0.0
      %2544 = vmatprep.subr.mxu0 0.0
      %2545 = vmatpush1.msra.mxu0 0.0
      %2546 = vmatprep.subr.mxu0 0.0
      %2547 = vmatpush1.msra.mxu0 0.0
      %2548 = vmatprep.mubr.f32.mxu0 0.0
      %2549 = vmatmul.mubr.f32.gmra.mrb[0].mxu0 %v2434
      %v2550 = vpop.f32.mrb[0].mxu0
      %v2551 = vadd.f32 %v2355, %v2550
      %v2552 = vpop.f32.mrb[0].mxu0
      %2553 = vmatprep.mubr.f32.mxu0 0.0
      %2554 = vmatmul.mubr.f32.gmra.mrb[0].mxu0 %v2437
      %v2555 = vpop.f32.mrb[0].mxu0
      %v2556 = vadd.f32 %v2360, %v2555
      %v2557 = vpop.f32.mrb[0].mxu0
      %2558 = vmatprep.mubr.f32.mxu0 0.0
      %2559 = vmatmul.mubr.f32.gmra.mrb[0].mxu0 %v2440
      %v2560 = vpop.f32.mrb[0].mxu0
      %v2561 = vadd.f32 %v2365, %v2560
      %v2562 = vpop.f32.mrb[0].mxu0
      %2563 = vmatprep.mubr.f32.mxu0 0.0
      %2564 = vmatmul.mubr.f32.gmra.mrb[0].mxu0 %v2443
      %v2565 = vpop.f32.mrb[0].mxu0
      %v2566 = vadd.f32 %v2370, %v2565
      %v2567 = vpop.f32.mrb[0].mxu0
      %2568 = vmatprep.mubr.f32.mxu0 0.0
      %2569 = vmatmul.mubr.f32.gmra.mrb[0].mxu0 %v2446
      %v2570 = vpop.f32.mrb[0].mxu0
      %v2571 = vadd.f32 %v2375, %v2570
      %v2572 = vpop.f32.mrb[0].mxu0
      %2573 = vmatprep.mubr.f32.mxu0 0.0
      %2574 = vmatmul.mubr.f32.gmra.mrb[0].mxu0 %v2449
      %v2575 = vpop.f32.mrb[0].mxu0
      %v2576 = vadd.f32 %v2380, %v2575
      %v2577 = vpop.f32.mrb[0].mxu0
      %2578 = vmatprep.mubr.f32.mxu0 0.0
      %2579 = vmatmul.mubr.f32.gmra.mrb[0].mxu0 %v2452
      %v2580 = vpop.f32.mrb[0].mxu0
      %v2581 = vadd.f32 %v2385, %v2580
      %v2582 = vpop.f32.mrb[0].mxu0
      %2583 = vmatprep.mubr.f32.mxu0 0.0
      %2584 = vmatmul.mubr.f32.gmra.mrb[0].mxu0 %v2455
      %v2585 = vpop.f32.mrb[0].mxu0
      %v2586 = vadd.f32 %v2390, %v2585
      %v2587 = vpop.f32.mrb[0].mxu0
      %2588 = vmatprep.mubr.f32.mxu0 0.0
      %2589 = vmatmul.mubr.f32.gmra.mrb[0].mxu0 %v2458
      %v2590 = vpop.f32.mrb[0].mxu0
      %v2591 = vadd.f32 %v2395, %v2590
      %v2592 = vpop.f32.mrb[0].mxu0
      %2593 = vmatprep.mubr.f32.mxu0 0.0
      %2594 = vmatmul.mubr.f32.gmra.mrb[0].mxu0 %v2461
      %v2595 = vpop.f32.mrb[0].mxu0
      %v2596 = vadd.f32 %v2400, %v2595
      %v2597 = vpop.f32.mrb[0].mxu0
      %2598 = vmatprep.mubr.f32.mxu0 0.0
      %2599 = vmatmul.mubr.f32.gmra.mrb[0].mxu0 %v2464
      %v2600 = vpop.f32.mrb[0].mxu0
      %v2601 = vadd.f32 %v2405, %v2600
      %v2602 = vpop.f32.mrb[0].mxu0
      %2603 = vmatprep.mubr.f32.mxu0 0.0
      %2604 = vmatmul.mubr.f32.gmra.mrb[0].mxu0 %v2467
      %v2605 = vpop.f32.mrb[0].mxu0
      %v2606 = vadd.f32 %v2410, %v2605
      %v2607 = vpop.f32.mrb[0].mxu0
      %2608 = vmatprep.mubr.f32.mxu0 0.0
      %2609 = vmatmul.mubr.f32.gmra.mrb[0].mxu0 %v2470
      %v2610 = vpop.f32.mrb[0].mxu0
      %v2611 = vadd.f32 %v2415, %v2610
      %v2612 = vpop.f32.mrb[0].mxu0
      %2613 = vmatprep.mubr.f32.mxu0 0.0
      %2614 = vmatmul.mubr.f32.gmra.mrb[0].mxu0 %v2473
      %v2615 = vpop.f32.mrb[0].mxu0
      %v2616 = vadd.f32 %v2420, %v2615
      %v2617 = vpop.f32.mrb[0].mxu0
      %2618 = vmatprep.mubr.f32.mxu0 0.0
      %2619 = vmatmul.mubr.f32.gmra.mrb[0].mxu0 %v2476
      %v2620 = vpop.f32.mrb[0].mxu0
      %v2621 = vadd.f32 %v2425, %v2620
      %v2622 = vpop.f32.mrb[0].mxu0
      %2623 = vmatprep.mubr.f32.mxu0 0.0
      %2624 = vmatmul.mubr.f32.gmra.mrb[0].mxu0 %v2479
      %v2625 = vpop.f32.mrb[0].mxu0
      %v2626 = vadd.f32 %v2430, %v2625
      %v2627 = vpop.f32.mrb[0].mxu0
      %2628 = vdwg.mxu0
      %v2630 = vsel %vm2097, %v2220, 0
      %v2633 = vsel %vm2097, %v2221, 0
      %v2636 = vsel %vm2097, %v2222, 0
      %v2639 = vsel %vm2097, %v2223, 0
      %v2642 = vsel %vm2097, %v2224, 0
      %v2645 = vsel %vm2097, %v2225, 0
      %v2648 = vsel %vm2097, %v2226, 0
      %v2651 = vsel %vm2097, %v2227, 0
      %v2654 = vsel %vm2097, %v2228, 0
      %v2657 = vsel %vm2097, %v2229, 0
      %v2660 = vsel %vm2097, %v2230, 0
      %v2663 = vsel %vm2097, %v2231, 0
      %v2666 = vsel %vm2097, %v2232, 0
      %v2669 = vsel %vm2097, %v2233, 0
      %v2672 = vsel %vm2097, %v2234, 0
      %v2675 = vsel %vm2097, %v2235, 0
      %2677 = vmatprep.subr.mxu0 0.0
      %2678 = vmatpush1.msra.mxu0 %v2286
      %2679 = vmatprep.subr.mxu0 0.0
      %2680 = vmatpush1.msra.mxu0 0.0
      %2681 = vmatprep.subr.mxu0 0.0
      %2682 = vmatpush1.msra.mxu0 0.0
      %2683 = vmatprep.subr.mxu0 0.0
      %2684 = vmatpush1.msra.mxu0 0.0
      %2685 = vmatprep.subr.mxu0 0.0
      %2686 = vmatpush1.msra.mxu0 0.0
      %2687 = vmatprep.subr.mxu0 0.0
      %2688 = vmatpush1.msra.mxu0 0.0
      %2689 = vmatprep.subr.mxu0 0.0
      %2690 = vmatpush1.msra.mxu0 0.0
      %2691 = vmatprep.subr.mxu0 0.0
      %2692 = vmatpush1.msra.mxu0 0.0
      %2693 = vmatprep.subr.mxu0 0.0
      %2694 = vmatpush1.msra.mxu0 0.0
      %2695 = vmatprep.subr.mxu0 0.0
      %2696 = vmatpush1.msra.mxu0 0.0
      %2697 = vmatprep.subr.mxu0 0.0
      %2698 = vmatpush1.msra.mxu0 0.0
      %2699 = vmatprep.subr.mxu0 0.0
      %2700 = vmatpush1.msra.mxu0 0.0
      %2701 = vmatprep.subr.mxu0 0.0
      %2702 = vmatpush1.msra.mxu0 0.0
      %2703 = vmatprep.subr.mxu0 0.0
      %2704 = vmatpush1.msra.mxu0 0.0
      %2705 = vmatprep.subr.mxu0 0.0
      %2706 = vmatpush1.msra.mxu0 0.0
      %2707 = vmatprep.subr.mxu0 0.0
      %2708 = vmatpush1.msra.mxu0 0.0
      %2709 = vmatprep.subr.mxu0 0.0
      %2710 = vmatpush1.msra.mxu0 0.0
      %2711 = vmatprep.subr.mxu0 0.0
      %2712 = vmatpush1.msra.mxu0 0.0
      %2713 = vmatprep.subr.mxu0 0.0
      %2714 = vmatpush1.msra.mxu0 0.0
      %2715 = vmatprep.subr.mxu0 0.0
      %2716 = vmatpush1.msra.mxu0 0.0
      %2717 = vmatprep.subr.mxu0 0.0
      %2718 = vmatpush1.msra.mxu0 0.0
      %2719 = vmatprep.subr.mxu0 0.0
      %2720 = vmatpush1.msra.mxu0 0.0
      %2721 = vmatprep.subr.mxu0 0.0
      %2722 = vmatpush1.msra.mxu0 0.0
      %2723 = vmatprep.subr.mxu0 0.0
      %2724 = vmatpush1.msra.mxu0 0.0
      %2725 = vmatprep.subr.mxu0 0.0
      %2726 = vmatpush1.msra.mxu0 0.0
      %2727 = vmatprep.subr.mxu0 0.0
      %2728 = vmatpush1.msra.mxu0 0.0
      %2729 = vmatprep.subr.mxu0 0.0
      %2730 = vmatpush1.msra.mxu0 0.0
      %2731 = vmatprep.subr.mxu0 0.0
      %2732 = vmatpush1.msra.mxu0 0.0
      %2733 = vmatprep.subr.mxu0 0.0
      %2734 = vmatpush1.msra.mxu0 0.0
      %2735 = vmatprep.subr.mxu0 0.0
      %2736 = vmatpush1.msra.mxu0 0.0
      %2737 = vmatprep.subr.mxu0 0.0
      %2738 = vmatpush1.msra.mxu0 0.0
      %2739 = vmatprep.subr.mxu0 0.0
      %2740 = vmatpush1.msra.mxu0 0.0
      %2741 = vmatprep.mubr.f32.mxu0 0.0
      %2742 = vmatmul.mubr.f32.gmra.mrb[0].mxu0 %v2630
      %v2743 = vpop.f32.mrb[0].mxu0
      %v2744 = vadd.f32 0.0, %v2743
      %v2745 = vpop.f32.mrb[0].mxu0
      %2746 = vmatprep.mubr.f32.mxu0 0.0
      %2747 = vmatmul.mubr.f32.gmra.mrb[0].mxu0 %v2633
      %v2748 = vpop.f32.mrb[0].mxu0
      %v2749 = vadd.f32 0.0, %v2748
      %v2750 = vpop.f32.mrb[0].mxu0
      %2751 = vmatprep.mubr.f32.mxu0 0.0
      %2752 = vmatmul.mubr.f32.gmra.mrb[0].mxu0 %v2636
      %v2753 = vpop.f32.mrb[0].mxu0
      %v2754 = vadd.f32 0.0, %v2753
      %v2755 = vpop.f32.mrb[0].mxu0
      %2756 = vmatprep.mubr.f32.mxu0 0.0
      %2757 = vmatmul.mubr.f32.gmra.mrb[0].mxu0 %v2639
      %v2758 = vpop.f32.mrb[0].mxu0
      %v2759 = vadd.f32 0.0, %v2758
      %v2760 = vpop.f32.mrb[0].mxu0
      %2761 = vmatprep.mubr.f32.mxu0 0.0
      %2762 = vmatmul.mubr.f32.gmra.mrb[0].mxu0 %v2642
      %v2763 = vpop.f32.mrb[0].mxu0
      %v2764 = vadd.f32 0.0, %v2763
      %v2765 = vpop.f32.mrb[0].mxu0
      %2766 = vmatprep.mubr.f32.mxu0 0.0
      %2767 = vmatmul.mubr.f32.gmra.mrb[0].mxu0 %v2645
      %v2768 = vpop.f32.mrb[0].mxu0
      %v2769 = vadd.f32 0.0, %v2768
      %v2770 = vpop.f32.mrb[0].mxu0
      %2771 = vmatprep.mubr.f32.mxu0 0.0
      %2772 = vmatmul.mubr.f32.gmra.mrb[0].mxu0 %v2648
      %v2773 = vpop.f32.mrb[0].mxu0
      %v2774 = vadd.f32 0.0, %v2773
      %v2775 = vpop.f32.mrb[0].mxu0
      %2776 = vmatprep.mubr.f32.mxu0 0.0
      %2777 = vmatmul.mubr.f32.gmra.mrb[0].mxu0 %v2651
      %v2778 = vpop.f32.mrb[0].mxu0
      %v2779 = vadd.f32 0.0, %v2778
      %v2780 = vpop.f32.mrb[0].mxu0
      %2781 = vmatprep.mubr.f32.mxu0 0.0
      %2782 = vmatmul.mubr.f32.gmra.mrb[0].mxu0 %v2654
      %v2783 = vpop.f32.mrb[0].mxu0
      %v2784 = vadd.f32 0.0, %v2783
      %v2785 = vpop.f32.mrb[0].mxu0
      %2786 = vmatprep.mubr.f32.mxu0 0.0
      %2787 = vmatmul.mubr.f32.gmra.mrb[0].mxu0 %v2657
      %v2788 = vpop.f32.mrb[0].mxu0
      %v2789 = vadd.f32 0.0, %v2788
      %v2790 = vpop.f32.mrb[0].mxu0
      %2791 = vmatprep.mubr.f32.mxu0 0.0
      %2792 = vmatmul.mubr.f32.gmra.mrb[0].mxu0 %v2660
      %v2793 = vpop.f32.mrb[0].mxu0
      %v2794 = vadd.f32 0.0, %v2793
      %v2795 = vpop.f32.mrb[0].mxu0
      %2796 = vmatprep.mubr.f32.mxu0 0.0
      %2797 = vmatmul.mubr.f32.gmra.mrb[0].mxu0 %v2663
      %v2798 = vpop.f32.mrb[0].mxu0
      %v2799 = vadd.f32 0.0, %v2798
      %v2800 = vpop.f32.mrb[0].mxu0
      %2801 = vmatprep.mubr.f32.mxu0 0.0
      %2802 = vmatmul.mubr.f32.gmra.mrb[0].mxu0 %v2666
      %v2803 = vpop.f32.mrb[0].mxu0
      %v2804 = vadd.f32 0.0, %v2803
      %v2805 = vpop.f32.mrb[0].mxu0
      %2806 = vmatprep.mubr.f32.mxu0 0.0
      %2807 = vmatmul.mubr.f32.gmra.mrb[0].mxu0 %v2669
      %v2808 = vpop.f32.mrb[0].mxu0
      %v2809 = vadd.f32 0.0, %v2808
      %v2810 = vpop.f32.mrb[0].mxu0
      %2811 = vmatprep.mubr.f32.mxu0 0.0
      %2812 = vmatmul.mubr.f32.gmra.mrb[0].mxu0 %v2672
      %v2813 = vpop.f32.mrb[0].mxu0
      %v2814 = vadd.f32 0.0, %v2813
      %v2815 = vpop.f32.mrb[0].mxu0
      %2816 = vmatprep.mubr.f32.mxu0 0.0
      %2817 = vmatmul.mubr.f32.gmra.mrb[0].mxu0 %v2675
      %v2818 = vpop.f32.mrb[0].mxu0
      %v2819 = vadd.f32 0.0, %v2818
      %v2820 = vpop.f32.mrb[0].mxu0
      %2821 = vdwg.mxu0
      %2822 = vmatprep.subr.mxu0 0.0
      %2823 = vmatpush1.msra.mxu0 %v2482
      %2824 = vmatprep.subr.mxu0 0.0
      %2825 = vmatpush1.msra.mxu0 0.0
      %2826 = vmatprep.subr.mxu0 0.0
      %2827 = vmatpush1.msra.mxu0 0.0
      %2828 = vmatprep.subr.mxu0 0.0
      %2829 = vmatpush1.msra.mxu0 0.0
      %2830 = vmatprep.subr.mxu0 0.0
      %2831 = vmatpush1.msra.mxu0 0.0
      %2832 = vmatprep.subr.mxu0 0.0
      %2833 = vmatpush1.msra.mxu0 0.0
      %2834 = vmatprep.subr.mxu0 0.0
      %2835 = vmatpush1.msra.mxu0 0.0
      %2836 = vmatprep.subr.mxu0 0.0
      %2837 = vmatpush1.msra.mxu0 0.0
      %2838 = vmatprep.subr.mxu0 0.0
      %2839 = vmatpush1.msra.mxu0 0.0
      %2840 = vmatprep.subr.mxu0 0.0
      %2841 = vmatpush1.msra.mxu0 0.0
      %2842 = vmatprep.subr.mxu0 0.0
      %2843 = vmatpush1.msra.mxu0 0.0
      %2844 = vmatprep.subr.mxu0 0.0
      %2845 = vmatpush1.msra.mxu0 0.0
      %2846 = vmatprep.subr.mxu0 0.0
      %2847 = vmatpush1.msra.mxu0 0.0
      %2848 = vmatprep.subr.mxu0 0.0
      %2849 = vmatpush1.msra.mxu0 0.0
      %2850 = vmatprep.subr.mxu0 0.0
      %2851 = vmatpush1.msra.mxu0 0.0
      %2852 = vmatprep.subr.mxu0 0.0
      %2853 = vmatpush1.msra.mxu0 0.0
      %2854 = vmatprep.subr.mxu0 0.0
      %2855 = vmatpush1.msra.mxu0 0.0
      %2856 = vmatprep.subr.mxu0 0.0
      %2857 = vmatpush1.msra.mxu0 0.0
      %2858 = vmatprep.subr.mxu0 0.0
      %2859 = vmatpush1.msra.mxu0 0.0
      %2860 = vmatprep.subr.mxu0 0.0
      %2861 = vmatpush1.msra.mxu0 0.0
      %2862 = vmatprep.subr.mxu0 0.0
      %2863 = vmatpush1.msra.mxu0 0.0
      %2864 = vmatprep.subr.mxu0 0.0
      %2865 = vmatpush1.msra.mxu0 0.0
      %2866 = vmatprep.subr.mxu0 0.0
      %2867 = vmatpush1.msra.mxu0 0.0
      %2868 = vmatprep.subr.mxu0 0.0
      %2869 = vmatpush1.msra.mxu0 0.0
      %2870 = vmatprep.subr.mxu0 0.0
      %2871 = vmatpush1.msra.mxu0 0.0
      %2872 = vmatprep.subr.mxu0 0.0
      %2873 = vmatpush1.msra.mxu0 0.0
      %2874 = vmatprep.subr.mxu0 0.0
      %2875 = vmatpush1.msra.mxu0 0.0
      %2876 = vmatprep.subr.mxu0 0.0
      %2877 = vmatpush1.msra.mxu0 0.0
      %2878 = vmatprep.subr.mxu0 0.0
      %2879 = vmatpush1.msra.mxu0 0.0
      %2880 = vmatprep.subr.mxu0 0.0
      %2881 = vmatpush1.msra.mxu0 0.0
      %2882 = vmatprep.subr.mxu0 0.0
      %2883 = vmatpush1.msra.mxu0 0.0
      %2884 = vmatprep.subr.mxu0 0.0
      %2885 = vmatpush1.msra.mxu0 0.0
      %2886 = vmatprep.mubr.f32.mxu0 0.0
      %2887 = vmatmul.mubr.f32.gmra.mrb[0].mxu0 %v2237
      %v2888 = vpop.f32.mrb[0].mxu0
      %v2889 = vadd.f32 %v2744, %v2888
      %v2890 = vpop.f32.mrb[0].mxu0
      %2891 = vmatprep.mubr.f32.mxu0 0.0
      %2892 = vmatmul.mubr.f32.gmra.mrb[0].mxu0 %v2240
      %v2893 = vpop.f32.mrb[0].mxu0
      %v2894 = vadd.f32 %v2749, %v2893
      %v2895 = vpop.f32.mrb[0].mxu0
      %2896 = vmatprep.mubr.f32.mxu0 0.0
      %2897 = vmatmul.mubr.f32.gmra.mrb[0].mxu0 %v2243
      %v2898 = vpop.f32.mrb[0].mxu0
      %v2899 = vadd.f32 %v2754, %v2898
      %v2900 = vpop.f32.mrb[0].mxu0
      %2901 = vmatprep.mubr.f32.mxu0 0.0
      %2902 = vmatmul.mubr.f32.gmra.mrb[0].mxu0 %v2246
      %v2903 = vpop.f32.mrb[0].mxu0
      %v2904 = vadd.f32 %v2759, %v2903
      %v2905 = vpop.f32.mrb[0].mxu0
      %2906 = vmatprep.mubr.f32.mxu0 0.0
      %2907 = vmatmul.mubr.f32.gmra.mrb[0].mxu0 %v2249
      %v2908 = vpop.f32.mrb[0].mxu0
      %v2909 = vadd.f32 %v2764, %v2908
      %v2910 = vpop.f32.mrb[0].mxu0
      %2911 = vmatprep.mubr.f32.mxu0 0.0
      %2912 = vmatmul.mubr.f32.gmra.mrb[0].mxu0 %v2252
      %v2913 = vpop.f32.mrb[0].mxu0
      %v2914 = vadd.f32 %v2769, %v2913
      %v2915 = vpop.f32.mrb[0].mxu0
      %2916 = vmatprep.mubr.f32.mxu0 0.0
      %2917 = vmatmul.mubr.f32.gmra.mrb[0].mxu0 %v2255
      %v2918 = vpop.f32.mrb[0].mxu0
      %v2919 = vadd.f32 %v2774, %v2918
      %v2920 = vpop.f32.mrb[0].mxu0
      %2921 = vmatprep.mubr.f32.mxu0 0.0
      %2922 = vmatmul.mubr.f32.gmra.mrb[0].mxu0 %v2258
      %v2923 = vpop.f32.mrb[0].mxu0
      %v2924 = vadd.f32 %v2779, %v2923
      %v2925 = vpop.f32.mrb[0].mxu0
      %2926 = vmatprep.mubr.f32.mxu0 0.0
      %2927 = vmatmul.mubr.f32.gmra.mrb[0].mxu0 %v2261
      %v2928 = vpop.f32.mrb[0].mxu0
      %v2929 = vadd.f32 %v2784, %v2928
      %v2930 = vpop.f32.mrb[0].mxu0
      %2931 = vmatprep.mubr.f32.mxu0 0.0
      %2932 = vmatmul.mubr.f32.gmra.mrb[0].mxu0 %v2264
      %v2933 = vpop.f32.mrb[0].mxu0
      %v2934 = vadd.f32 %v2789, %v2933
      %v2935 = vpop.f32.mrb[0].mxu0
      %2936 = vmatprep.mubr.f32.mxu0 0.0
      %2937 = vmatmul.mubr.f32.gmra.mrb[0].mxu0 %v2267
      %v2938 = vpop.f32.mrb[0].mxu0
      %v2939 = vadd.f32 %v2794, %v2938
      %v2940 = vpop.f32.mrb[0].mxu0
      %2941 = vmatprep.mubr.f32.mxu0 0.0
      %2942 = vmatmul.mubr.f32.gmra.mrb[0].mxu0 %v2270
      %v2943 = vpop.f32.mrb[0].mxu0
      %v2944 = vadd.f32 %v2799, %v2943
      %v2945 = vpop.f32.mrb[0].mxu0
      %2946 = vmatprep.mubr.f32.mxu0 0.0
      %2947 = vmatmul.mubr.f32.gmra.mrb[0].mxu0 %v2273
      %v2948 = vpop.f32.mrb[0].mxu0
      %v2949 = vadd.f32 %v2804, %v2948
      %v2950 = vpop.f32.mrb[0].mxu0
      %2951 = vmatprep.mubr.f32.mxu0 0.0
      %2952 = vmatmul.mubr.f32.gmra.mrb[0].mxu0 %v2276
      %v2953 = vpop.f32.mrb[0].mxu0
      %v2954 = vadd.f32 %v2809, %v2953
      %v2955 = vpop.f32.mrb[0].mxu0
      %2956 = vmatprep.mubr.f32.mxu0 0.0
      %2957 = vmatmul.mubr.f32.gmra.mrb[0].mxu0 %v2279
      %v2958 = vpop.f32.mrb[0].mxu0
      %v2959 = vadd.f32 %v2814, %v2958
      %v2960 = vpop.f32.mrb[0].mxu0
      %2961 = vmatprep.mubr.f32.mxu0 0.0
      %2962 = vmatmul.mubr.f32.gmra.mrb[0].mxu0 %v2282
      %v2963 = vpop.f32.mrb[0].mxu0
      %v2964 = vadd.f32 %v2819, %v2963
      %v2965 = vpop.f32.mrb[0].mxu0
      %2966 = vdwg.mxu0
      %s2967 = scalar_lea.vmem %s3, 8
      %v2968 = vld [vmem:[%s2967] sm:$0xf]
      %v2969 = vld [vmem:[#allocation2 + $0x1] sm:$0xff]
      %v2970 = vld [vmem:[#allocation2 + $0x19] sm:$0xff]
      %v2971 = vld [vmem:[#allocation2 + $0x31] sm:$0xff]
      %v2972 = vld [vmem:[#allocation2 + $0x49] sm:$0xff]
      %v2973 = vld [vmem:[#allocation2 + $0x61] sm:$0xff]
      %v2974 = vld [vmem:[#allocation2 + $0x79] sm:$0xff]
      %v2975 = vld [vmem:[#allocation2 + $0x91] sm:$0xff]
      %v2976 = vld [vmem:[#allocation2 + $0xa9] sm:$0xff]
      %v2977 = vld [vmem:[#allocation2 + $0xc1] sm:$0xff]
      %v2978 = vld [vmem:[#allocation2 + $0xd9] sm:$0xff]
      %v2979 = vld [vmem:[#allocation2 + $0xf1] sm:$0xff]
      %v2980 = vld [vmem:[#allocation2 + $0x109] sm:$0xff]
      %v2981 = vld [vmem:[#allocation2 + $0x121] sm:$0xff]
      %v2982 = vld [vmem:[#allocation2 + $0x139] sm:$0xff]
      %v2983 = vld [vmem:[#allocation2 + $0x151] sm:$0xff]
      %v2984 = vld [vmem:[#allocation2 + $0x169] sm:$0xff]
      %v2986 = vsel %vm2284, %v2968, 0
      %2988 = vmatprep.subr.mxu0 0.0
      %2989 = vmatpush1.msra.mxu0 %v2986
      %2990 = vmatprep.subr.mxu0 0.0
      %2991 = vmatpush1.msra.mxu0 0.0
      %2992 = vmatprep.subr.mxu0 0.0
      %2993 = vmatpush1.msra.mxu0 0.0
      %2994 = vmatprep.subr.mxu0 0.0
      %2995 = vmatpush1.msra.mxu0 0.0
      %2996 = vmatprep.subr.mxu0 0.0
      %2997 = vmatpush1.msra.mxu0 0.0
      %2998 = vmatprep.subr.mxu0 0.0
      %2999 = vmatpush1.msra.mxu0 0.0
      %3000 = vmatprep.subr.mxu0 0.0
      %3001 = vmatpush1.msra.mxu0 0.0
      %3002 = vmatprep.subr.mxu0 0.0
      %3003 = vmatpush1.msra.mxu0 0.0
      %3004 = vmatprep.subr.mxu0 0.0
      %3005 = vmatpush1.msra.mxu0 0.0
      %3006 = vmatprep.subr.mxu0 0.0
      %3007 = vmatpush1.msra.mxu0 0.0
      %3008 = vmatprep.subr.mxu0 0.0
      %3009 = vmatpush1.msra.mxu0 0.0
      %3010 = vmatprep.subr.mxu0 0.0
      %3011 = vmatpush1.msra.mxu0 0.0
      %3012 = vmatprep.subr.mxu0 0.0
      %3013 = vmatpush1.msra.mxu0 0.0
      %3014 = vmatprep.subr.mxu0 0.0
      %3015 = vmatpush1.msra.mxu0 0.0
      %3016 = vmatprep.subr.mxu0 0.0
      %3017 = vmatpush1.msra.mxu0 0.0
      %3018 = vmatprep.subr.mxu0 0.0
      %3019 = vmatpush1.msra.mxu0 0.0
      %3020 = vmatprep.subr.mxu0 0.0
      %3021 = vmatpush1.msra.mxu0 0.0
      %3022 = vmatprep.subr.mxu0 0.0
      %3023 = vmatpush1.msra.mxu0 0.0
      %3024 = vmatprep.subr.mxu0 0.0
      %3025 = vmatpush1.msra.mxu0 0.0
      %3026 = vmatprep.subr.mxu0 0.0
      %3027 = vmatpush1.msra.mxu0 0.0
      %3028 = vmatprep.subr.mxu0 0.0
      %3029 = vmatpush1.msra.mxu0 0.0
      %3030 = vmatprep.subr.mxu0 0.0
      %3031 = vmatpush1.msra.mxu0 0.0
      %3032 = vmatprep.subr.mxu0 0.0
      %3033 = vmatpush1.msra.mxu0 0.0
      %3034 = vmatprep.subr.mxu0 0.0
      %3035 = vmatpush1.msra.mxu0 0.0
      %3036 = vmatprep.subr.mxu0 0.0
      %3037 = vmatpush1.msra.mxu0 0.0
      %3038 = vmatprep.subr.mxu0 0.0
      %3039 = vmatpush1.msra.mxu0 0.0
      %3040 = vmatprep.subr.mxu0 0.0
      %3041 = vmatpush1.msra.mxu0 0.0
      %3042 = vmatprep.subr.mxu0 0.0
      %3043 = vmatpush1.msra.mxu0 0.0
      %3044 = vmatprep.subr.mxu0 0.0
      %3045 = vmatpush1.msra.mxu0 0.0
      %3046 = vmatprep.subr.mxu0 0.0
      %3047 = vmatpush1.msra.mxu0 0.0
      %3048 = vmatprep.subr.mxu0 0.0
      %3049 = vmatpush1.msra.mxu0 0.0
      %3050 = vmatprep.subr.mxu0 0.0
      %3051 = vmatpush1.msra.mxu0 0.0
      %3052 = vmatprep.mubr.f32.mxu0 0.0
      %3053 = vmatmul.mubr.f32.gmra.mrb[0].mxu0 %v2630
      %v3054 = vpop.f32.mrb[0].mxu0
      %v3055 = vadd.f32 0.0, %v3054
      %v3056 = vpop.f32.mrb[0].mxu0
      %3057 = vmatprep.mubr.f32.mxu0 0.0
      %3058 = vmatmul.mubr.f32.gmra.mrb[0].mxu0 %v2633
      %v3059 = vpop.f32.mrb[0].mxu0
      %v3060 = vadd.f32 0.0, %v3059
      %v3061 = vpop.f32.mrb[0].mxu0
      %3062 = vmatprep.mubr.f32.mxu0 0.0
      %3063 = vmatmul.mubr.f32.gmra.mrb[0].mxu0 %v2636
      %v3064 = vpop.f32.mrb[0].mxu0
      %v3065 = vadd.f32 0.0, %v3064
      %v3066 = vpop.f32.mrb[0].mxu0
      %3067 = vmatprep.mubr.f32.mxu0 0.0
      %3068 = vmatmul.mubr.f32.gmra.mrb[0].mxu0 %v2639
      %v3069 = vpop.f32.mrb[0].mxu0
      %v3070 = vadd.f32 0.0, %v3069
      %v3071 = vpop.f32.mrb[0].mxu0
      %3072 = vmatprep.mubr.f32.mxu0 0.0
      %3073 = vmatmul.mubr.f32.gmra.mrb[0].mxu0 %v2642
      %v3074 = vpop.f32.mrb[0].mxu0
      %v3075 = vadd.f32 0.0, %v3074
      %v3076 = vpop.f32.mrb[0].mxu0
      %3077 = vmatprep.mubr.f32.mxu0 0.0
      %3078 = vmatmul.mubr.f32.gmra.mrb[0].mxu0 %v2645
      %v3079 = vpop.f32.mrb[0].mxu0
      %v3080 = vadd.f32 0.0, %v3079
      %v3081 = vpop.f32.mrb[0].mxu0
      %3082 = vmatprep.mubr.f32.mxu0 0.0
      %3083 = vmatmul.mubr.f32.gmra.mrb[0].mxu0 %v2648
      %v3084 = vpop.f32.mrb[0].mxu0
      %v3085 = vadd.f32 0.0, %v3084
      %v3086 = vpop.f32.mrb[0].mxu0
      %3087 = vmatprep.mubr.f32.mxu0 0.0
      %3088 = vmatmul.mubr.f32.gmra.mrb[0].mxu0 %v2651
      %v3089 = vpop.f32.mrb[0].mxu0
      %v3090 = vadd.f32 0.0, %v3089
      %v3091 = vpop.f32.mrb[0].mxu0
      %3092 = vmatprep.mubr.f32.mxu0 0.0
      %3093 = vmatmul.mubr.f32.gmra.mrb[0].mxu0 %v2654
      %v3094 = vpop.f32.mrb[0].mxu0
      %v3095 = vadd.f32 0.0, %v3094
      %v3096 = vpop.f32.mrb[0].mxu0
      %3097 = vmatprep.mubr.f32.mxu0 0.0
      %3098 = vmatmul.mubr.f32.gmra.mrb[0].mxu0 %v2657
      %v3099 = vpop.f32.mrb[0].mxu0
      %v3100 = vadd.f32 0.0, %v3099
      %v3101 = vpop.f32.mrb[0].mxu0
      %3102 = vmatprep.mubr.f32.mxu0 0.0
      %3103 = vmatmul.mubr.f32.gmra.mrb[0].mxu0 %v2660
      %v3104 = vpop.f32.mrb[0].mxu0
      %v3105 = vadd.f32 0.0, %v3104
      %v3106 = vpop.f32.mrb[0].mxu0
      %3107 = vmatprep.mubr.f32.mxu0 0.0
      %3108 = vmatmul.mubr.f32.gmra.mrb[0].mxu0 %v2663
      %v3109 = vpop.f32.mrb[0].mxu0
      %v3110 = vadd.f32 0.0, %v3109
      %v3111 = vpop.f32.mrb[0].mxu0
      %3112 = vmatprep.mubr.f32.mxu0 0.0
      %3113 = vmatmul.mubr.f32.gmra.mrb[0].mxu0 %v2666
      %v3114 = vpop.f32.mrb[0].mxu0
      %v3115 = vadd.f32 0.0, %v3114
      %v3116 = vpop.f32.mrb[0].mxu0
      %3117 = vmatprep.mubr.f32.mxu0 0.0
      %3118 = vmatmul.mubr.f32.gmra.mrb[0].mxu0 %v2669
      %v3119 = vpop.f32.mrb[0].mxu0
      %v3120 = vadd.f32 0.0, %v3119
      %v3121 = vpop.f32.mrb[0].mxu0
      %3122 = vmatprep.mubr.f32.mxu0 0.0
      %3123 = vmatmul.mubr.f32.gmra.mrb[0].mxu0 %v2672
      %v3124 = vpop.f32.mrb[0].mxu0
      %v3125 = vadd.f32 0.0, %v3124
      %v3126 = vpop.f32.mrb[0].mxu0
      %3127 = vmatprep.mubr.f32.mxu0 0.0
      %3128 = vmatmul.mubr.f32.gmra.mrb[0].mxu0 %v2675
      %v3129 = vpop.f32.mrb[0].mxu0
      %v3130 = vadd.f32 0.0, %v3129
      %v3131 = vpop.f32.mrb[0].mxu0
      %3132 = vdwg.mxu0
      %v3133 = vadd.f32 %v2551, %v3055
      %v3134 = vadd.f32 %v2556, %v3060
      %v3135 = vadd.f32 %v2561, %v3065
      %v3136 = vadd.f32 %v2566, %v3070
      %v3137 = vadd.f32 %v2571, %v3075
      %v3138 = vadd.f32 %v2576, %v3080
      %v3139 = vadd.f32 %v2581, %v3085
      %v3140 = vadd.f32 %v2586, %v3090
      %v3141 = vadd.f32 %v2591, %v3095
      %v3142 = vadd.f32 %v2596, %v3100
      %v3143 = vadd.f32 %v2601, %v3105
      %v3144 = vadd.f32 %v2606, %v3110
      %v3145 = vadd.f32 %v2611, %v3115
      %v3146 = vadd.f32 %v2616, %v3120
      %v3147 = vadd.f32 %v2621, %v3125
      %v3148 = vadd.f32 %v2626, %v3130
      %v3150 = vsel %vm2097, %v2969, 0
      %v3153 = vsel %vm2097, %v2970, 0
      %v3156 = vsel %vm2097, %v2971, 0
      %v3159 = vsel %vm2097, %v2972, 0
      %v3162 = vsel %vm2097, %v2973, 0
      %v3165 = vsel %vm2097, %v2974, 0
      %v3168 = vsel %vm2097, %v2975, 0
      %v3171 = vsel %vm2097, %v2976, 0
      %v3174 = vsel %vm2097, %v2977, 0
      %v3177 = vsel %vm2097, %v2978, 0
      %v3180 = vsel %vm2097, %v2979, 0
      %v3183 = vsel %vm2097, %v2980, 0
      %v3186 = vsel %vm2097, %v2981, 0
      %v3189 = vsel %vm2097, %v2982, 0
      %v3192 = vsel %vm2097, %v2983, 0
      %v3195 = vsel %vm2097, %v2984, 0
      %3197 = vmatprep.subr.mxu0 0.0
      %3198 = vmatpush1.msra.mxu0 %v2986
      %3199 = vmatprep.subr.mxu0 0.0
      %3200 = vmatpush1.msra.mxu0 0.0
      %3201 = vmatprep.subr.mxu0 0.0
      %3202 = vmatpush1.msra.mxu0 0.0
      %3203 = vmatprep.subr.mxu0 0.0
      %3204 = vmatpush1.msra.mxu0 0.0
      %3205 = vmatprep.subr.mxu0 0.0
      %3206 = vmatpush1.msra.mxu0 0.0
      %3207 = vmatprep.subr.mxu0 0.0
      %3208 = vmatpush1.msra.mxu0 0.0
      %3209 = vmatprep.subr.mxu0 0.0
      %3210 = vmatpush1.msra.mxu0 0.0
      %3211 = vmatprep.subr.mxu0 0.0
      %3212 = vmatpush1.msra.mxu0 0.0
      %3213 = vmatprep.subr.mxu0 0.0
      %3214 = vmatpush1.msra.mxu0 0.0
      %3215 = vmatprep.subr.mxu0 0.0
      %3216 = vmatpush1.msra.mxu0 0.0
      %3217 = vmatprep.subr.mxu0 0.0
      %3218 = vmatpush1.msra.mxu0 0.0
      %3219 = vmatprep.subr.mxu0 0.0
      %3220 = vmatpush1.msra.mxu0 0.0
      %3221 = vmatprep.subr.mxu0 0.0
      %3222 = vmatpush1.msra.mxu0 0.0
      %3223 = vmatprep.subr.mxu0 0.0
      %3224 = vmatpush1.msra.mxu0 0.0
      %3225 = vmatprep.subr.mxu0 0.0
      %3226 = vmatpush1.msra.mxu0 0.0
      %3227 = vmatprep.subr.mxu0 0.0
      %3228 = vmatpush1.msra.mxu0 0.0
      %3229 = vmatprep.subr.mxu0 0.0
      %3230 = vmatpush1.msra.mxu0 0.0
      %3231 = vmatprep.subr.mxu0 0.0
      %3232 = vmatpush1.msra.mxu0 0.0
      %3233 = vmatprep.subr.mxu0 0.0
      %3234 = vmatpush1.msra.mxu0 0.0
      %3235 = vmatprep.subr.mxu0 0.0
      %3236 = vmatpush1.msra.mxu0 0.0
      %3237 = vmatprep.subr.mxu0 0.0
      %3238 = vmatpush1.msra.mxu0 0.0
      %3239 = vmatprep.subr.mxu0 0.0
      %3240 = vmatpush1.msra.mxu0 0.0
      %3241 = vmatprep.subr.mxu0 0.0
      %3242 = vmatpush1.msra.mxu0 0.0
      %3243 = vmatprep.subr.mxu0 0.0
      %3244 = vmatpush1.msra.mxu0 0.0
      %3245 = vmatprep.subr.mxu0 0.0
      %3246 = vmatpush1.msra.mxu0 0.0
      %3247 = vmatprep.subr.mxu0 0.0
      %3248 = vmatpush1.msra.mxu0 0.0
      %3249 = vmatprep.subr.mxu0 0.0
      %3250 = vmatpush1.msra.mxu0 0.0
      %3251 = vmatprep.subr.mxu0 0.0
      %3252 = vmatpush1.msra.mxu0 0.0
      %3253 = vmatprep.subr.mxu0 0.0
      %3254 = vmatpush1.msra.mxu0 0.0
      %3255 = vmatprep.subr.mxu0 0.0
      %3256 = vmatpush1.msra.mxu0 0.0
      %3257 = vmatprep.subr.mxu0 0.0
      %3258 = vmatpush1.msra.mxu0 0.0
      %3259 = vmatprep.subr.mxu0 0.0
      %3260 = vmatpush1.msra.mxu0 0.0
      %3261 = vmatprep.mubr.f32.mxu0 0.0
      %3262 = vmatmul.mubr.f32.gmra.mrb[0].mxu0 %v3150
      %v3263 = vpop.f32.mrb[0].mxu0
      %v3264 = vadd.f32 0.0, %v3263
      %v3265 = vpop.f32.mrb[0].mxu0
      %3266 = vmatprep.mubr.f32.mxu0 0.0
      %3267 = vmatmul.mubr.f32.gmra.mrb[0].mxu0 %v3153
      %v3268 = vpop.f32.mrb[0].mxu0
      %v3269 = vadd.f32 0.0, %v3268
      %v3270 = vpop.f32.mrb[0].mxu0
      %3271 = vmatprep.mubr.f32.mxu0 0.0
      %3272 = vmatmul.mubr.f32.gmra.mrb[0].mxu0 %v3156
      %v3273 = vpop.f32.mrb[0].mxu0
      %v3274 = vadd.f32 0.0, %v3273
      %v3275 = vpop.f32.mrb[0].mxu0
      %3276 = vmatprep.mubr.f32.mxu0 0.0
      %3277 = vmatmul.mubr.f32.gmra.mrb[0].mxu0 %v3159
      %v3278 = vpop.f32.mrb[0].mxu0
      %v3279 = vadd.f32 0.0, %v3278
      %v3280 = vpop.f32.mrb[0].mxu0
      %3281 = vmatprep.mubr.f32.mxu0 0.0
      %3282 = vmatmul.mubr.f32.gmra.mrb[0].mxu0 %v3162
      %v3283 = vpop.f32.mrb[0].mxu0
      %v3284 = vadd.f32 0.0, %v3283
      %v3285 = vpop.f32.mrb[0].mxu0
      %3286 = vmatprep.mubr.f32.mxu0 0.0
      %3287 = vmatmul.mubr.f32.gmra.mrb[0].mxu0 %v3165
      %v3288 = vpop.f32.mrb[0].mxu0
      %v3289 = vadd.f32 0.0, %v3288
      %v3290 = vpop.f32.mrb[0].mxu0
      %3291 = vmatprep.mubr.f32.mxu0 0.0
      %3292 = vmatmul.mubr.f32.gmra.mrb[0].mxu0 %v3168
      %v3293 = vpop.f32.mrb[0].mxu0
      %v3294 = vadd.f32 0.0, %v3293
      %v3295 = vpop.f32.mrb[0].mxu0
      %3296 = vmatprep.mubr.f32.mxu0 0.0
      %3297 = vmatmul.mubr.f32.gmra.mrb[0].mxu0 %v3171
      %v3298 = vpop.f32.mrb[0].mxu0
      %v3299 = vadd.f32 0.0, %v3298
      %v3300 = vpop.f32.mrb[0].mxu0
      %3301 = vmatprep.mubr.f32.mxu0 0.0
      %3302 = vmatmul.mubr.f32.gmra.mrb[0].mxu0 %v3174
      %v3303 = vpop.f32.mrb[0].mxu0
      %v3304 = vadd.f32 0.0, %v3303
      %v3305 = vpop.f32.mrb[0].mxu0
      %3306 = vmatprep.mubr.f32.mxu0 0.0
      %3307 = vmatmul.mubr.f32.gmra.mrb[0].mxu0 %v3177
      %v3308 = vpop.f32.mrb[0].mxu0
      %v3309 = vadd.f32 0.0, %v3308
      %v3310 = vpop.f32.mrb[0].mxu0
      %3311 = vmatprep.mubr.f32.mxu0 0.0
      %3312 = vmatmul.mubr.f32.gmra.mrb[0].mxu0 %v3180
      %v3313 = vpop.f32.mrb[0].mxu0
      %v3314 = vadd.f32 0.0, %v3313
      %v3315 = vpop.f32.mrb[0].mxu0
      %3316 = vmatprep.mubr.f32.mxu0 0.0
      %3317 = vmatmul.mubr.f32.gmra.mrb[0].mxu0 %v3183
      %v3318 = vpop.f32.mrb[0].mxu0
      %v3319 = vadd.f32 0.0, %v3318
      %v3320 = vpop.f32.mrb[0].mxu0
      %3321 = vmatprep.mubr.f32.mxu0 0.0
      %3322 = vmatmul.mubr.f32.gmra.mrb[0].mxu0 %v3186
      %v3323 = vpop.f32.mrb[0].mxu0
      %v3324 = vadd.f32 0.0, %v3323
      %v3325 = vpop.f32.mrb[0].mxu0
      %3326 = vmatprep.mubr.f32.mxu0 0.0
      %3327 = vmatmul.mubr.f32.gmra.mrb[0].mxu0 %v3189
      %v3328 = vpop.f32.mrb[0].mxu0
      %v3329 = vadd.f32 0.0, %v3328
      %v3330 = vpop.f32.mrb[0].mxu0
      %3331 = vmatprep.mubr.f32.mxu0 0.0
      %3332 = vmatmul.mubr.f32.gmra.mrb[0].mxu0 %v3192
      %v3333 = vpop.f32.mrb[0].mxu0
      %v3334 = vadd.f32 0.0, %v3333
      %v3335 = vpop.f32.mrb[0].mxu0
      %3336 = vmatprep.mubr.f32.mxu0 0.0
      %3337 = vmatmul.mubr.f32.gmra.mrb[0].mxu0 %v3195
      %v3338 = vpop.f32.mrb[0].mxu0
      %v3339 = vadd.f32 0.0, %v3338
      %v3340 = vpop.f32.mrb[0].mxu0
      %3341 = vdwg.mxu0
      %v3342 = vadd.f32 %v2889, %v3264
      %v3343 = vadd.f32 %v2894, %v3269
      %v3344 = vadd.f32 %v2899, %v3274
      %v3345 = vadd.f32 %v2904, %v3279
      %v3346 = vadd.f32 %v2909, %v3284
      %v3347 = vadd.f32 %v2914, %v3289
      %v3348 = vadd.f32 %v2919, %v3294
      %v3349 = vadd.f32 %v2924, %v3299
      %v3350 = vadd.f32 %v2929, %v3304
      %v3351 = vadd.f32 %v2934, %v3309
      %v3352 = vadd.f32 %v2939, %v3314
      %v3353 = vadd.f32 %v2944, %v3319
      %v3354 = vadd.f32 %v2949, %v3324
      %v3355 = vadd.f32 %v2954, %v3329
      %v3356 = vadd.f32 %v2959, %v3334
      %v3357 = vadd.f32 %v2964, %v3339
      %s3358 = scalar_lea.vmem %s3, 12
      %v3359 = vld [vmem:[%s3358] sm:$0xf]
      %v3360 = vld [vmem:[%s2152 + $0xf] sm:$0xff]
      %v3361 = vld [vmem:[%s2152 + $0x27] sm:$0xff]
      %v3362 = vld [vmem:[%s2152 + $0x3f] sm:$0xff]
      %v3363 = vld [vmem:[%s2152 + $0x57] sm:$0xff]
      %v3364 = vld [vmem:[%s2152 + $0x6f] sm:$0xff]
      %v3365 = vld [vmem:[%s2152 + $0x87] sm:$0xff]
      %v3366 = vld [vmem:[%s2152 + $0x9f] sm:$0xff]
      %v3367 = vld [vmem:[%s2152 + $0xb7] sm:$0xff]
      %v3368 = vld [vmem:[%s2152 + $0xcf] sm:$0xff]
      %v3369 = vld [vmem:[%s2152 + $0xe7] sm:$0xff]
      %v3370 = vld [vmem:[%s2152 + $0xff] sm:$0xff]
      %v3371 = vld [vmem:[%s2152 + $0x117] sm:$0xff]
      %v3372 = vld [vmem:[%s2152 + $0x12f] sm:$0xff]
      %v3373 = vld [vmem:[%s2152 + $0x147] sm:$0xff]
      %v3374 = vld [vmem:[%s2152 + $0x15f] sm:$0xff]
      %v3375 = vld [vmem:[%s2152 + $0x177] sm:$0xff]
      %v3376 = vld [vmem:[%s2152] sm:$0xff]
      %v3377 = vld [vmem:[%s2152 + $0x18] sm:$0xff]
      %v3378 = vld [vmem:[%s2152 + $0x30] sm:$0xff]
      %v3379 = vld [vmem:[%s2152 + $0x48] sm:$0xff]
      %v3380 = vld [vmem:[%s2152 + $0x60] sm:$0xff]
      %v3381 = vld [vmem:[%s2152 + $0x78] sm:$0xff]
      %v3382 = vld [vmem:[%s2152 + $0x90] sm:$0xff]
      %v3383 = vld [vmem:[%s2152 + $0xa8] sm:$0xff]
      %v3384 = vld [vmem:[%s2152 + $0xc0] sm:$0xff]
      %v3385 = vld [vmem:[%s2152 + $0xd8] sm:$0xff]
      %v3386 = vld [vmem:[%s2152 + $0xf0] sm:$0xff]
      %v3387 = vld [vmem:[%s2152 + $0x108] sm:$0xff]
      %v3388 = vld [vmem:[%s2152 + $0x120] sm:$0xff]
      %v3389 = vld [vmem:[%s2152 + $0x138] sm:$0xff]
      %v3390 = vld [vmem:[%s2152 + $0x150] sm:$0xff]
      %v3391 = vld [vmem:[%s2152 + $0x168] sm:$0xff]
      %v3393 = vsel %vm2097, %v3360, 0
      %v3396 = vsel %vm2097, %v3361, 0
      %v3399 = vsel %vm2097, %v3362, 0
      %v3402 = vsel %vm2097, %v3363, 0
      %v3405 = vsel %vm2097, %v3364, 0
      %v3408 = vsel %vm2097, %v3365, 0
      %v3411 = vsel %vm2097, %v3366, 0
      %v3414 = vsel %vm2097, %v3367, 0
      %v3417 = vsel %vm2097, %v3368, 0
      %v3420 = vsel %vm2097, %v3369, 0
      %v3423 = vsel %vm2097, %v3370, 0
      %v3426 = vsel %vm2097, %v3371, 0
      %v3429 = vsel %vm2097, %v3372, 0
      %v3432 = vsel %vm2097, %v3373, 0
      %v3435 = vsel %vm2097, %v3374, 0
      %v3438 = vsel %vm2097, %v3375, 0
      %v3441 = vsel %vm2284, %v3359, 0
      %3443 = vmatprep.subr.mxu0 0.0
      %3444 = vmatpush1.msra.mxu0 %v3441
      %3445 = vmatprep.subr.mxu0 0.0
      %3446 = vmatpush1.msra.mxu0 0.0
      %3447 = vmatprep.subr.mxu0 0.0
      %3448 = vmatpush1.msra.mxu0 0.0
      %3449 = vmatprep.subr.mxu0 0.0
      %3450 = vmatpush1.msra.mxu0 0.0
      %3451 = vmatprep.subr.mxu0 0.0
      %3452 = vmatpush1.msra.mxu0 0.0
      %3453 = vmatprep.subr.mxu0 0.0
      %3454 = vmatpush1.msra.mxu0 0.0
      %3455 = vmatprep.subr.mxu0 0.0
      %3456 = vmatpush1.msra.mxu0 0.0
      %3457 = vmatprep.subr.mxu0 0.0
      %3458 = vmatpush1.msra.mxu0 0.0
      %3459 = vmatprep.subr.mxu0 0.0
      %3460 = vmatpush1.msra.mxu0 0.0
      %3461 = vmatprep.subr.mxu0 0.0
      %3462 = vmatpush1.msra.mxu0 0.0
      %3463 = vmatprep.subr.mxu0 0.0
      %3464 = vmatpush1.msra.mxu0 0.0
      %3465 = vmatprep.subr.mxu0 0.0
      %3466 = vmatpush1.msra.mxu0 0.0
      %3467 = vmatprep.subr.mxu0 0.0
      %3468 = vmatpush1.msra.mxu0 0.0
      %3469 = vmatprep.subr.mxu0 0.0
      %3470 = vmatpush1.msra.mxu0 0.0
      %3471 = vmatprep.subr.mxu0 0.0
      %3472 = vmatpush1.msra.mxu0 0.0
      %3473 = vmatprep.subr.mxu0 0.0
      %3474 = vmatpush1.msra.mxu0 0.0
      %3475 = vmatprep.subr.mxu0 0.0
      %3476 = vmatpush1.msra.mxu0 0.0
      %3477 = vmatprep.subr.mxu0 0.0
      %3478 = vmatpush1.msra.mxu0 0.0
      %3479 = vmatprep.subr.mxu0 0.0
      %3480 = vmatpush1.msra.mxu0 0.0
      %3481 = vmatprep.subr.mxu0 0.0
      %3482 = vmatpush1.msra.mxu0 0.0
      %3483 = vmatprep.subr.mxu0 0.0
      %3484 = vmatpush1.msra.mxu0 0.0
      %3485 = vmatprep.subr.mxu0 0.0
      %3486 = vmatpush1.msra.mxu0 0.0
      %3487 = vmatprep.subr.mxu0 0.0
      %3488 = vmatpush1.msra.mxu0 0.0
      %3489 = vmatprep.subr.mxu0 0.0
      %3490 = vmatpush1.msra.mxu0 0.0
      %3491 = vmatprep.subr.mxu0 0.0
      %3492 = vmatpush1.msra.mxu0 0.0
      %3493 = vmatprep.subr.mxu0 0.0
      %3494 = vmatpush1.msra.mxu0 0.0
      %3495 = vmatprep.subr.mxu0 0.0
      %3496 = vmatpush1.msra.mxu0 0.0
      %3497 = vmatprep.subr.mxu0 0.0
      %3498 = vmatpush1.msra.mxu0 0.0
      %3499 = vmatprep.subr.mxu0 0.0
      %3500 = vmatpush1.msra.mxu0 0.0
      %3501 = vmatprep.subr.mxu0 0.0
      %3502 = vmatpush1.msra.mxu0 0.0
      %3503 = vmatprep.subr.mxu0 0.0
      %3504 = vmatpush1.msra.mxu0 0.0
      %3505 = vmatprep.subr.mxu0 0.0
      %3506 = vmatpush1.msra.mxu0 0.0
      %3507 = vmatprep.mubr.f32.mxu0 0.0
      %3508 = vmatmul.mubr.f32.gmra.mrb[0].mxu0 %v3393
      %v3509 = vpop.f32.mrb[0].mxu0
      %v3510 = vadd.f32 0.0, %v3509
      %v3511 = vpop.f32.mrb[0].mxu0
      %3512 = vmatprep.mubr.f32.mxu0 0.0
      %3513 = vmatmul.mubr.f32.gmra.mrb[0].mxu0 %v3396
      %v3514 = vpop.f32.mrb[0].mxu0
      %v3515 = vadd.f32 0.0, %v3514
      %v3516 = vpop.f32.mrb[0].mxu0
      %3517 = vmatprep.mubr.f32.mxu0 0.0
      %3518 = vmatmul.mubr.f32.gmra.mrb[0].mxu0 %v3399
      %v3519 = vpop.f32.mrb[0].mxu0
      %v3520 = vadd.f32 0.0, %v3519
      %v3521 = vpop.f32.mrb[0].mxu0
      %3522 = vmatprep.mubr.f32.mxu0 0.0
      %3523 = vmatmul.mubr.f32.gmra.mrb[0].mxu0 %v3402
      %v3524 = vpop.f32.mrb[0].mxu0
      %v3525 = vadd.f32 0.0, %v3524
      %v3526 = vpop.f32.mrb[0].mxu0
      %3527 = vmatprep.mubr.f32.mxu0 0.0
      %3528 = vmatmul.mubr.f32.gmra.mrb[0].mxu0 %v3405
      %v3529 = vpop.f32.mrb[0].mxu0
      %v3530 = vadd.f32 0.0, %v3529
      %v3531 = vpop.f32.mrb[0].mxu0
      %3532 = vmatprep.mubr.f32.mxu0 0.0
      %3533 = vmatmul.mubr.f32.gmra.mrb[0].mxu0 %v3408
      %v3534 = vpop.f32.mrb[0].mxu0
      %v3535 = vadd.f32 0.0, %v3534
      %v3536 = vpop.f32.mrb[0].mxu0
      %3537 = vmatprep.mubr.f32.mxu0 0.0
      %3538 = vmatmul.mubr.f32.gmra.mrb[0].mxu0 %v3411
      %v3539 = vpop.f32.mrb[0].mxu0
      %v3540 = vadd.f32 0.0, %v3539
      %v3541 = vpop.f32.mrb[0].mxu0
      %3542 = vmatprep.mubr.f32.mxu0 0.0
      %3543 = vmatmul.mubr.f32.gmra.mrb[0].mxu0 %v3414
      %v3544 = vpop.f32.mrb[0].mxu0
      %v3545 = vadd.f32 0.0, %v3544
      %v3546 = vpop.f32.mrb[0].mxu0
      %3547 = vmatprep.mubr.f32.mxu0 0.0
      %3548 = vmatmul.mubr.f32.gmra.mrb[0].mxu0 %v3417
      %v3549 = vpop.f32.mrb[0].mxu0
      %v3550 = vadd.f32 0.0, %v3549
      %v3551 = vpop.f32.mrb[0].mxu0
      %3552 = vmatprep.mubr.f32.mxu0 0.0
      %3553 = vmatmul.mubr.f32.gmra.mrb[0].mxu0 %v3420
      %v3554 = vpop.f32.mrb[0].mxu0
      %v3555 = vadd.f32 0.0, %v3554
      %v3556 = vpop.f32.mrb[0].mxu0
      %3557 = vmatprep.mubr.f32.mxu0 0.0
      %3558 = vmatmul.mubr.f32.gmra.mrb[0].mxu0 %v3423
      %v3559 = vpop.f32.mrb[0].mxu0
      %v3560 = vadd.f32 0.0, %v3559
      %v3561 = vpop.f32.mrb[0].mxu0
      %3562 = vmatprep.mubr.f32.mxu0 0.0
      %3563 = vmatmul.mubr.f32.gmra.mrb[0].mxu0 %v3426
      %v3564 = vpop.f32.mrb[0].mxu0
      %v3565 = vadd.f32 0.0, %v3564
      %v3566 = vpop.f32.mrb[0].mxu0
      %3567 = vmatprep.mubr.f32.mxu0 0.0
      %3568 = vmatmul.mubr.f32.gmra.mrb[0].mxu0 %v3429
      %v3569 = vpop.f32.mrb[0].mxu0
      %v3570 = vadd.f32 0.0, %v3569
      %v3571 = vpop.f32.mrb[0].mxu0
      %3572 = vmatprep.mubr.f32.mxu0 0.0
      %3573 = vmatmul.mubr.f32.gmra.mrb[0].mxu0 %v3432
      %v3574 = vpop.f32.mrb[0].mxu0
      %v3575 = vadd.f32 0.0, %v3574
      %v3576 = vpop.f32.mrb[0].mxu0
      %3577 = vmatprep.mubr.f32.mxu0 0.0
      %3578 = vmatmul.mubr.f32.gmra.mrb[0].mxu0 %v3435
      %v3579 = vpop.f32.mrb[0].mxu0
      %v3580 = vadd.f32 0.0, %v3579
      %v3581 = vpop.f32.mrb[0].mxu0
      %3582 = vmatprep.mubr.f32.mxu0 0.0
      %3583 = vmatmul.mubr.f32.gmra.mrb[0].mxu0 %v3438
      %v3584 = vpop.f32.mrb[0].mxu0
      %v3585 = vadd.f32 0.0, %v3584
      %v3586 = vpop.f32.mrb[0].mxu0
      %3587 = vdwg.mxu0
      %v3588 = vadd.f32 %v3133, %v3510
      %v3589 = vadd.f32 %v3134, %v3515
      %v3590 = vadd.f32 %v3135, %v3520
      %v3591 = vadd.f32 %v3136, %v3525
      %v3592 = vadd.f32 %v3137, %v3530
      %v3593 = vadd.f32 %v3138, %v3535
      %v3594 = vadd.f32 %v3139, %v3540
      %v3595 = vadd.f32 %v3140, %v3545
      %v3596 = vadd.f32 %v3141, %v3550
      %v3597 = vadd.f32 %v3142, %v3555
      %v3598 = vadd.f32 %v3143, %v3560
      %v3599 = vadd.f32 %v3144, %v3565
      %v3600 = vadd.f32 %v3145, %v3570
      %v3601 = vadd.f32 %v3146, %v3575
      %v3602 = vadd.f32 %v3147, %v3580
      %v3603 = vadd.f32 %v3148, %v3585
      %v3605 = vsel %vm2097, %v3376, 0
      %v3608 = vsel %vm2097, %v3377, 0
      %v3611 = vsel %vm2097, %v3378, 0
      %v3614 = vsel %vm2097, %v3379, 0
      %v3617 = vsel %vm2097, %v3380, 0
      %v3620 = vsel %vm2097, %v3381, 0
      %v3623 = vsel %vm2097, %v3382, 0
      %v3626 = vsel %vm2097, %v3383, 0
      %v3629 = vsel %vm2097, %v3384, 0
      %v3632 = vsel %vm2097, %v3385, 0
      %v3635 = vsel %vm2097, %v3386, 0
      %v3638 = vsel %vm2097, %v3387, 0
      %v3641 = vsel %vm2097, %v3388, 0
      %v3644 = vsel %vm2097, %v3389, 0
      %v3647 = vsel %vm2097, %v3390, 0
      %v3650 = vsel %vm2097, %v3391, 0
      %3652 = vmatprep.subr.mxu0 0.0
      %3653 = vmatpush1.msra.mxu0 %v3441
      %3654 = vmatprep.subr.mxu0 0.0
      %3655 = vmatpush1.msra.mxu0 0.0
      %3656 = vmatprep.subr.mxu0 0.0
      %3657 = vmatpush1.msra.mxu0 0.0
      %3658 = vmatprep.subr.mxu0 0.0
      %3659 = vmatpush1.msra.mxu0 0.0
      %3660 = vmatprep.subr.mxu0 0.0
      %3661 = vmatpush1.msra.mxu0 0.0
      %3662 = vmatprep.subr.mxu0 0.0
      %3663 = vmatpush1.msra.mxu0 0.0
      %3664 = vmatprep.subr.mxu0 0.0
      %3665 = vmatpush1.msra.mxu0 0.0
      %3666 = vmatprep.subr.mxu0 0.0
      %3667 = vmatpush1.msra.mxu0 0.0
      %3668 = vmatprep.subr.mxu0 0.0
      %3669 = vmatpush1.msra.mxu0 0.0
      %3670 = vmatprep.subr.mxu0 0.0
      %3671 = vmatpush1.msra.mxu0 0.0
      %3672 = vmatprep.subr.mxu0 0.0
      %3673 = vmatpush1.msra.mxu0 0.0
      %3674 = vmatprep.subr.mxu0 0.0
      %3675 = vmatpush1.msra.mxu0 0.0
      %3676 = vmatprep.subr.mxu0 0.0
      %3677 = vmatpush1.msra.mxu0 0.0
      %3678 = vmatprep.subr.mxu0 0.0
      %3679 = vmatpush1.msra.mxu0 0.0
      %3680 = vmatprep.subr.mxu0 0.0
      %3681 = vmatpush1.msra.mxu0 0.0
      %3682 = vmatprep.subr.mxu0 0.0
      %3683 = vmatpush1.msra.mxu0 0.0
      %3684 = vmatprep.subr.mxu0 0.0
      %3685 = vmatpush1.msra.mxu0 0.0
      %3686 = vmatprep.subr.mxu0 0.0
      %3687 = vmatpush1.msra.mxu0 0.0
      %3688 = vmatprep.subr.mxu0 0.0
      %3689 = vmatpush1.msra.mxu0 0.0
      %3690 = vmatprep.subr.mxu0 0.0
      %3691 = vmatpush1.msra.mxu0 0.0
      %3692 = vmatprep.subr.mxu0 0.0
      %3693 = vmatpush1.msra.mxu0 0.0
      %3694 = vmatprep.subr.mxu0 0.0
      %3695 = vmatpush1.msra.mxu0 0.0
      %3696 = vmatprep.subr.mxu0 0.0
      %3697 = vmatpush1.msra.mxu0 0.0
      %3698 = vmatprep.subr.mxu0 0.0
      %3699 = vmatpush1.msra.mxu0 0.0
      %3700 = vmatprep.subr.mxu0 0.0
      %3701 = vmatpush1.msra.mxu0 0.0
      %3702 = vmatprep.subr.mxu0 0.0
      %3703 = vmatpush1.msra.mxu0 0.0
      %3704 = vmatprep.subr.mxu0 0.0
      %3705 = vmatpush1.msra.mxu0 0.0
      %3706 = vmatprep.subr.mxu0 0.0
      %3707 = vmatpush1.msra.mxu0 0.0
      %3708 = vmatprep.subr.mxu0 0.0
      %3709 = vmatpush1.msra.mxu0 0.0
      %3710 = vmatprep.subr.mxu0 0.0
      %3711 = vmatpush1.msra.mxu0 0.0
      %3712 = vmatprep.subr.mxu0 0.0
      %3713 = vmatpush1.msra.mxu0 0.0
      %3714 = vmatprep.subr.mxu0 0.0
      %3715 = vmatpush1.msra.mxu0 0.0
      %3716 = vmatprep.mubr.f32.mxu0 0.0
      %3717 = vmatmul.mubr.f32.gmra.mrb[0].mxu0 %v3605
      %v3718 = vpop.f32.mrb[0].mxu0
      %v3719 = vadd.f32 0.0, %v3718
      %v3720 = vpop.f32.mrb[0].mxu0
      %3721 = vmatprep.mubr.f32.mxu0 0.0
      %3722 = vmatmul.mubr.f32.gmra.mrb[0].mxu0 %v3608
      %v3723 = vpop.f32.mrb[0].mxu0
      %v3724 = vadd.f32 0.0, %v3723
      %v3725 = vpop.f32.mrb[0].mxu0
      %3726 = vmatprep.mubr.f32.mxu0 0.0
      %3727 = vmatmul.mubr.f32.gmra.mrb[0].mxu0 %v3611
      %v3728 = vpop.f32.mrb[0].mxu0
      %v3729 = vadd.f32 0.0, %v3728
      %v3730 = vpop.f32.mrb[0].mxu0
      %3731 = vmatprep.mubr.f32.mxu0 0.0
      %3732 = vmatmul.mubr.f32.gmra.mrb[0].mxu0 %v3614
      %v3733 = vpop.f32.mrb[0].mxu0
      %v3734 = vadd.f32 0.0, %v3733
      %v3735 = vpop.f32.mrb[0].mxu0
      %3736 = vmatprep.mubr.f32.mxu0 0.0
      %3737 = vmatmul.mubr.f32.gmra.mrb[0].mxu0 %v3617
      %v3738 = vpop.f32.mrb[0].mxu0
      %v3739 = vadd.f32 0.0, %v3738
      %v3740 = vpop.f32.mrb[0].mxu0
      %3741 = vmatprep.mubr.f32.mxu0 0.0
      %3742 = vmatmul.mubr.f32.gmra.mrb[0].mxu0 %v3620
      %v3743 = vpop.f32.mrb[0].mxu0
      %v3744 = vadd.f32 0.0, %v3743
      %v3745 = vpop.f32.mrb[0].mxu0
      %3746 = vmatprep.mubr.f32.mxu0 0.0
      %3747 = vmatmul.mubr.f32.gmra.mrb[0].mxu0 %v3623
      %v3748 = vpop.f32.mrb[0].mxu0
      %v3749 = vadd.f32 0.0, %v3748
      %v3750 = vpop.f32.mrb[0].mxu0
      %3751 = vmatprep.mubr.f32.mxu0 0.0
      %3752 = vmatmul.mubr.f32.gmra.mrb[0].mxu0 %v3626
      %v3753 = vpop.f32.mrb[0].mxu0
      %v3754 = vadd.f32 0.0, %v3753
      %v3755 = vpop.f32.mrb[0].mxu0
      %3756 = vmatprep.mubr.f32.mxu0 0.0
      %3757 = vmatmul.mubr.f32.gmra.mrb[0].mxu0 %v3629
      %v3758 = vpop.f32.mrb[0].mxu0
      %v3759 = vadd.f32 0.0, %v3758
      %v3760 = vpop.f32.mrb[0].mxu0
      %3761 = vmatprep.mubr.f32.mxu0 0.0
      %3762 = vmatmul.mubr.f32.gmra.mrb[0].mxu0 %v3632
      %v3763 = vpop.f32.mrb[0].mxu0
      %v3764 = vadd.f32 0.0, %v3763
      %v3765 = vpop.f32.mrb[0].mxu0
      %3766 = vmatprep.mubr.f32.mxu0 0.0
      %3767 = vmatmul.mubr.f32.gmra.mrb[0].mxu0 %v3635
      %v3768 = vpop.f32.mrb[0].mxu0
      %v3769 = vadd.f32 0.0, %v3768
      %v3770 = vpop.f32.mrb[0].mxu0
      %3771 = vmatprep.mubr.f32.mxu0 0.0
      %3772 = vmatmul.mubr.f32.gmra.mrb[0].mxu0 %v3638
      %v3773 = vpop.f32.mrb[0].mxu0
      %v3774 = vadd.f32 0.0, %v3773
      %v3775 = vpop.f32.mrb[0].mxu0
      %3776 = vmatprep.mubr.f32.mxu0 0.0
      %3777 = vmatmul.mubr.f32.gmra.mrb[0].mxu0 %v3641
      %v3778 = vpop.f32.mrb[0].mxu0
      %v3779 = vadd.f32 0.0, %v3778
      %v3780 = vpop.f32.mrb[0].mxu0
      %3781 = vmatprep.mubr.f32.mxu0 0.0
      %3782 = vmatmul.mubr.f32.gmra.mrb[0].mxu0 %v3644
      %v3783 = vpop.f32.mrb[0].mxu0
      %v3784 = vadd.f32 0.0, %v3783
      %v3785 = vpop.f32.mrb[0].mxu0
      %3786 = vmatprep.mubr.f32.mxu0 0.0
      %3787 = vmatmul.mubr.f32.gmra.mrb[0].mxu0 %v3647
      %v3788 = vpop.f32.mrb[0].mxu0
      %v3789 = vadd.f32 0.0, %v3788
      %v3790 = vpop.f32.mrb[0].mxu0
      %3791 = vmatprep.mubr.f32.mxu0 0.0
      %3792 = vmatmul.mubr.f32.gmra.mrb[0].mxu0 %v3650
      %v3793 = vpop.f32.mrb[0].mxu0
      %v3794 = vadd.f32 0.0, %v3793
      %v3795 = vpop.f32.mrb[0].mxu0
      %3796 = vdwg.mxu0
      %v3797 = vadd.f32 %v3342, %v3719
      %v3798 = vadd.f32 %v3343, %v3724
      %v3799 = vadd.f32 %v3344, %v3729
      %v3800 = vadd.f32 %v3345, %v3734
      %v3801 = vadd.f32 %v3346, %v3739
      %v3802 = vadd.f32 %v3347, %v3744
      %v3803 = vadd.f32 %v3348, %v3749
      %v3804 = vadd.f32 %v3349, %v3754
      %v3805 = vadd.f32 %v3350, %v3759
      %v3806 = vadd.f32 %v3351, %v3764
      %v3807 = vadd.f32 %v3352, %v3769
      %v3808 = vadd.f32 %v3353, %v3774
      %v3809 = vadd.f32 %v3354, %v3779
      %v3810 = vadd.f32 %v3355, %v3784
      %v3811 = vadd.f32 %v3356, %v3789
      %v3812 = vadd.f32 %v3357, %v3794
      %s3813 = scalar_lea.vmem %s3, 16
      %v3814 = vld [vmem:[%s3813] sm:$0xf]
      %v3815 = vld [vmem:[%s2152 + $0x10] sm:$0xff]
      %v3816 = vld [vmem:[%s2152 + $0x28] sm:$0xff]
      %v3817 = vld [vmem:[%s2152 + $0x40] sm:$0xff]
      %v3818 = vld [vmem:[%s2152 + $0x58] sm:$0xff]
      %v3819 = vld [vmem:[%s2152 + $0x70] sm:$0xff]
      %v3820 = vld [vmem:[%s2152 + $0x88] sm:$0xff]
      %v3821 = vld [vmem:[%s2152 + $0xa0] sm:$0xff]
      %v3822 = vld [vmem:[%s2152 + $0xb8] sm:$0xff]
      %v3823 = vld [vmem:[%s2152 + $0xd0] sm:$0xff]
      %v3824 = vld [vmem:[%s2152 + $0xe8] sm:$0xff]
      %v3825 = vld [vmem:[%s2152 + $0x100] sm:$0xff]
      %v3826 = vld [vmem:[%s2152 + $0x118] sm:$0xff]
      %v3827 = vld [vmem:[%s2152 + $0x130] sm:$0xff]
      %v3828 = vld [vmem:[%s2152 + $0x148] sm:$0xff]
      %v3829 = vld [vmem:[%s2152 + $0x160] sm:$0xff]
      %v3830 = vld [vmem:[%s2152 + $0x178] sm:$0xff]
      %v3832 = vsel %vm2284, %v3814, 0
      %3834 = vmatprep.subr.mxu0 0.0
      %3835 = vmatpush1.msra.mxu0 %v3832
      %3836 = vmatprep.subr.mxu0 0.0
      %3837 = vmatpush1.msra.mxu0 0.0
      %3838 = vmatprep.subr.mxu0 0.0
      %3839 = vmatpush1.msra.mxu0 0.0
      %3840 = vmatprep.subr.mxu0 0.0
      %3841 = vmatpush1.msra.mxu0 0.0
      %3842 = vmatprep.subr.mxu0 0.0
      %3843 = vmatpush1.msra.mxu0 0.0
      %3844 = vmatprep.subr.mxu0 0.0
      %3845 = vmatpush1.msra.mxu0 0.0
      %3846 = vmatprep.subr.mxu0 0.0
      %3847 = vmatpush1.msra.mxu0 0.0
      %3848 = vmatprep.subr.mxu0 0.0
      %3849 = vmatpush1.msra.mxu0 0.0
      %3850 = vmatprep.subr.mxu0 0.0
      %3851 = vmatpush1.msra.mxu0 0.0
      %3852 = vmatprep.subr.mxu0 0.0
      %3853 = vmatpush1.msra.mxu0 0.0
      %3854 = vmatprep.subr.mxu0 0.0
      %3855 = vmatpush1.msra.mxu0 0.0
      %3856 = vmatprep.subr.mxu0 0.0
      %3857 = vmatpush1.msra.mxu0 0.0
      %3858 = vmatprep.subr.mxu0 0.0
      %3859 = vmatpush1.msra.mxu0 0.0
      %3860 = vmatprep.subr.mxu0 0.0
      %3861 = vmatpush1.msra.mxu0 0.0
      %3862 = vmatprep.subr.mxu0 0.0
      %3863 = vmatpush1.msra.mxu0 0.0
      %3864 = vmatprep.subr.mxu0 0.0
      %3865 = vmatpush1.msra.mxu0 0.0
      %3866 = vmatprep.subr.mxu0 0.0
      %3867 = vmatpush1.msra.mxu0 0.0
      %3868 = vmatprep.subr.mxu0 0.0
      %3869 = vmatpush1.msra.mxu0 0.0
      %3870 = vmatprep.subr.mxu0 0.0
      %3871 = vmatpush1.msra.mxu0 0.0
      %3872 = vmatprep.subr.mxu0 0.0
      %3873 = vmatpush1.msra.mxu0 0.0
      %3874 = vmatprep.subr.mxu0 0.0
      %3875 = vmatpush1.msra.mxu0 0.0
      %3876 = vmatprep.subr.mxu0 0.0
      %3877 = vmatpush1.msra.mxu0 0.0
      %3878 = vmatprep.subr.mxu0 0.0
      %3879 = vmatpush1.msra.mxu0 0.0
      %3880 = vmatprep.subr.mxu0 0.0
      %3881 = vmatpush1.msra.mxu0 0.0
      %3882 = vmatprep.subr.mxu0 0.0
      %3883 = vmatpush1.msra.mxu0 0.0
      %3884 = vmatprep.subr.mxu0 0.0
      %3885 = vmatpush1.msra.mxu0 0.0
      %3886 = vmatprep.subr.mxu0 0.0
      %3887 = vmatpush1.msra.mxu0 0.0
      %3888 = vmatprep.subr.mxu0 0.0
      %3889 = vmatpush1.msra.mxu0 0.0
      %3890 = vmatprep.subr.mxu0 0.0
      %3891 = vmatpush1.msra.mxu0 0.0
      %3892 = vmatprep.subr.mxu0 0.0
      %3893 = vmatpush1.msra.mxu0 0.0
      %3894 = vmatprep.subr.mxu0 0.0
      %3895 = vmatpush1.msra.mxu0 0.0
      %3896 = vmatprep.subr.mxu0 0.0
      %3897 = vmatpush1.msra.mxu0 0.0
      %3898 = vmatprep.mubr.f32.mxu0 0.0
      %3899 = vmatmul.mubr.f32.gmra.mrb[0].mxu0 %v3605
      %v3900 = vpop.f32.mrb[0].mxu0
      %v3901 = vadd.f32 0.0, %v3900
      %v3902 = vpop.f32.mrb[0].mxu0
      %3903 = vmatprep.mubr.f32.mxu0 0.0
      %3904 = vmatmul.mubr.f32.gmra.mrb[0].mxu0 %v3608
      %v3905 = vpop.f32.mrb[0].mxu0
      %v3906 = vadd.f32 0.0, %v3905
      %v3907 = vpop.f32.mrb[0].mxu0
      %3908 = vmatprep.mubr.f32.mxu0 0.0
      %3909 = vmatmul.mubr.f32.gmra.mrb[0].mxu0 %v3611
      %v3910 = vpop.f32.mrb[0].mxu0
      %v3911 = vadd.f32 0.0, %v3910
      %v3912 = vpop.f32.mrb[0].mxu0
      %3913 = vmatprep.mubr.f32.mxu0 0.0
      %3914 = vmatmul.mubr.f32.gmra.mrb[0].mxu0 %v3614
      %v3915 = vpop.f32.mrb[0].mxu0
      %v3916 = vadd.f32 0.0, %v3915
      %v3917 = vpop.f32.mrb[0].mxu0
      %3918 = vmatprep.mubr.f32.mxu0 0.0
      %3919 = vmatmul.mubr.f32.gmra.mrb[0].mxu0 %v3617
      %v3920 = vpop.f32.mrb[0].mxu0
      %v3921 = vadd.f32 0.0, %v3920
      %v3922 = vpop.f32.mrb[0].mxu0
      %3923 = vmatprep.mubr.f32.mxu0 0.0
      %3924 = vmatmul.mubr.f32.gmra.mrb[0].mxu0 %v3620
      %v3925 = vpop.f32.mrb[0].mxu0
      %v3926 = vadd.f32 0.0, %v3925
      %v3927 = vpop.f32.mrb[0].mxu0
      %3928 = vmatprep.mubr.f32.mxu0 0.0
      %3929 = vmatmul.mubr.f32.gmra.mrb[0].mxu0 %v3623
      %v3930 = vpop.f32.mrb[0].mxu0
      %v3931 = vadd.f32 0.0, %v3930
      %v3932 = vpop.f32.mrb[0].mxu0
      %3933 = vmatprep.mubr.f32.mxu0 0.0
      %3934 = vmatmul.mubr.f32.gmra.mrb[0].mxu0 %v3626
      %v3935 = vpop.f32.mrb[0].mxu0
      %v3936 = vadd.f32 0.0, %v3935
      %v3937 = vpop.f32.mrb[0].mxu0
      %3938 = vmatprep.mubr.f32.mxu0 0.0
      %3939 = vmatmul.mubr.f32.gmra.mrb[0].mxu0 %v3629
      %v3940 = vpop.f32.mrb[0].mxu0
      %v3941 = vadd.f32 0.0, %v3940
      %v3942 = vpop.f32.mrb[0].mxu0
      %3943 = vmatprep.mubr.f32.mxu0 0.0
      %3944 = vmatmul.mubr.f32.gmra.mrb[0].mxu0 %v3632
      %v3945 = vpop.f32.mrb[0].mxu0
      %v3946 = vadd.f32 0.0, %v3945
      %v3947 = vpop.f32.mrb[0].mxu0
      %3948 = vmatprep.mubr.f32.mxu0 0.0
      %3949 = vmatmul.mubr.f32.gmra.mrb[0].mxu0 %v3635
      %v3950 = vpop.f32.mrb[0].mxu0
      %v3951 = vadd.f32 0.0, %v3950
      %v3952 = vpop.f32.mrb[0].mxu0
      %3953 = vmatprep.mubr.f32.mxu0 0.0
      %3954 = vmatmul.mubr.f32.gmra.mrb[0].mxu0 %v3638
      %v3955 = vpop.f32.mrb[0].mxu0
      %v3956 = vadd.f32 0.0, %v3955
      %v3957 = vpop.f32.mrb[0].mxu0
      %3958 = vmatprep.mubr.f32.mxu0 0.0
      %3959 = vmatmul.mubr.f32.gmra.mrb[0].mxu0 %v3641
      %v3960 = vpop.f32.mrb[0].mxu0
      %v3961 = vadd.f32 0.0, %v3960
      %v3962 = vpop.f32.mrb[0].mxu0
      %3963 = vmatprep.mubr.f32.mxu0 0.0
      %3964 = vmatmul.mubr.f32.gmra.mrb[0].mxu0 %v3644
      %v3965 = vpop.f32.mrb[0].mxu0
      %v3966 = vadd.f32 0.0, %v3965
      %v3967 = vpop.f32.mrb[0].mxu0
      %3968 = vmatprep.mubr.f32.mxu0 0.0
      %3969 = vmatmul.mubr.f32.gmra.mrb[0].mxu0 %v3647
      %v3970 = vpop.f32.mrb[0].mxu0
      %v3971 = vadd.f32 0.0, %v3970
      %v3972 = vpop.f32.mrb[0].mxu0
      %3973 = vmatprep.mubr.f32.mxu0 0.0
      %3974 = vmatmul.mubr.f32.gmra.mrb[0].mxu0 %v3650
      %v3975 = vpop.f32.mrb[0].mxu0
      %v3976 = vadd.f32 0.0, %v3975
      %v3977 = vpop.f32.mrb[0].mxu0
      %3978 = vdwg.mxu0
      %v3979 = vadd.f32 %v3588, %v3901
      %v3980 = vadd.f32 %v3589, %v3906
      %v3981 = vadd.f32 %v3590, %v3911
      %v3982 = vadd.f32 %v3591, %v3916
      %v3983 = vadd.f32 %v3592, %v3921
      %v3984 = vadd.f32 %v3593, %v3926
      %v3985 = vadd.f32 %v3594, %v3931
      %v3986 = vadd.f32 %v3595, %v3936
      %v3987 = vadd.f32 %v3596, %v3941
      %v3988 = vadd.f32 %v3597, %v3946
      %v3989 = vadd.f32 %v3598, %v3951
      %v3990 = vadd.f32 %v3599, %v3956
      %v3991 = vadd.f32 %v3600, %v3961
      %v3992 = vadd.f32 %v3601, %v3966
      %v3993 = vadd.f32 %v3602, %v3971
      %v3994 = vadd.f32 %v3603, %v3976
      %v3996 = vsel %vm2097, %v3815, 0
      %v3999 = vsel %vm2097, %v3816, 0
      %v4002 = vsel %vm2097, %v3817, 0
      %v4005 = vsel %vm2097, %v3818, 0
      %v4008 = vsel %vm2097, %v3819, 0
      %v4011 = vsel %vm2097, %v3820, 0
      %v4014 = vsel %vm2097, %v3821, 0
      %v4017 = vsel %vm2097, %v3822, 0
      %v4020 = vsel %vm2097, %v3823, 0
      %v4023 = vsel %vm2097, %v3824, 0
      %v4026 = vsel %vm2097, %v3825, 0
      %v4029 = vsel %vm2097, %v3826, 0
      %v4032 = vsel %vm2097, %v3827, 0
      %v4035 = vsel %vm2097, %v3828, 0
      %v4038 = vsel %vm2097, %v3829, 0
      %v4041 = vsel %vm2097, %v3830, 0
      %4043 = vmatprep.subr.mxu0 0.0
      %4044 = vmatpush1.msra.mxu0 %v3832
      %4045 = vmatprep.subr.mxu0 0.0
      %4046 = vmatpush1.msra.mxu0 0.0
      %4047 = vmatprep.subr.mxu0 0.0
      %4048 = vmatpush1.msra.mxu0 0.0
      %4049 = vmatprep.subr.mxu0 0.0
      %4050 = vmatpush1.msra.mxu0 0.0
      %4051 = vmatprep.subr.mxu0 0.0
      %4052 = vmatpush1.msra.mxu0 0.0
      %4053 = vmatprep.subr.mxu0 0.0
      %4054 = vmatpush1.msra.mxu0 0.0
      %4055 = vmatprep.subr.mxu0 0.0
      %4056 = vmatpush1.msra.mxu0 0.0
      %4057 = vmatprep.subr.mxu0 0.0
      %4058 = vmatpush1.msra.mxu0 0.0
      %4059 = vmatprep.subr.mxu0 0.0
      %4060 = vmatpush1.msra.mxu0 0.0
      %4061 = vmatprep.subr.mxu0 0.0
      %4062 = vmatpush1.msra.mxu0 0.0
      %4063 = vmatprep.subr.mxu0 0.0
      %4064 = vmatpush1.msra.mxu0 0.0
      %4065 = vmatprep.subr.mxu0 0.0
      %4066 = vmatpush1.msra.mxu0 0.0
      %4067 = vmatprep.subr.mxu0 0.0
      %4068 = vmatpush1.msra.mxu0 0.0
      %4069 = vmatprep.subr.mxu0 0.0
      %4070 = vmatpush1.msra.mxu0 0.0
      %4071 = vmatprep.subr.mxu0 0.0
      %4072 = vmatpush1.msra.mxu0 0.0
      %4073 = vmatprep.subr.mxu0 0.0
      %4074 = vmatpush1.msra.mxu0 0.0
      %4075 = vmatprep.subr.mxu0 0.0
      %4076 = vmatpush1.msra.mxu0 0.0
      %4077 = vmatprep.subr.mxu0 0.0
      %4078 = vmatpush1.msra.mxu0 0.0
      %4079 = vmatprep.subr.mxu0 0.0
      %4080 = vmatpush1.msra.mxu0 0.0
      %4081 = vmatprep.subr.mxu0 0.0
      %4082 = vmatpush1.msra.mxu0 0.0
      %4083 = vmatprep.subr.mxu0 0.0
      %4084 = vmatpush1.msra.mxu0 0.0
      %4085 = vmatprep.subr.mxu0 0.0
      %4086 = vmatpush1.msra.mxu0 0.0
      %4087 = vmatprep.subr.mxu0 0.0
      %4088 = vmatpush1.msra.mxu0 0.0
      %4089 = vmatprep.subr.mxu0 0.0
      %4090 = vmatpush1.msra.mxu0 0.0
      %4091 = vmatprep.subr.mxu0 0.0
      %4092 = vmatpush1.msra.mxu0 0.0
      %4093 = vmatprep.subr.mxu0 0.0
      %4094 = vmatpush1.msra.mxu0 0.0
      %4095 = vmatprep.subr.mxu0 0.0
      %4096 = vmatpush1.msra.mxu0 0.0
      %4097 = vmatprep.subr.mxu0 0.0
      %4098 = vmatpush1.msra.mxu0 0.0
      %4099 = vmatprep.subr.mxu0 0.0
      %4100 = vmatpush1.msra.mxu0 0.0
      %4101 = vmatprep.subr.mxu0 0.0
      %4102 = vmatpush1.msra.mxu0 0.0
      %4103 = vmatprep.subr.mxu0 0.0
      %4104 = vmatpush1.msra.mxu0 0.0
      %4105 = vmatprep.subr.mxu0 0.0
      %4106 = vmatpush1.msra.mxu0 0.0
      %4107 = vmatprep.mubr.f32.mxu0 0.0
      %4108 = vmatmul.mubr.f32.gmra.mrb[0].mxu0 %v3996
      %v4109 = vpop.f32.mrb[0].mxu0
      %v4110 = vadd.f32 0.0, %v4109
      %v4111 = vpop.f32.mrb[0].mxu0
      %4112 = vmatprep.mubr.f32.mxu0 0.0
      %4113 = vmatmul.mubr.f32.gmra.mrb[0].mxu0 %v3999
      %v4114 = vpop.f32.mrb[0].mxu0
      %v4115 = vadd.f32 0.0, %v4114
      %v4116 = vpop.f32.mrb[0].mxu0
      %4117 = vmatprep.mubr.f32.mxu0 0.0
      %4118 = vmatmul.mubr.f32.gmra.mrb[0].mxu0 %v4002
      %v4119 = vpop.f32.mrb[0].mxu0
      %v4120 = vadd.f32 0.0, %v4119
      %v4121 = vpop.f32.mrb[0].mxu0
      %4122 = vmatprep.mubr.f32.mxu0 0.0
      %4123 = vmatmul.mubr.f32.gmra.mrb[0].mxu0 %v4005
      %v4124 = vpop.f32.mrb[0].mxu0
      %v4125 = vadd.f32 0.0, %v4124
      %v4126 = vpop.f32.mrb[0].mxu0
      %4127 = vmatprep.mubr.f32.mxu0 0.0
      %4128 = vmatmul.mubr.f32.gmra.mrb[0].mxu0 %v4008
      %v4129 = vpop.f32.mrb[0].mxu0
      %v4130 = vadd.f32 0.0, %v4129
      %v4131 = vpop.f32.mrb[0].mxu0
      %4132 = vmatprep.mubr.f32.mxu0 0.0
      %4133 = vmatmul.mubr.f32.gmra.mrb[0].mxu0 %v4011
      %v4134 = vpop.f32.mrb[0].mxu0
      %v4135 = vadd.f32 0.0, %v4134
      %v4136 = vpop.f32.mrb[0].mxu0
      %4137 = vmatprep.mubr.f32.mxu0 0.0
      %4138 = vmatmul.mubr.f32.gmra.mrb[0].mxu0 %v4014
      %v4139 = vpop.f32.mrb[0].mxu0
      %v4140 = vadd.f32 0.0, %v4139
      %v4141 = vpop.f32.mrb[0].mxu0
      %4142 = vmatprep.mubr.f32.mxu0 0.0
      %4143 = vmatmul.mubr.f32.gmra.mrb[0].mxu0 %v4017
      %v4144 = vpop.f32.mrb[0].mxu0
      %v4145 = vadd.f32 0.0, %v4144
      %v4146 = vpop.f32.mrb[0].mxu0
      %4147 = vmatprep.mubr.f32.mxu0 0.0
      %4148 = vmatmul.mubr.f32.gmra.mrb[0].mxu0 %v4020
      %v4149 = vpop.f32.mrb[0].mxu0
      %v4150 = vadd.f32 0.0, %v4149
      %v4151 = vpop.f32.mrb[0].mxu0
      %4152 = vmatprep.mubr.f32.mxu0 0.0
      %4153 = vmatmul.mubr.f32.gmra.mrb[0].mxu0 %v4023
      %v4154 = vpop.f32.mrb[0].mxu0
      %v4155 = vadd.f32 0.0, %v4154
      %v4156 = vpop.f32.mrb[0].mxu0
      %4157 = vmatprep.mubr.f32.mxu0 0.0
      %4158 = vmatmul.mubr.f32.gmra.mrb[0].mxu0 %v4026
      %v4159 = vpop.f32.mrb[0].mxu0
      %v4160 = vadd.f32 0.0, %v4159
      %v4161 = vpop.f32.mrb[0].mxu0
      %4162 = vmatprep.mubr.f32.mxu0 0.0
      %4163 = vmatmul.mubr.f32.gmra.mrb[0].mxu0 %v4029
      %v4164 = vpop.f32.mrb[0].mxu0
      %v4165 = vadd.f32 0.0, %v4164
      %v4166 = vpop.f32.mrb[0].mxu0
      %4167 = vmatprep.mubr.f32.mxu0 0.0
      %4168 = vmatmul.mubr.f32.gmra.mrb[0].mxu0 %v4032
      %v4169 = vpop.f32.mrb[0].mxu0
      %v4170 = vadd.f32 0.0, %v4169
      %v4171 = vpop.f32.mrb[0].mxu0
      %4172 = vmatprep.mubr.f32.mxu0 0.0
      %4173 = vmatmul.mubr.f32.gmra.mrb[0].mxu0 %v4035
      %v4174 = vpop.f32.mrb[0].mxu0
      %v4175 = vadd.f32 0.0, %v4174
      %v4176 = vpop.f32.mrb[0].mxu0
      %4177 = vmatprep.mubr.f32.mxu0 0.0
      %4178 = vmatmul.mubr.f32.gmra.mrb[0].mxu0 %v4038
      %v4179 = vpop.f32.mrb[0].mxu0
      %v4180 = vadd.f32 0.0, %v4179
      %v4181 = vpop.f32.mrb[0].mxu0
      %4182 = vmatprep.mubr.f32.mxu0 0.0
      %4183 = vmatmul.mubr.f32.gmra.mrb[0].mxu0 %v4041
      %v4184 = vpop.f32.mrb[0].mxu0
      %v4185 = vadd.f32 0.0, %v4184
      %v4186 = vpop.f32.mrb[0].mxu0
      %4187 = vdwg.mxu0
      %v4188 = vadd.f32 %v3797, %v4110
      %v4189 = vadd.f32 %v3798, %v4115
      %v4190 = vadd.f32 %v3799, %v4120
      %v4191 = vadd.f32 %v3800, %v4125
      %v4192 = vadd.f32 %v3801, %v4130
      %v4193 = vadd.f32 %v3802, %v4135
      %v4194 = vadd.f32 %v3803, %v4140
      %v4195 = vadd.f32 %v3804, %v4145
      %v4196 = vadd.f32 %v3805, %v4150
      %v4197 = vadd.f32 %v3806, %v4155
      %v4198 = vadd.f32 %v3807, %v4160
      %v4199 = vadd.f32 %v3808, %v4165
      %v4200 = vadd.f32 %v3809, %v4170
      %v4201 = vadd.f32 %v3810, %v4175
      %v4202 = vadd.f32 %v3811, %v4180
      %v4203 = vadd.f32 %v3812, %v4185
      %s4204 = scalar_lea.vmem %s3, 20
      %v4205 = vld [vmem:[%s4204] sm:$0xf]
      %v4206 = vld [vmem:[%s2152 + $0x1] sm:$0xff]
      %v4207 = vld [vmem:[%s2152 + $0x19] sm:$0xff]
      %v4208 = vld [vmem:[%s2152 + $0x31] sm:$0xff]
      %v4209 = vld [vmem:[%s2152 + $0x49] sm:$0xff]
      %v4210 = vld [vmem:[%s2152 + $0x61] sm:$0xff]
      %v4211 = vld [vmem:[%s2152 + $0x79] sm:$0xff]
      %v4212 = vld [vmem:[%s2152 + $0x91] sm:$0xff]
      %v4213 = vld [vmem:[%s2152 + $0xa9] sm:$0xff]
      %v4214 = vld [vmem:[%s2152 + $0xc1] sm:$0xff]
      %v4215 = vld [vmem:[%s2152 + $0xd9] sm:$0xff]
      %v4216 = vld [vmem:[%s2152 + $0xf1] sm:$0xff]
      %v4217 = vld [vmem:[%s2152 + $0x109] sm:$0xff]
      %v4218 = vld [vmem:[%s2152 + $0x121] sm:$0xff]
      %v4219 = vld [vmem:[%s2152 + $0x139] sm:$0xff]
      %v4220 = vld [vmem:[%s2152 + $0x151] sm:$0xff]
      %v4221 = vld [vmem:[%s2152 + $0x169] sm:$0xff]
      %v4223 = vsel %vm2284, %v4205, 0
      %4225 = vmatprep.subr.mxu0 0.0
      %4226 = vmatpush1.msra.mxu0 %v4223
      %4227 = vmatprep.subr.mxu0 0.0
      %4228 = vmatpush1.msra.mxu0 0.0
      %4229 = vmatprep.subr.mxu0 0.0
      %4230 = vmatpush1.msra.mxu0 0.0
      %4231 = vmatprep.subr.mxu0 0.0
      %4232 = vmatpush1.msra.mxu0 0.0
      %4233 = vmatprep.subr.mxu0 0.0
      %4234 = vmatpush1.msra.mxu0 0.0
      %4235 = vmatprep.subr.mxu0 0.0
      %4236 = vmatpush1.msra.mxu0 0.0
      %4237 = vmatprep.subr.mxu0 0.0
      %4238 = vmatpush1.msra.mxu0 0.0
      %4239 = vmatprep.subr.mxu0 0.0
      %4240 = vmatpush1.msra.mxu0 0.0
      %4241 = vmatprep.subr.mxu0 0.0
      %4242 = vmatpush1.msra.mxu0 0.0
      %4243 = vmatprep.subr.mxu0 0.0
      %4244 = vmatpush1.msra.mxu0 0.0
      %4245 = vmatprep.subr.mxu0 0.0
      %4246 = vmatpush1.msra.mxu0 0.0
      %4247 = vmatprep.subr.mxu0 0.0
      %4248 = vmatpush1.msra.mxu0 0.0
      %4249 = vmatprep.subr.mxu0 0.0
      %4250 = vmatpush1.msra.mxu0 0.0
      %4251 = vmatprep.subr.mxu0 0.0
      %4252 = vmatpush1.msra.mxu0 0.0
      %4253 = vmatprep.subr.mxu0 0.0
      %4254 = vmatpush1.msra.mxu0 0.0
      %4255 = vmatprep.subr.mxu0 0.0
      %4256 = vmatpush1.msra.mxu0 0.0
      %4257 = vmatprep.subr.mxu0 0.0
      %4258 = vmatpush1.msra.mxu0 0.0
      %4259 = vmatprep.subr.mxu0 0.0
      %4260 = vmatpush1.msra.mxu0 0.0
      %4261 = vmatprep.subr.mxu0 0.0
      %4262 = vmatpush1.msra.mxu0 0.0
      %4263 = vmatprep.subr.mxu0 0.0
      %4264 = vmatpush1.msra.mxu0 0.0
      %4265 = vmatprep.subr.mxu0 0.0
      %4266 = vmatpush1.msra.mxu0 0.0
      %4267 = vmatprep.subr.mxu0 0.0
      %4268 = vmatpush1.msra.mxu0 0.0
      %4269 = vmatprep.subr.mxu0 0.0
      %4270 = vmatpush1.msra.mxu0 0.0
      %4271 = vmatprep.subr.mxu0 0.0
      %4272 = vmatpush1.msra.mxu0 0.0
      %4273 = vmatprep.subr.mxu0 0.0
      %4274 = vmatpush1.msra.mxu0 0.0
      %4275 = vmatprep.subr.mxu0 0.0
      %4276 = vmatpush1.msra.mxu0 0.0
      %4277 = vmatprep.subr.mxu0 0.0
      %4278 = vmatpush1.msra.mxu0 0.0
      %4279 = vmatprep.subr.mxu0 0.0
      %4280 = vmatpush1.msra.mxu0 0.0
      %4281 = vmatprep.subr.mxu0 0.0
      %4282 = vmatpush1.msra.mxu0 0.0
      %4283 = vmatprep.subr.mxu0 0.0
      %4284 = vmatpush1.msra.mxu0 0.0
      %4285 = vmatprep.subr.mxu0 0.0
      %4286 = vmatpush1.msra.mxu0 0.0
      %4287 = vmatprep.subr.mxu0 0.0
      %4288 = vmatpush1.msra.mxu0 0.0
      %4289 = vmatprep.mubr.f32.mxu0 0.0
      %4290 = vmatmul.mubr.f32.gmra.mrb[0].mxu0 %v3996
      %v4291 = vpop.f32.mrb[0].mxu0
      %v4292 = vadd.f32 0.0, %v4291
      %v4293 = vpop.f32.mrb[0].mxu0
      %4294 = vmatprep.mubr.f32.mxu0 0.0
      %4295 = vmatmul.mubr.f32.gmra.mrb[0].mxu0 %v3999
      %v4296 = vpop.f32.mrb[0].mxu0
      %v4297 = vadd.f32 0.0, %v4296
      %v4298 = vpop.f32.mrb[0].mxu0
      %4299 = vmatprep.mubr.f32.mxu0 0.0
      %4300 = vmatmul.mubr.f32.gmra.mrb[0].mxu0 %v4002
      %v4301 = vpop.f32.mrb[0].mxu0
      %v4302 = vadd.f32 0.0, %v4301
      %v4303 = vpop.f32.mrb[0].mxu0
      %4304 = vmatprep.mubr.f32.mxu0 0.0
      %4305 = vmatmul.mubr.f32.gmra.mrb[0].mxu0 %v4005
      %v4306 = vpop.f32.mrb[0].mxu0
      %v4307 = vadd.f32 0.0, %v4306
      %v4308 = vpop.f32.mrb[0].mxu0
      %4309 = vmatprep.mubr.f32.mxu0 0.0
      %4310 = vmatmul.mubr.f32.gmra.mrb[0].mxu0 %v4008
      %v4311 = vpop.f32.mrb[0].mxu0
      %v4312 = vadd.f32 0.0, %v4311
      %v4313 = vpop.f32.mrb[0].mxu0
      %4314 = vmatprep.mubr.f32.mxu0 0.0
      %4315 = vmatmul.mubr.f32.gmra.mrb[0].mxu0 %v4011
      %v4316 = vpop.f32.mrb[0].mxu0
      %v4317 = vadd.f32 0.0, %v4316
      %v4318 = vpop.f32.mrb[0].mxu0
      %4319 = vmatprep.mubr.f32.mxu0 0.0
      %4320 = vmatmul.mubr.f32.gmra.mrb[0].mxu0 %v4014
      %v4321 = vpop.f32.mrb[0].mxu0
      %v4322 = vadd.f32 0.0, %v4321
      %v4323 = vpop.f32.mrb[0].mxu0
      %4324 = vmatprep.mubr.f32.mxu0 0.0
      %4325 = vmatmul.mubr.f32.gmra.mrb[0].mxu0 %v4017
      %v4326 = vpop.f32.mrb[0].mxu0
      %v4327 = vadd.f32 0.0, %v4326
      %v4328 = vpop.f32.mrb[0].mxu0
      %4329 = vmatprep.mubr.f32.mxu0 0.0
      %4330 = vmatmul.mubr.f32.gmra.mrb[0].mxu0 %v4020
      %v4331 = vpop.f32.mrb[0].mxu0
      %v4332 = vadd.f32 0.0, %v4331
      %v4333 = vpop.f32.mrb[0].mxu0
      %4334 = vmatprep.mubr.f32.mxu0 0.0
      %4335 = vmatmul.mubr.f32.gmra.mrb[0].mxu0 %v4023
      %v4336 = vpop.f32.mrb[0].mxu0
      %v4337 = vadd.f32 0.0, %v4336
      %v4338 = vpop.f32.mrb[0].mxu0
      %4339 = vmatprep.mubr.f32.mxu0 0.0
      %4340 = vmatmul.mubr.f32.gmra.mrb[0].mxu0 %v4026
      %v4341 = vpop.f32.mrb[0].mxu0
      %v4342 = vadd.f32 0.0, %v4341
      %v4343 = vpop.f32.mrb[0].mxu0
      %4344 = vmatprep.mubr.f32.mxu0 0.0
      %4345 = vmatmul.mubr.f32.gmra.mrb[0].mxu0 %v4029
      %v4346 = vpop.f32.mrb[0].mxu0
      %v4347 = vadd.f32 0.0, %v4346
      %v4348 = vpop.f32.mrb[0].mxu0
      %4349 = vmatprep.mubr.f32.mxu0 0.0
      %4350 = vmatmul.mubr.f32.gmra.mrb[0].mxu0 %v4032
      %v4351 = vpop.f32.mrb[0].mxu0
      %v4352 = vadd.f32 0.0, %v4351
      %v4353 = vpop.f32.mrb[0].mxu0
      %4354 = vmatprep.mubr.f32.mxu0 0.0
      %4355 = vmatmul.mubr.f32.gmra.mrb[0].mxu0 %v4035
      %v4356 = vpop.f32.mrb[0].mxu0
      %v4357 = vadd.f32 0.0, %v4356
      %v4358 = vpop.f32.mrb[0].mxu0
      %4359 = vmatprep.mubr.f32.mxu0 0.0
      %4360 = vmatmul.mubr.f32.gmra.mrb[0].mxu0 %v4038
      %v4361 = vpop.f32.mrb[0].mxu0
      %v4362 = vadd.f32 0.0, %v4361
      %v4363 = vpop.f32.mrb[0].mxu0
      %4364 = vmatprep.mubr.f32.mxu0 0.0
      %4365 = vmatmul.mubr.f32.gmra.mrb[0].mxu0 %v4041
      %v4366 = vpop.f32.mrb[0].mxu0
      %v4367 = vadd.f32 0.0, %v4366
      %v4368 = vpop.f32.mrb[0].mxu0
      %4369 = vdwg.mxu0
      %v4370 = vadd.f32 %v3979, %v4292
      %v4371 = vadd.f32 %v3980, %v4297
      %v4372 = vadd.f32 %v3981, %v4302
      %v4373 = vadd.f32 %v3982, %v4307
      %v4374 = vadd.f32 %v3983, %v4312
      %v4375 = vadd.f32 %v3984, %v4317
      %v4376 = vadd.f32 %v3985, %v4322
      %v4377 = vadd.f32 %v3986, %v4327
      %v4378 = vadd.f32 %v3987, %v4332
      %v4379 = vadd.f32 %v3988, %v4337
      %v4380 = vadd.f32 %v3989, %v4342
      %v4381 = vadd.f32 %v3990, %v4347
      %v4382 = vadd.f32 %v3991, %v4352
      %v4383 = vadd.f32 %v3992, %v4357
      %v4384 = vadd.f32 %v3993, %v4362
      %v4385 = vadd.f32 %v3994, %v4367
      %v4387 = vsel %vm2097, %v4206, 0
      %v4390 = vsel %vm2097, %v4207, 0
      %v4393 = vsel %vm2097, %v4208, 0
      %v4396 = vsel %vm2097, %v4209, 0
      %v4399 = vsel %vm2097, %v4210, 0
      %v4402 = vsel %vm2097, %v4211, 0
      %v4405 = vsel %vm2097, %v4212, 0
      %v4408 = vsel %vm2097, %v4213, 0
      %v4411 = vsel %vm2097, %v4214, 0
      %v4414 = vsel %vm2097, %v4215, 0
      %v4417 = vsel %vm2097, %v4216, 0
      %v4420 = vsel %vm2097, %v4217, 0
      %v4423 = vsel %vm2097, %v4218, 0
      %v4426 = vsel %vm2097, %v4219, 0
      %v4429 = vsel %vm2097, %v4220, 0
      %v4432 = vsel %vm2097, %v4221, 0
      %4434 = vmatprep.subr.mxu0 0.0
      %4435 = vmatpush1.msra.mxu0 %v4223
      %4436 = vmatprep.subr.mxu0 0.0
      %4437 = vmatpush1.msra.mxu0 0.0
      %4438 = vmatprep.subr.mxu0 0.0
      %4439 = vmatpush1.msra.mxu0 0.0
      %4440 = vmatprep.subr.mxu0 0.0
      %4441 = vmatpush1.msra.mxu0 0.0
      %4442 = vmatprep.subr.mxu0 0.0
      %4443 = vmatpush1.msra.mxu0 0.0
      %4444 = vmatprep.subr.mxu0 0.0
      %4445 = vmatpush1.msra.mxu0 0.0
      %4446 = vmatprep.subr.mxu0 0.0
      %4447 = vmatpush1.msra.mxu0 0.0
      %4448 = vmatprep.subr.mxu0 0.0
      %4449 = vmatpush1.msra.mxu0 0.0
      %4450 = vmatprep.subr.mxu0 0.0
      %4451 = vmatpush1.msra.mxu0 0.0
      %4452 = vmatprep.subr.mxu0 0.0
      %4453 = vmatpush1.msra.mxu0 0.0
      %4454 = vmatprep.subr.mxu0 0.0
      %4455 = vmatpush1.msra.mxu0 0.0
      %4456 = vmatprep.subr.mxu0 0.0
      %4457 = vmatpush1.msra.mxu0 0.0
      %4458 = vmatprep.subr.mxu0 0.0
      %4459 = vmatpush1.msra.mxu0 0.0
      %4460 = vmatprep.subr.mxu0 0.0
      %4461 = vmatpush1.msra.mxu0 0.0
      %4462 = vmatprep.subr.mxu0 0.0
      %4463 = vmatpush1.msra.mxu0 0.0
      %4464 = vmatprep.subr.mxu0 0.0
      %4465 = vmatpush1.msra.mxu0 0.0
      %4466 = vmatprep.subr.mxu0 0.0
      %4467 = vmatpush1.msra.mxu0 0.0
      %4468 = vmatprep.subr.mxu0 0.0
      %4469 = vmatpush1.msra.mxu0 0.0
      %4470 = vmatprep.subr.mxu0 0.0
      %4471 = vmatpush1.msra.mxu0 0.0
      %4472 = vmatprep.subr.mxu0 0.0
      %4473 = vmatpush1.msra.mxu0 0.0
      %4474 = vmatprep.subr.mxu0 0.0
      %4475 = vmatpush1.msra.mxu0 0.0
      %4476 = vmatprep.subr.mxu0 0.0
      %4477 = vmatpush1.msra.mxu0 0.0
      %4478 = vmatprep.subr.mxu0 0.0
      %4479 = vmatpush1.msra.mxu0 0.0
      %4480 = vmatprep.subr.mxu0 0.0
      %4481 = vmatpush1.msra.mxu0 0.0
      %4482 = vmatprep.subr.mxu0 0.0
      %4483 = vmatpush1.msra.mxu0 0.0
      %4484 = vmatprep.subr.mxu0 0.0
      %4485 = vmatpush1.msra.mxu0 0.0
      %4486 = vmatprep.subr.mxu0 0.0
      %4487 = vmatpush1.msra.mxu0 0.0
      %4488 = vmatprep.subr.mxu0 0.0
      %4489 = vmatpush1.msra.mxu0 0.0
      %4490 = vmatprep.subr.mxu0 0.0
      %4491 = vmatpush1.msra.mxu0 0.0
      %4492 = vmatprep.subr.mxu0 0.0
      %4493 = vmatpush1.msra.mxu0 0.0
      %4494 = vmatprep.subr.mxu0 0.0
      %4495 = vmatpush1.msra.mxu0 0.0
      %4496 = vmatprep.subr.mxu0 0.0
      %4497 = vmatpush1.msra.mxu0 0.0
      %4498 = vmatprep.mubr.f32.mxu0 0.0
      %4499 = vmatmul.mubr.f32.gmra.mrb[0].mxu0 %v4387
      %v4500 = vpop.f32.mrb[0].mxu0
      %v4501 = vadd.f32 0.0, %v4500
      %v4502 = vpop.f32.mrb[0].mxu0
      %4503 = vmatprep.mubr.f32.mxu0 0.0
      %4504 = vmatmul.mubr.f32.gmra.mrb[0].mxu0 %v4390
      %v4505 = vpop.f32.mrb[0].mxu0
      %v4506 = vadd.f32 0.0, %v4505
      %v4507 = vpop.f32.mrb[0].mxu0
      %4508 = vmatprep.mubr.f32.mxu0 0.0
      %4509 = vmatmul.mubr.f32.gmra.mrb[0].mxu0 %v4393
      %v4510 = vpop.f32.mrb[0].mxu0
      %v4511 = vadd.f32 0.0, %v4510
      %v4512 = vpop.f32.mrb[0].mxu0
      %4513 = vmatprep.mubr.f32.mxu0 0.0
      %4514 = vmatmul.mubr.f32.gmra.mrb[0].mxu0 %v4396
      %v4515 = vpop.f32.mrb[0].mxu0
      %v4516 = vadd.f32 0.0, %v4515
      %v4517 = vpop.f32.mrb[0].mxu0
      %4518 = vmatprep.mubr.f32.mxu0 0.0
      %4519 = vmatmul.mubr.f32.gmra.mrb[0].mxu0 %v4399
      %v4520 = vpop.f32.mrb[0].mxu0
      %v4521 = vadd.f32 0.0, %v4520
      %v4522 = vpop.f32.mrb[0].mxu0
      %4523 = vmatprep.mubr.f32.mxu0 0.0
      %4524 = vmatmul.mubr.f32.gmra.mrb[0].mxu0 %v4402
      %v4525 = vpop.f32.mrb[0].mxu0
      %v4526 = vadd.f32 0.0, %v4525
      %v4527 = vpop.f32.mrb[0].mxu0
      %4528 = vmatprep.mubr.f32.mxu0 0.0
      %4529 = vmatmul.mubr.f32.gmra.mrb[0].mxu0 %v4405
      %v4530 = vpop.f32.mrb[0].mxu0
      %v4531 = vadd.f32 0.0, %v4530
      %v4532 = vpop.f32.mrb[0].mxu0
      %4533 = vmatprep.mubr.f32.mxu0 0.0
      %4534 = vmatmul.mubr.f32.gmra.mrb[0].mxu0 %v4408
      %v4535 = vpop.f32.mrb[0].mxu0
      %v4536 = vadd.f32 0.0, %v4535
      %v4537 = vpop.f32.mrb[0].mxu0
      %4538 = vmatprep.mubr.f32.mxu0 0.0
      %4539 = vmatmul.mubr.f32.gmra.mrb[0].mxu0 %v4411
      %v4540 = vpop.f32.mrb[0].mxu0
      %v4541 = vadd.f32 0.0, %v4540
      %v4542 = vpop.f32.mrb[0].mxu0
      %4543 = vmatprep.mubr.f32.mxu0 0.0
      %4544 = vmatmul.mubr.f32.gmra.mrb[0].mxu0 %v4414
      %v4545 = vpop.f32.mrb[0].mxu0
      %v4546 = vadd.f32 0.0, %v4545
      %v4547 = vpop.f32.mrb[0].mxu0
      %4548 = vmatprep.mubr.f32.mxu0 0.0
      %4549 = vmatmul.mubr.f32.gmra.mrb[0].mxu0 %v4417
      %v4550 = vpop.f32.mrb[0].mxu0
      %v4551 = vadd.f32 0.0, %v4550
      %v4552 = vpop.f32.mrb[0].mxu0
      %4553 = vmatprep.mubr.f32.mxu0 0.0
      %4554 = vmatmul.mubr.f32.gmra.mrb[0].mxu0 %v4420
      %v4555 = vpop.f32.mrb[0].mxu0
      %v4556 = vadd.f32 0.0, %v4555
      %v4557 = vpop.f32.mrb[0].mxu0
      %4558 = vmatprep.mubr.f32.mxu0 0.0
      %4559 = vmatmul.mubr.f32.gmra.mrb[0].mxu0 %v4423
      %v4560 = vpop.f32.mrb[0].mxu0
      %v4561 = vadd.f32 0.0, %v4560
      %v4562 = vpop.f32.mrb[0].mxu0
      %4563 = vmatprep.mubr.f32.mxu0 0.0
      %4564 = vmatmul.mubr.f32.gmra.mrb[0].mxu0 %v4426
      %v4565 = vpop.f32.mrb[0].mxu0
      %v4566 = vadd.f32 0.0, %v4565
      %v4567 = vpop.f32.mrb[0].mxu0
      %4568 = vmatprep.mubr.f32.mxu0 0.0
      %4569 = vmatmul.mubr.f32.gmra.mrb[0].mxu0 %v4429
      %v4570 = vpop.f32.mrb[0].mxu0
      %v4571 = vadd.f32 0.0, %v4570
      %v4572 = vpop.f32.mrb[0].mxu0
      %4573 = vmatprep.mubr.f32.mxu0 0.0
      %4574 = vmatmul.mubr.f32.gmra.mrb[0].mxu0 %v4432
      %v4575 = vpop.f32.mrb[0].mxu0
      %v4576 = vadd.f32 0.0, %v4575
      %v4577 = vpop.f32.mrb[0].mxu0
      %4578 = vdwg.mxu0
      %v4579 = vadd.f32 %v4188, %v4501
      %v4580 = vadd.f32 %v4189, %v4506
      %v4581 = vadd.f32 %v4190, %v4511
      %v4582 = vadd.f32 %v4191, %v4516
      %v4583 = vadd.f32 %v4192, %v4521
      %v4584 = vadd.f32 %v4193, %v4526
      %v4585 = vadd.f32 %v4194, %v4531
      %v4586 = vadd.f32 %v4195, %v4536
      %v4587 = vadd.f32 %v4196, %v4541
      %v4588 = vadd.f32 %v4197, %v4546
      %v4589 = vadd.f32 %v4198, %v4551
      %v4590 = vadd.f32 %v4199, %v4556
      %v4591 = vadd.f32 %v4200, %v4561
      %v4592 = vadd.f32 %v4201, %v4566
      %v4593 = vadd.f32 %v4202, %v4571
      %v4594 = vadd.f32 %v4203, %v4576
      %s4595 = scalar_lea.vmem %s3, 24
      %v4596 = vld [vmem:[%s4595] sm:$0xf]
      %s4597 = scalar_lea.vmem [#allocation2], 48
      %v4598 = vld [vmem:[%s4597 + $0xf] sm:$0xff]
      %v4599 = vld [vmem:[%s4597 + $0x27] sm:$0xff]
      %v4600 = vld [vmem:[%s4597 + $0x3f] sm:$0xff]
      %v4601 = vld [vmem:[%s4597 + $0x57] sm:$0xff]
      %v4602 = vld [vmem:[%s4597 + $0x6f] sm:$0xff]
      %v4603 = vld [vmem:[%s4597 + $0x87] sm:$0xff]
      %v4604 = vld [vmem:[%s4597 + $0x9f] sm:$0xff]
      %v4605 = vld [vmem:[%s4597 + $0xb7] sm:$0xff]
      %v4606 = vld [vmem:[%s4597 + $0xcf] sm:$0xff]
      %v4607 = vld [vmem:[%s4597 + $0xe7] sm:$0xff]
      %v4608 = vld [vmem:[%s4597 + $0xff] sm:$0xff]
      %v4609 = vld [vmem:[%s4597 + $0x117] sm:$0xff]
      %v4610 = vld [vmem:[%s4597 + $0x12f] sm:$0xff]
      %v4611 = vld [vmem:[%s4597 + $0x147] sm:$0xff]
      %v4612 = vld [vmem:[%s4597 + $0x15f] sm:$0xff]
      %v4613 = vld [vmem:[%s4597 + $0x177] sm:$0xff]
      %v4614 = vld [vmem:[%s4597] sm:$0xff]
      %v4615 = vld [vmem:[%s4597 + $0x18] sm:$0xff]
      %v4616 = vld [vmem:[%s4597 + $0x30] sm:$0xff]
      %v4617 = vld [vmem:[%s4597 + $0x48] sm:$0xff]
      %v4618 = vld [vmem:[%s4597 + $0x60] sm:$0xff]
      %v4619 = vld [vmem:[%s4597 + $0x78] sm:$0xff]
      %v4620 = vld [vmem:[%s4597 + $0x90] sm:$0xff]
      %v4621 = vld [vmem:[%s4597 + $0xa8] sm:$0xff]
      %v4622 = vld [vmem:[%s4597 + $0xc0] sm:$0xff]
      %v4623 = vld [vmem:[%s4597 + $0xd8] sm:$0xff]
      %v4624 = vld [vmem:[%s4597 + $0xf0] sm:$0xff]
      %v4625 = vld [vmem:[%s4597 + $0x108] sm:$0xff]
      %v4626 = vld [vmem:[%s4597 + $0x120] sm:$0xff]
      %v4627 = vld [vmem:[%s4597 + $0x138] sm:$0xff]
      %v4628 = vld [vmem:[%s4597 + $0x150] sm:$0xff]
      %v4629 = vld [vmem:[%s4597 + $0x168] sm:$0xff]
      %v4631 = vsel %vm2097, %v4598, 0
      %v4634 = vsel %vm2097, %v4599, 0
      %v4637 = vsel %vm2097, %v4600, 0
      %v4640 = vsel %vm2097, %v4601, 0
      %v4643 = vsel %vm2097, %v4602, 0
      %v4646 = vsel %vm2097, %v4603, 0
      %v4649 = vsel %vm2097, %v4604, 0
      %v4652 = vsel %vm2097, %v4605, 0
      %v4655 = vsel %vm2097, %v4606, 0
      %v4658 = vsel %vm2097, %v4607, 0
      %v4661 = vsel %vm2097, %v4608, 0
      %v4664 = vsel %vm2097, %v4609, 0
      %v4667 = vsel %vm2097, %v4610, 0
      %v4670 = vsel %vm2097, %v4611, 0
      %v4673 = vsel %vm2097, %v4612, 0
      %v4676 = vsel %vm2097, %v4613, 0
      %v4679 = vsel %vm2284, %v4596, 0
      %4681 = vmatprep.subr.mxu0 0.0
      %4682 = vmatpush1.msra.mxu0 %v4679
      %4683 = vmatprep.subr.mxu0 0.0
      %4684 = vmatpush1.msra.mxu0 0.0
      %4685 = vmatprep.subr.mxu0 0.0
      %4686 = vmatpush1.msra.mxu0 0.0
      %4687 = vmatprep.subr.mxu0 0.0
      %4688 = vmatpush1.msra.mxu0 0.0
      %4689 = vmatprep.subr.mxu0 0.0
      %4690 = vmatpush1.msra.mxu0 0.0
      %4691 = vmatprep.subr.mxu0 0.0
      %4692 = vmatpush1.msra.mxu0 0.0
      %4693 = vmatprep.subr.mxu0 0.0
      %4694 = vmatpush1.msra.mxu0 0.0
      %4695 = vmatprep.subr.mxu0 0.0
      %4696 = vmatpush1.msra.mxu0 0.0
      %4697 = vmatprep.subr.mxu0 0.0
      %4698 = vmatpush1.msra.mxu0 0.0
      %4699 = vmatprep.subr.mxu0 0.0
      %4700 = vmatpush1.msra.mxu0 0.0
      %4701 = vmatprep.subr.mxu0 0.0
      %4702 = vmatpush1.msra.mxu0 0.0
      %4703 = vmatprep.subr.mxu0 0.0
      %4704 = vmatpush1.msra.mxu0 0.0
      %4705 = vmatprep.subr.mxu0 0.0
      %4706 = vmatpush1.msra.mxu0 0.0
      %4707 = vmatprep.subr.mxu0 0.0
      %4708 = vmatpush1.msra.mxu0 0.0
      %4709 = vmatprep.subr.mxu0 0.0
      %4710 = vmatpush1.msra.mxu0 0.0
      %4711 = vmatprep.subr.mxu0 0.0
      %4712 = vmatpush1.msra.mxu0 0.0
      %4713 = vmatprep.subr.mxu0 0.0
      %4714 = vmatpush1.msra.mxu0 0.0
      %4715 = vmatprep.subr.mxu0 0.0
      %4716 = vmatpush1.msra.mxu0 0.0
      %4717 = vmatprep.subr.mxu0 0.0
      %4718 = vmatpush1.msra.mxu0 0.0
      %4719 = vmatprep.subr.mxu0 0.0
      %4720 = vmatpush1.msra.mxu0 0.0
      %4721 = vmatprep.subr.mxu0 0.0
      %4722 = vmatpush1.msra.mxu0 0.0
      %4723 = vmatprep.subr.mxu0 0.0
      %4724 = vmatpush1.msra.mxu0 0.0
      %4725 = vmatprep.subr.mxu0 0.0
      %4726 = vmatpush1.msra.mxu0 0.0
      %4727 = vmatprep.subr.mxu0 0.0
      %4728 = vmatpush1.msra.mxu0 0.0
      %4729 = vmatprep.subr.mxu0 0.0
      %4730 = vmatpush1.msra.mxu0 0.0
      %4731 = vmatprep.subr.mxu0 0.0
      %4732 = vmatpush1.msra.mxu0 0.0
      %4733 = vmatprep.subr.mxu0 0.0
      %4734 = vmatpush1.msra.mxu0 0.0
      %4735 = vmatprep.subr.mxu0 0.0
      %4736 = vmatpush1.msra.mxu0 0.0
      %4737 = vmatprep.subr.mxu0 0.0
      %4738 = vmatpush1.msra.mxu0 0.0
      %4739 = vmatprep.subr.mxu0 0.0
      %4740 = vmatpush1.msra.mxu0 0.0
      %4741 = vmatprep.subr.mxu0 0.0
      %4742 = vmatpush1.msra.mxu0 0.0
      %4743 = vmatprep.subr.mxu0 0.0
      %4744 = vmatpush1.msra.mxu0 0.0
      %4745 = vmatprep.mubr.f32.mxu0 0.0
      %4746 = vmatmul.mubr.f32.gmra.mrb[0].mxu0 %v4631
      %v4747 = vpop.f32.mrb[0].mxu0
      %v4748 = vadd.f32 0.0, %v4747
      %v4749 = vpop.f32.mrb[0].mxu0
      %4750 = vmatprep.mubr.f32.mxu0 0.0
      %4751 = vmatmul.mubr.f32.gmra.mrb[0].mxu0 %v4634
      %v4752 = vpop.f32.mrb[0].mxu0
      %v4753 = vadd.f32 0.0, %v4752
      %v4754 = vpop.f32.mrb[0].mxu0
      %4755 = vmatprep.mubr.f32.mxu0 0.0
      %4756 = vmatmul.mubr.f32.gmra.mrb[0].mxu0 %v4637
      %v4757 = vpop.f32.mrb[0].mxu0
      %v4758 = vadd.f32 0.0, %v4757
      %v4759 = vpop.f32.mrb[0].mxu0
      %4760 = vmatprep.mubr.f32.mxu0 0.0
      %4761 = vmatmul.mubr.f32.gmra.mrb[0].mxu0 %v4640
      %v4762 = vpop.f32.mrb[0].mxu0
      %v4763 = vadd.f32 0.0, %v4762
      %v4764 = vpop.f32.mrb[0].mxu0
      %4765 = vmatprep.mubr.f32.mxu0 0.0
      %4766 = vmatmul.mubr.f32.gmra.mrb[0].mxu0 %v4643
      %v4767 = vpop.f32.mrb[0].mxu0
      %v4768 = vadd.f32 0.0, %v4767
      %v4769 = vpop.f32.mrb[0].mxu0
      %4770 = vmatprep.mubr.f32.mxu0 0.0
      %4771 = vmatmul.mubr.f32.gmra.mrb[0].mxu0 %v4646
      %v4772 = vpop.f32.mrb[0].mxu0
      %v4773 = vadd.f32 0.0, %v4772
      %v4774 = vpop.f32.mrb[0].mxu0
      %4775 = vmatprep.mubr.f32.mxu0 0.0
      %4776 = vmatmul.mubr.f32.gmra.mrb[0].mxu0 %v4649
      %v4777 = vpop.f32.mrb[0].mxu0
      %v4778 = vadd.f32 0.0, %v4777
      %v4779 = vpop.f32.mrb[0].mxu0
      %4780 = vmatprep.mubr.f32.mxu0 0.0
      %4781 = vmatmul.mubr.f32.gmra.mrb[0].mxu0 %v4652
      %v4782 = vpop.f32.mrb[0].mxu0
      %v4783 = vadd.f32 0.0, %v4782
      %v4784 = vpop.f32.mrb[0].mxu0
      %4785 = vmatprep.mubr.f32.mxu0 0.0
      %4786 = vmatmul.mubr.f32.gmra.mrb[0].mxu0 %v4655
      %v4787 = vpop.f32.mrb[0].mxu0
      %v4788 = vadd.f32 0.0, %v4787
      %v4789 = vpop.f32.mrb[0].mxu0
      %4790 = vmatprep.mubr.f32.mxu0 0.0
      %4791 = vmatmul.mubr.f32.gmra.mrb[0].mxu0 %v4658
      %v4792 = vpop.f32.mrb[0].mxu0
      %v4793 = vadd.f32 0.0, %v4792
      %v4794 = vpop.f32.mrb[0].mxu0
      %4795 = vmatprep.mubr.f32.mxu0 0.0
      %4796 = vmatmul.mubr.f32.gmra.mrb[0].mxu0 %v4661
      %v4797 = vpop.f32.mrb[0].mxu0
      %v4798 = vadd.f32 0.0, %v4797
      %v4799 = vpop.f32.mrb[0].mxu0
      %4800 = vmatprep.mubr.f32.mxu0 0.0
      %4801 = vmatmul.mubr.f32.gmra.mrb[0].mxu0 %v4664
      %v4802 = vpop.f32.mrb[0].mxu0
      %v4803 = vadd.f32 0.0, %v4802
      %v4804 = vpop.f32.mrb[0].mxu0
      %4805 = vmatprep.mubr.f32.mxu0 0.0
      %4806 = vmatmul.mubr.f32.gmra.mrb[0].mxu0 %v4667
      %v4807 = vpop.f32.mrb[0].mxu0
      %v4808 = vadd.f32 0.0, %v4807
      %v4809 = vpop.f32.mrb[0].mxu0
      %4810 = vmatprep.mubr.f32.mxu0 0.0
      %4811 = vmatmul.mubr.f32.gmra.mrb[0].mxu0 %v4670
      %v4812 = vpop.f32.mrb[0].mxu0
      %v4813 = vadd.f32 0.0, %v4812
      %v4814 = vpop.f32.mrb[0].mxu0
      %4815 = vmatprep.mubr.f32.mxu0 0.0
      %4816 = vmatmul.mubr.f32.gmra.mrb[0].mxu0 %v4673
      %v4817 = vpop.f32.mrb[0].mxu0
      %v4818 = vadd.f32 0.0, %v4817
      %v4819 = vpop.f32.mrb[0].mxu0
      %4820 = vmatprep.mubr.f32.mxu0 0.0
      %4821 = vmatmul.mubr.f32.gmra.mrb[0].mxu0 %v4676
      %v4822 = vpop.f32.mrb[0].mxu0
      %v4823 = vadd.f32 0.0, %v4822
      %v4824 = vpop.f32.mrb[0].mxu0
      %4825 = vdwg.mxu0
      %v4826 = vadd.f32 %v4370, %v4748
      %v4827 = vadd.f32 %v4371, %v4753
      %v4828 = vadd.f32 %v4372, %v4758
      %v4829 = vadd.f32 %v4373, %v4763
      %v4830 = vadd.f32 %v4374, %v4768
      %v4831 = vadd.f32 %v4375, %v4773
      %v4832 = vadd.f32 %v4376, %v4778
      %v4833 = vadd.f32 %v4377, %v4783
      %v4834 = vadd.f32 %v4378, %v4788
      %v4835 = vadd.f32 %v4379, %v4793
      %v4836 = vadd.f32 %v4380, %v4798
      %v4837 = vadd.f32 %v4381, %v4803
      %v4838 = vadd.f32 %v4382, %v4808
      %v4839 = vadd.f32 %v4383, %v4813
      %v4840 = vadd.f32 %v4384, %v4818
      %v4841 = vadd.f32 %v4385, %v4823
      %v4843 = vsel %vm2097, %v4614, 0
      %v4846 = vsel %vm2097, %v4615, 0
      %v4849 = vsel %vm2097, %v4616, 0
      %v4852 = vsel %vm2097, %v4617, 0
      %v4855 = vsel %vm2097, %v4618, 0
      %v4858 = vsel %vm2097, %v4619, 0
      %v4861 = vsel %vm2097, %v4620, 0
      %v4864 = vsel %vm2097, %v4621, 0
      %v4867 = vsel %vm2097, %v4622, 0
      %v4870 = vsel %vm2097, %v4623, 0
      %v4873 = vsel %vm2097, %v4624, 0
      %v4876 = vsel %vm2097, %v4625, 0
      %v4879 = vsel %vm2097, %v4626, 0
      %v4882 = vsel %vm2097, %v4627, 0
      %v4885 = vsel %vm2097, %v4628, 0
      %v4888 = vsel %vm2097, %v4629, 0
      %4890 = vmatprep.subr.mxu0 0.0
      %4891 = vmatpush1.msra.mxu0 %v4679
      %4892 = vmatprep.subr.mxu0 0.0
      %4893 = vmatpush1.msra.mxu0 0.0
      %4894 = vmatprep.subr.mxu0 0.0
      %4895 = vmatpush1.msra.mxu0 0.0
      %4896 = vmatprep.subr.mxu0 0.0
      %4897 = vmatpush1.msra.mxu0 0.0
      %4898 = vmatprep.subr.mxu0 0.0
      %4899 = vmatpush1.msra.mxu0 0.0
      %4900 = vmatprep.subr.mxu0 0.0
      %4901 = vmatpush1.msra.mxu0 0.0
      %4902 = vmatprep.subr.mxu0 0.0
      %4903 = vmatpush1.msra.mxu0 0.0
      %4904 = vmatprep.subr.mxu0 0.0
      %4905 = vmatpush1.msra.mxu0 0.0
      %4906 = vmatprep.subr.mxu0 0.0
      %4907 = vmatpush1.msra.mxu0 0.0
      %4908 = vmatprep.subr.mxu0 0.0
      %4909 = vmatpush1.msra.mxu0 0.0
      %4910 = vmatprep.subr.mxu0 0.0
      %4911 = vmatpush1.msra.mxu0 0.0
      %4912 = vmatprep.subr.mxu0 0.0
      %4913 = vmatpush1.msra.mxu0 0.0
      %4914 = vmatprep.subr.mxu0 0.0
      %4915 = vmatpush1.msra.mxu0 0.0
      %4916 = vmatprep.subr.mxu0 0.0
      %4917 = vmatpush1.msra.mxu0 0.0
      %4918 = vmatprep.subr.mxu0 0.0
      %4919 = vmatpush1.msra.mxu0 0.0
      %4920 = vmatprep.subr.mxu0 0.0
      %4921 = vmatpush1.msra.mxu0 0.0
      %4922 = vmatprep.subr.mxu0 0.0
      %4923 = vmatpush1.msra.mxu0 0.0
      %4924 = vmatprep.subr.mxu0 0.0
      %4925 = vmatpush1.msra.mxu0 0.0
      %4926 = vmatprep.subr.mxu0 0.0
      %4927 = vmatpush1.msra.mxu0 0.0
      %4928 = vmatprep.subr.mxu0 0.0
      %4929 = vmatpush1.msra.mxu0 0.0
      %4930 = vmatprep.subr.mxu0 0.0
      %4931 = vmatpush1.msra.mxu0 0.0
      %4932 = vmatprep.subr.mxu0 0.0
      %4933 = vmatpush1.msra.mxu0 0.0
      %4934 = vmatprep.subr.mxu0 0.0
      %4935 = vmatpush1.msra.mxu0 0.0
      %4936 = vmatprep.subr.mxu0 0.0
      %4937 = vmatpush1.msra.mxu0 0.0
      %4938 = vmatprep.subr.mxu0 0.0
      %4939 = vmatpush1.msra.mxu0 0.0
      %4940 = vmatprep.subr.mxu0 0.0
      %4941 = vmatpush1.msra.mxu0 0.0
      %4942 = vmatprep.subr.mxu0 0.0
      %4943 = vmatpush1.msra.mxu0 0.0
      %4944 = vmatprep.subr.mxu0 0.0
      %4945 = vmatpush1.msra.mxu0 0.0
      %4946 = vmatprep.subr.mxu0 0.0
      %4947 = vmatpush1.msra.mxu0 0.0
      %4948 = vmatprep.subr.mxu0 0.0
      %4949 = vmatpush1.msra.mxu0 0.0
      %4950 = vmatprep.subr.mxu0 0.0
      %4951 = vmatpush1.msra.mxu0 0.0
      %4952 = vmatprep.subr.mxu0 0.0
      %4953 = vmatpush1.msra.mxu0 0.0
      %4954 = vmatprep.mubr.f32.mxu0 0.0
      %4955 = vmatmul.mubr.f32.gmra.mrb[0].mxu0 %v4843
      %v4956 = vpop.f32.mrb[0].mxu0
      %v4957 = vadd.f32 0.0, %v4956
      %v4958 = vpop.f32.mrb[0].mxu0
      %4959 = vmatprep.mubr.f32.mxu0 0.0
      %4960 = vmatmul.mubr.f32.gmra.mrb[0].mxu0 %v4846
      %v4961 = vpop.f32.mrb[0].mxu0
      %v4962 = vadd.f32 0.0, %v4961
      %v4963 = vpop.f32.mrb[0].mxu0
      %4964 = vmatprep.mubr.f32.mxu0 0.0
      %4965 = vmatmul.mubr.f32.gmra.mrb[0].mxu0 %v4849
      %v4966 = vpop.f32.mrb[0].mxu0
      %v4967 = vadd.f32 0.0, %v4966
      %v4968 = vpop.f32.mrb[0].mxu0
      %4969 = vmatprep.mubr.f32.mxu0 0.0
      %4970 = vmatmul.mubr.f32.gmra.mrb[0].mxu0 %v4852
      %v4971 = vpop.f32.mrb[0].mxu0
      %v4972 = vadd.f32 0.0, %v4971
      %v4973 = vpop.f32.mrb[0].mxu0
      %4974 = vmatprep.mubr.f32.mxu0 0.0
      %4975 = vmatmul.mubr.f32.gmra.mrb[0].mxu0 %v4855
      %v4976 = vpop.f32.mrb[0].mxu0
      %v4977 = vadd.f32 0.0, %v4976
      %v4978 = vpop.f32.mrb[0].mxu0
      %4979 = vmatprep.mubr.f32.mxu0 0.0
      %4980 = vmatmul.mubr.f32.gmra.mrb[0].mxu0 %v4858
      %v4981 = vpop.f32.mrb[0].mxu0
      %v4982 = vadd.f32 0.0, %v4981
      %v4983 = vpop.f32.mrb[0].mxu0
      %4984 = vmatprep.mubr.f32.mxu0 0.0
      %4985 = vmatmul.mubr.f32.gmra.mrb[0].mxu0 %v4861
      %v4986 = vpop.f32.mrb[0].mxu0
      %v4987 = vadd.f32 0.0, %v4986
      %v4988 = vpop.f32.mrb[0].mxu0
      %4989 = vmatprep.mubr.f32.mxu0 0.0
      %4990 = vmatmul.mubr.f32.gmra.mrb[0].mxu0 %v4864
      %v4991 = vpop.f32.mrb[0].mxu0
      %v4992 = vadd.f32 0.0, %v4991
      %v4993 = vpop.f32.mrb[0].mxu0
      %4994 = vmatprep.mubr.f32.mxu0 0.0
      %4995 = vmatmul.mubr.f32.gmra.mrb[0].mxu0 %v4867
      %v4996 = vpop.f32.mrb[0].mxu0
      %v4997 = vadd.f32 0.0, %v4996
      %v4998 = vpop.f32.mrb[0].mxu0
      %4999 = vmatprep.mubr.f32.mxu0 0.0
      %5000 = vmatmul.mubr.f32.gmra.mrb[0].mxu0 %v4870
      %v5001 = vpop.f32.mrb[0].mxu0
      %v5002 = vadd.f32 0.0, %v5001
      %v5003 = vpop.f32.mrb[0].mxu0
      %5004 = vmatprep.mubr.f32.mxu0 0.0
      %5005 = vmatmul.mubr.f32.gmra.mrb[0].mxu0 %v4873
      %v5006 = vpop.f32.mrb[0].mxu0
      %v5007 = vadd.f32 0.0, %v5006
      %v5008 = vpop.f32.mrb[0].mxu0
      %5009 = vmatprep.mubr.f32.mxu0 0.0
      %5010 = vmatmul.mubr.f32.gmra.mrb[0].mxu0 %v4876
      %v5011 = vpop.f32.mrb[0].mxu0
      %v5012 = vadd.f32 0.0, %v5011
      %v5013 = vpop.f32.mrb[0].mxu0
      %5014 = vmatprep.mubr.f32.mxu0 0.0
      %5015 = vmatmul.mubr.f32.gmra.mrb[0].mxu0 %v4879
      %v5016 = vpop.f32.mrb[0].mxu0
      %v5017 = vadd.f32 0.0, %v5016
      %v5018 = vpop.f32.mrb[0].mxu0
      %5019 = vmatprep.mubr.f32.mxu0 0.0
      %5020 = vmatmul.mubr.f32.gmra.mrb[0].mxu0 %v4882
      %v5021 = vpop.f32.mrb[0].mxu0
      %v5022 = vadd.f32 0.0, %v5021
      %v5023 = vpop.f32.mrb[0].mxu0
      %5024 = vmatprep.mubr.f32.mxu0 0.0
      %5025 = vmatmul.mubr.f32.gmra.mrb[0].mxu0 %v4885
      %v5026 = vpop.f32.mrb[0].mxu0
      %v5027 = vadd.f32 0.0, %v5026
      %v5028 = vpop.f32.mrb[0].mxu0
      %5029 = vmatprep.mubr.f32.mxu0 0.0
      %5030 = vmatmul.mubr.f32.gmra.mrb[0].mxu0 %v4888
      %v5031 = vpop.f32.mrb[0].mxu0
      %v5032 = vadd.f32 0.0, %v5031
      %v5033 = vpop.f32.mrb[0].mxu0
      %5034 = vdwg.mxu0
      %v5035 = vadd.f32 %v4579, %v4957
      %v5036 = vadd.f32 %v4580, %v4962
      %v5037 = vadd.f32 %v4581, %v4967
      %v5038 = vadd.f32 %v4582, %v4972
      %v5039 = vadd.f32 %v4583, %v4977
      %v5040 = vadd.f32 %v4584, %v4982
      %v5041 = vadd.f32 %v4585, %v4987
      %v5042 = vadd.f32 %v4586, %v4992
      %v5043 = vadd.f32 %v4587, %v4997
      %v5044 = vadd.f32 %v4588, %v5002
      %v5045 = vadd.f32 %v4589, %v5007
      %v5046 = vadd.f32 %v4590, %v5012
      %v5047 = vadd.f32 %v4591, %v5017
      %v5048 = vadd.f32 %v4592, %v5022
      %v5049 = vadd.f32 %v4593, %v5027
      %v5050 = vadd.f32 %v4594, %v5032
      %s5051 = scalar_lea.vmem %s3, 28
      %v5052 = vld [vmem:[%s5051] sm:$0xf]
      %v5053 = vld [vmem:[%s4597 + $0x10] sm:$0xff]
      %v5054 = vld [vmem:[%s4597 + $0x28] sm:$0xff]
      %v5055 = vld [vmem:[%s4597 + $0x40] sm:$0xff]
      %v5056 = vld [vmem:[%s4597 + $0x58] sm:$0xff]
      %v5057 = vld [vmem:[%s4597 + $0x70] sm:$0xff]
      %v5058 = vld [vmem:[%s4597 + $0x88] sm:$0xff]
      %v5059 = vld [vmem:[%s4597 + $0xa0] sm:$0xff]
      %v5060 = vld [vmem:[%s4597 + $0xb8] sm:$0xff]
      %v5061 = vld [vmem:[%s4597 + $0xd0] sm:$0xff]
      %v5062 = vld [vmem:[%s4597 + $0xe8] sm:$0xff]
      %v5063 = vld [vmem:[%s4597 + $0x100] sm:$0xff]
      %v5064 = vld [vmem:[%s4597 + $0x118] sm:$0xff]
      %v5065 = vld [vmem:[%s4597 + $0x130] sm:$0xff]
      %v5066 = vld [vmem:[%s4597 + $0x148] sm:$0xff]
      %v5067 = vld [vmem:[%s4597 + $0x160] sm:$0xff]
      %v5068 = vld [vmem:[%s4597 + $0x178] sm:$0xff]
      %v5070 = vsel %vm2284, %v5052, 0
      %5072 = vmatprep.subr.mxu0 0.0
      %5073 = vmatpush1.msra.mxu0 %v5070
      %5074 = vmatprep.subr.mxu0 0.0
      %5075 = vmatpush1.msra.mxu0 0.0
      %5076 = vmatprep.subr.mxu0 0.0
      %5077 = vmatpush1.msra.mxu0 0.0
      %5078 = vmatprep.subr.mxu0 0.0
      %5079 = vmatpush1.msra.mxu0 0.0
      %5080 = vmatprep.subr.mxu0 0.0
      %5081 = vmatpush1.msra.mxu0 0.0
      %5082 = vmatprep.subr.mxu0 0.0
      %5083 = vmatpush1.msra.mxu0 0.0
      %5084 = vmatprep.subr.mxu0 0.0
      %5085 = vmatpush1.msra.mxu0 0.0
      %5086 = vmatprep.subr.mxu0 0.0
      %5087 = vmatpush1.msra.mxu0 0.0
      %5088 = vmatprep.subr.mxu0 0.0
      %5089 = vmatpush1.msra.mxu0 0.0
      %5090 = vmatprep.subr.mxu0 0.0
      %5091 = vmatpush1.msra.mxu0 0.0
      %5092 = vmatprep.subr.mxu0 0.0
      %5093 = vmatpush1.msra.mxu0 0.0
      %5094 = vmatprep.subr.mxu0 0.0
      %5095 = vmatpush1.msra.mxu0 0.0
      %5096 = vmatprep.subr.mxu0 0.0
      %5097 = vmatpush1.msra.mxu0 0.0
      %5098 = vmatprep.subr.mxu0 0.0
      %5099 = vmatpush1.msra.mxu0 0.0
      %5100 = vmatprep.subr.mxu0 0.0
      %5101 = vmatpush1.msra.mxu0 0.0
      %5102 = vmatprep.subr.mxu0 0.0
      %5103 = vmatpush1.msra.mxu0 0.0
      %5104 = vmatprep.subr.mxu0 0.0
      %5105 = vmatpush1.msra.mxu0 0.0
      %5106 = vmatprep.subr.mxu0 0.0
      %5107 = vmatpush1.msra.mxu0 0.0
      %5108 = vmatprep.subr.mxu0 0.0
      %5109 = vmatpush1.msra.mxu0 0.0
      %5110 = vmatprep.subr.mxu0 0.0
      %5111 = vmatpush1.msra.mxu0 0.0
      %5112 = vmatprep.subr.mxu0 0.0
      %5113 = vmatpush1.msra.mxu0 0.0
      %5114 = vmatprep.subr.mxu0 0.0
      %5115 = vmatpush1.msra.mxu0 0.0
      %5116 = vmatprep.subr.mxu0 0.0
      %5117 = vmatpush1.msra.mxu0 0.0
      %5118 = vmatprep.subr.mxu0 0.0
      %5119 = vmatpush1.msra.mxu0 0.0
      %5120 = vmatprep.subr.mxu0 0.0
      %5121 = vmatpush1.msra.mxu0 0.0
      %5122 = vmatprep.subr.mxu0 0.0
      %5123 = vmatpush1.msra.mxu0 0.0
      %5124 = vmatprep.subr.mxu0 0.0
      %5125 = vmatpush1.msra.mxu0 0.0
      %5126 = vmatprep.subr.mxu0 0.0
      %5127 = vmatpush1.msra.mxu0 0.0
      %5128 = vmatprep.subr.mxu0 0.0
      %5129 = vmatpush1.msra.mxu0 0.0
      %5130 = vmatprep.subr.mxu0 0.0
      %5131 = vmatpush1.msra.mxu0 0.0
      %5132 = vmatprep.subr.mxu0 0.0
      %5133 = vmatpush1.msra.mxu0 0.0
      %5134 = vmatprep.subr.mxu0 0.0
      %5135 = vmatpush1.msra.mxu0 0.0
      %5136 = vmatprep.mubr.f32.mxu0 0.0
      %5137 = vmatmul.mubr.f32.gmra.mrb[0].mxu0 %v4843
      %v5138 = vpop.f32.mrb[0].mxu0
      %v5139 = vadd.f32 0.0, %v5138
      %v5140 = vpop.f32.mrb[0].mxu0
      %5141 = vmatprep.mubr.f32.mxu0 0.0
      %5142 = vmatmul.mubr.f32.gmra.mrb[0].mxu0 %v4846
      %v5143 = vpop.f32.mrb[0].mxu0
      %v5144 = vadd.f32 0.0, %v5143
      %v5145 = vpop.f32.mrb[0].mxu0
      %5146 = vmatprep.mubr.f32.mxu0 0.0
      %5147 = vmatmul.mubr.f32.gmra.mrb[0].mxu0 %v4849
      %v5148 = vpop.f32.mrb[0].mxu0
      %v5149 = vadd.f32 0.0, %v5148
      %v5150 = vpop.f32.mrb[0].mxu0
      %5151 = vmatprep.mubr.f32.mxu0 0.0
      %5152 = vmatmul.mubr.f32.gmra.mrb[0].mxu0 %v4852
      %v5153 = vpop.f32.mrb[0].mxu0
      %v5154 = vadd.f32 0.0, %v5153
      %v5155 = vpop.f32.mrb[0].mxu0
      %5156 = vmatprep.mubr.f32.mxu0 0.0
      %5157 = vmatmul.mubr.f32.gmra.mrb[0].mxu0 %v4855
      %v5158 = vpop.f32.mrb[0].mxu0
      %v5159 = vadd.f32 0.0, %v5158
      %v5160 = vpop.f32.mrb[0].mxu0
      %5161 = vmatprep.mubr.f32.mxu0 0.0
      %5162 = vmatmul.mubr.f32.gmra.mrb[0].mxu0 %v4858
      %v5163 = vpop.f32.mrb[0].mxu0
      %v5164 = vadd.f32 0.0, %v5163
      %v5165 = vpop.f32.mrb[0].mxu0
      %5166 = vmatprep.mubr.f32.mxu0 0.0
      %5167 = vmatmul.mubr.f32.gmra.mrb[0].mxu0 %v4861
      %v5168 = vpop.f32.mrb[0].mxu0
      %v5169 = vadd.f32 0.0, %v5168
      %v5170 = vpop.f32.mrb[0].mxu0
      %5171 = vmatprep.mubr.f32.mxu0 0.0
      %5172 = vmatmul.mubr.f32.gmra.mrb[0].mxu0 %v4864
      %v5173 = vpop.f32.mrb[0].mxu0
      %v5174 = vadd.f32 0.0, %v5173
      %v5175 = vpop.f32.mrb[0].mxu0
      %5176 = vmatprep.mubr.f32.mxu0 0.0
      %5177 = vmatmul.mubr.f32.gmra.mrb[0].mxu0 %v4867
      %v5178 = vpop.f32.mrb[0].mxu0
      %v5179 = vadd.f32 0.0, %v5178
      %v5180 = vpop.f32.mrb[0].mxu0
      %5181 = vmatprep.mubr.f32.mxu0 0.0
      %5182 = vmatmul.mubr.f32.gmra.mrb[0].mxu0 %v4870
      %v5183 = vpop.f32.mrb[0].mxu0
      %v5184 = vadd.f32 0.0, %v5183
      %v5185 = vpop.f32.mrb[0].mxu0
      %5186 = vmatprep.mubr.f32.mxu0 0.0
      %5187 = vmatmul.mubr.f32.gmra.mrb[0].mxu0 %v4873
      %v5188 = vpop.f32.mrb[0].mxu0
      %v5189 = vadd.f32 0.0, %v5188
      %v5190 = vpop.f32.mrb[0].mxu0
      %5191 = vmatprep.mubr.f32.mxu0 0.0
      %5192 = vmatmul.mubr.f32.gmra.mrb[0].mxu0 %v4876
      %v5193 = vpop.f32.mrb[0].mxu0
      %v5194 = vadd.f32 0.0, %v5193
      %v5195 = vpop.f32.mrb[0].mxu0
      %5196 = vmatprep.mubr.f32.mxu0 0.0
      %5197 = vmatmul.mubr.f32.gmra.mrb[0].mxu0 %v4879
      %v5198 = vpop.f32.mrb[0].mxu0
      %v5199 = vadd.f32 0.0, %v5198
      %v5200 = vpop.f32.mrb[0].mxu0
      %5201 = vmatprep.mubr.f32.mxu0 0.0
      %5202 = vmatmul.mubr.f32.gmra.mrb[0].mxu0 %v4882
      %v5203 = vpop.f32.mrb[0].mxu0
      %v5204 = vadd.f32 0.0, %v5203
      %v5205 = vpop.f32.mrb[0].mxu0
      %5206 = vmatprep.mubr.f32.mxu0 0.0
      %5207 = vmatmul.mubr.f32.gmra.mrb[0].mxu0 %v4885
      %v5208 = vpop.f32.mrb[0].mxu0
      %v5209 = vadd.f32 0.0, %v5208
      %v5210 = vpop.f32.mrb[0].mxu0
      %5211 = vmatprep.mubr.f32.mxu0 0.0
      %5212 = vmatmul.mubr.f32.gmra.mrb[0].mxu0 %v4888
      %v5213 = vpop.f32.mrb[0].mxu0
      %v5214 = vadd.f32 0.0, %v5213
      %v5215 = vpop.f32.mrb[0].mxu0
      %5216 = vdwg.mxu0
      %v5217 = vadd.f32 %v4826, %v5139
      %v5218 = vadd.f32 %v4827, %v5144
      %v5219 = vadd.f32 %v4828, %v5149
      %v5220 = vadd.f32 %v4829, %v5154
      %v5221 = vadd.f32 %v4830, %v5159
      %v5222 = vadd.f32 %v4831, %v5164
      %v5223 = vadd.f32 %v4832, %v5169
      %v5224 = vadd.f32 %v4833, %v5174
      %v5225 = vadd.f32 %v4834, %v5179
      %v5226 = vadd.f32 %v4835, %v5184
      %v5227 = vadd.f32 %v4836, %v5189
      %v5228 = vadd.f32 %v4837, %v5194
      %v5229 = vadd.f32 %v4838, %v5199
      %v5230 = vadd.f32 %v4839, %v5204
      %v5231 = vadd.f32 %v4840, %v5209
      %v5232 = vadd.f32 %v4841, %v5214
      %v5234 = vsel %vm2097, %v5053, 0
      %v5237 = vsel %vm2097, %v5054, 0
      %v5240 = vsel %vm2097, %v5055, 0
      %v5243 = vsel %vm2097, %v5056, 0
      %v5246 = vsel %vm2097, %v5057, 0
      %v5249 = vsel %vm2097, %v5058, 0
      %v5252 = vsel %vm2097, %v5059, 0
      %v5255 = vsel %vm2097, %v5060, 0
      %v5258 = vsel %vm2097, %v5061, 0
      %v5261 = vsel %vm2097, %v5062, 0
      %v5264 = vsel %vm2097, %v5063, 0
      %v5267 = vsel %vm2097, %v5064, 0
      %v5270 = vsel %vm2097, %v5065, 0
      %v5273 = vsel %vm2097, %v5066, 0
      %v5276 = vsel %vm2097, %v5067, 0
      %v5279 = vsel %vm2097, %v5068, 0
      %5281 = vmatprep.subr.mxu0 0.0
      %5282 = vmatpush1.msra.mxu0 %v5070
      %5283 = vmatprep.subr.mxu0 0.0
      %5284 = vmatpush1.msra.mxu0 0.0
      %5285 = vmatprep.subr.mxu0 0.0
      %5286 = vmatpush1.msra.mxu0 0.0
      %5287 = vmatprep.subr.mxu0 0.0
      %5288 = vmatpush1.msra.mxu0 0.0
      %5289 = vmatprep.subr.mxu0 0.0
      %5290 = vmatpush1.msra.mxu0 0.0
      %5291 = vmatprep.subr.mxu0 0.0
      %5292 = vmatpush1.msra.mxu0 0.0
      %5293 = vmatprep.subr.mxu0 0.0
      %5294 = vmatpush1.msra.mxu0 0.0
      %5295 = vmatprep.subr.mxu0 0.0
      %5296 = vmatpush1.msra.mxu0 0.0
      %5297 = vmatprep.subr.mxu0 0.0
      %5298 = vmatpush1.msra.mxu0 0.0
      %5299 = vmatprep.subr.mxu0 0.0
      %5300 = vmatpush1.msra.mxu0 0.0
      %5301 = vmatprep.subr.mxu0 0.0
      %5302 = vmatpush1.msra.mxu0 0.0
      %5303 = vmatprep.subr.mxu0 0.0
      %5304 = vmatpush1.msra.mxu0 0.0
      %5305 = vmatprep.subr.mxu0 0.0
      %5306 = vmatpush1.msra.mxu0 0.0
      %5307 = vmatprep.subr.mxu0 0.0
      %5308 = vmatpush1.msra.mxu0 0.0
      %5309 = vmatprep.subr.mxu0 0.0
      %5310 = vmatpush1.msra.mxu0 0.0
      %5311 = vmatprep.subr.mxu0 0.0
      %5312 = vmatpush1.msra.mxu0 0.0
      %5313 = vmatprep.subr.mxu0 0.0
      %5314 = vmatpush1.msra.mxu0 0.0
      %5315 = vmatprep.subr.mxu0 0.0
      %5316 = vmatpush1.msra.mxu0 0.0
      %5317 = vmatprep.subr.mxu0 0.0
      %5318 = vmatpush1.msra.mxu0 0.0
      %5319 = vmatprep.subr.mxu0 0.0
      %5320 = vmatpush1.msra.mxu0 0.0
      %5321 = vmatprep.subr.mxu0 0.0
      %5322 = vmatpush1.msra.mxu0 0.0
      %5323 = vmatprep.subr.mxu0 0.0
      %5324 = vmatpush1.msra.mxu0 0.0
      %5325 = vmatprep.subr.mxu0 0.0
      %5326 = vmatpush1.msra.mxu0 0.0
      %5327 = vmatprep.subr.mxu0 0.0
      %5328 = vmatpush1.msra.mxu0 0.0
      %5329 = vmatprep.subr.mxu0 0.0
      %5330 = vmatpush1.msra.mxu0 0.0
      %5331 = vmatprep.subr.mxu0 0.0
      %5332 = vmatpush1.msra.mxu0 0.0
      %5333 = vmatprep.subr.mxu0 0.0
      %5334 = vmatpush1.msra.mxu0 0.0
      %5335 = vmatprep.subr.mxu0 0.0
      %5336 = vmatpush1.msra.mxu0 0.0
      %5337 = vmatprep.subr.mxu0 0.0
      %5338 = vmatpush1.msra.mxu0 0.0
      %5339 = vmatprep.subr.mxu0 0.0
      %5340 = vmatpush1.msra.mxu0 0.0
      %5341 = vmatprep.subr.mxu0 0.0
      %5342 = vmatpush1.msra.mxu0 0.0
      %5343 = vmatprep.subr.mxu0 0.0
      %5344 = vmatpush1.msra.mxu0 0.0
      %5345 = vmatprep.mubr.f32.mxu0 0.0
      %5346 = vmatmul.mubr.f32.gmra.mrb[0].mxu0 %v5234
      %v5347 = vpop.f32.mrb[0].mxu0
      %v5348 = vadd.f32 0.0, %v5347
      %v5349 = vpop.f32.mrb[0].mxu0
      %5350 = vmatprep.mubr.f32.mxu0 0.0
      %5351 = vmatmul.mubr.f32.gmra.mrb[0].mxu0 %v5237
      %v5352 = vpop.f32.mrb[0].mxu0
      %v5353 = vadd.f32 0.0, %v5352
      %v5354 = vpop.f32.mrb[0].mxu0
      %5355 = vmatprep.mubr.f32.mxu0 0.0
      %5356 = vmatmul.mubr.f32.gmra.mrb[0].mxu0 %v5240
      %v5357 = vpop.f32.mrb[0].mxu0
      %v5358 = vadd.f32 0.0, %v5357
      %v5359 = vpop.f32.mrb[0].mxu0
      %5360 = vmatprep.mubr.f32.mxu0 0.0
      %5361 = vmatmul.mubr.f32.gmra.mrb[0].mxu0 %v5243
      %v5362 = vpop.f32.mrb[0].mxu0
      %v5363 = vadd.f32 0.0, %v5362
      %v5364 = vpop.f32.mrb[0].mxu0
      %5365 = vmatprep.mubr.f32.mxu0 0.0
      %5366 = vmatmul.mubr.f32.gmra.mrb[0].mxu0 %v5246
      %v5367 = vpop.f32.mrb[0].mxu0
      %v5368 = vadd.f32 0.0, %v5367
      %v5369 = vpop.f32.mrb[0].mxu0
      %5370 = vmatprep.mubr.f32.mxu0 0.0
      %5371 = vmatmul.mubr.f32.gmra.mrb[0].mxu0 %v5249
      %v5372 = vpop.f32.mrb[0].mxu0
      %v5373 = vadd.f32 0.0, %v5372
      %v5374 = vpop.f32.mrb[0].mxu0
      %5375 = vmatprep.mubr.f32.mxu0 0.0
      %5376 = vmatmul.mubr.f32.gmra.mrb[0].mxu0 %v5252
      %v5377 = vpop.f32.mrb[0].mxu0
      %v5378 = vadd.f32 0.0, %v5377
      %v5379 = vpop.f32.mrb[0].mxu0
      %5380 = vmatprep.mubr.f32.mxu0 0.0
      %5381 = vmatmul.mubr.f32.gmra.mrb[0].mxu0 %v5255
      %v5382 = vpop.f32.mrb[0].mxu0
      %v5383 = vadd.f32 0.0, %v5382
      %v5384 = vpop.f32.mrb[0].mxu0
      %5385 = vmatprep.mubr.f32.mxu0 0.0
      %5386 = vmatmul.mubr.f32.gmra.mrb[0].mxu0 %v5258
      %v5387 = vpop.f32.mrb[0].mxu0
      %v5388 = vadd.f32 0.0, %v5387
      %v5389 = vpop.f32.mrb[0].mxu0
      %5390 = vmatprep.mubr.f32.mxu0 0.0
      %5391 = vmatmul.mubr.f32.gmra.mrb[0].mxu0 %v5261
      %v5392 = vpop.f32.mrb[0].mxu0
      %v5393 = vadd.f32 0.0, %v5392
      %v5394 = vpop.f32.mrb[0].mxu0
      %5395 = vmatprep.mubr.f32.mxu0 0.0
      %5396 = vmatmul.mubr.f32.gmra.mrb[0].mxu0 %v5264
      %v5397 = vpop.f32.mrb[0].mxu0
      %v5398 = vadd.f32 0.0, %v5397
      %v5399 = vpop.f32.mrb[0].mxu0
      %5400 = vmatprep.mubr.f32.mxu0 0.0
      %5401 = vmatmul.mubr.f32.gmra.mrb[0].mxu0 %v5267
      %v5402 = vpop.f32.mrb[0].mxu0
      %v5403 = vadd.f32 0.0, %v5402
      %v5404 = vpop.f32.mrb[0].mxu0
      %5405 = vmatprep.mubr.f32.mxu0 0.0
      %5406 = vmatmul.mubr.f32.gmra.mrb[0].mxu0 %v5270
      %v5407 = vpop.f32.mrb[0].mxu0
      %v5408 = vadd.f32 0.0, %v5407
      %v5409 = vpop.f32.mrb[0].mxu0
      %5410 = vmatprep.mubr.f32.mxu0 0.0
      %5411 = vmatmul.mubr.f32.gmra.mrb[0].mxu0 %v5273
      %v5412 = vpop.f32.mrb[0].mxu0
      %v5413 = vadd.f32 0.0, %v5412
      %v5414 = vpop.f32.mrb[0].mxu0
      %5415 = vmatprep.mubr.f32.mxu0 0.0
      %5416 = vmatmul.mubr.f32.gmra.mrb[0].mxu0 %v5276
      %v5417 = vpop.f32.mrb[0].mxu0
      %v5418 = vadd.f32 0.0, %v5417
      %v5419 = vpop.f32.mrb[0].mxu0
      %5420 = vmatprep.mubr.f32.mxu0 0.0
      %5421 = vmatmul.mubr.f32.gmra.mrb[0].mxu0 %v5279
      %v5422 = vpop.f32.mrb[0].mxu0
      %v5423 = vadd.f32 0.0, %v5422
      %v5424 = vpop.f32.mrb[0].mxu0
      %5425 = vdwg.mxu0
      %v5426 = vadd.f32 %v5035, %v5348
      %v5427 = vadd.f32 %v5036, %v5353
      %v5428 = vadd.f32 %v5037, %v5358
      %v5429 = vadd.f32 %v5038, %v5363
      %v5430 = vadd.f32 %v5039, %v5368
      %v5431 = vadd.f32 %v5040, %v5373
      %v5432 = vadd.f32 %v5041, %v5378
      %v5433 = vadd.f32 %v5042, %v5383
      %v5434 = vadd.f32 %v5043, %v5388
      %v5435 = vadd.f32 %v5044, %v5393
      %v5436 = vadd.f32 %v5045, %v5398
      %v5437 = vadd.f32 %v5046, %v5403
      %v5438 = vadd.f32 %v5047, %v5408
      %v5439 = vadd.f32 %v5048, %v5413
      %v5440 = vadd.f32 %v5049, %v5418
      %v5441 = vadd.f32 %v5050, %v5423
      %s5442 = scalar_lea.vmem %s3, 32
      %v5443 = vld [vmem:[%s5442] sm:$0xf]
      %v5444 = vld [vmem:[%s4597 + $0x1] sm:$0xff]
      %v5445 = vld [vmem:[%s4597 + $0x19] sm:$0xff]
      %v5446 = vld [vmem:[%s4597 + $0x31] sm:$0xff]
      %v5447 = vld [vmem:[%s4597 + $0x49] sm:$0xff]
      %v5448 = vld [vmem:[%s4597 + $0x61] sm:$0xff]
      %v5449 = vld [vmem:[%s4597 + $0x79] sm:$0xff]
      %v5450 = vld [vmem:[%s4597 + $0x91] sm:$0xff]
      %v5451 = vld [vmem:[%s4597 + $0xa9] sm:$0xff]
      %v5452 = vld [vmem:[%s4597 + $0xc1] sm:$0xff]
      %v5453 = vld [vmem:[%s4597 + $0xd9] sm:$0xff]
      %v5454 = vld [vmem:[%s4597 + $0xf1] sm:$0xff]
      %v5455 = vld [vmem:[%s4597 + $0x109] sm:$0xff]
      %v5456 = vld [vmem:[%s4597 + $0x121] sm:$0xff]
      %v5457 = vld [vmem:[%s4597 + $0x139] sm:$0xff]
      %v5458 = vld [vmem:[%s4597 + $0x151] sm:$0xff]
      %v5459 = vld [vmem:[%s4597 + $0x169] sm:$0xff]
      %v5461 = vsel %vm2284, %v5443, 0
      %5463 = vmatprep.subr.mxu0 0.0
      %5464 = vmatpush1.msra.mxu0 %v5461
      %5465 = vmatprep.subr.mxu0 0.0
      %5466 = vmatpush1.msra.mxu0 0.0
      %5467 = vmatprep.subr.mxu0 0.0
      %5468 = vmatpush1.msra.mxu0 0.0
      %5469 = vmatprep.subr.mxu0 0.0
      %5470 = vmatpush1.msra.mxu0 0.0
      %5471 = vmatprep.subr.mxu0 0.0
      %5472 = vmatpush1.msra.mxu0 0.0
      %5473 = vmatprep.subr.mxu0 0.0
      %5474 = vmatpush1.msra.mxu0 0.0
      %5475 = vmatprep.subr.mxu0 0.0
      %5476 = vmatpush1.msra.mxu0 0.0
      %5477 = vmatprep.subr.mxu0 0.0
      %5478 = vmatpush1.msra.mxu0 0.0
      %5479 = vmatprep.subr.mxu0 0.0
      %5480 = vmatpush1.msra.mxu0 0.0
      %5481 = vmatprep.subr.mxu0 0.0
      %5482 = vmatpush1.msra.mxu0 0.0
      %5483 = vmatprep.subr.mxu0 0.0
      %5484 = vmatpush1.msra.mxu0 0.0
      %5485 = vmatprep.subr.mxu0 0.0
      %5486 = vmatpush1.msra.mxu0 0.0
      %5487 = vmatprep.subr.mxu0 0.0
      %5488 = vmatpush1.msra.mxu0 0.0
      %5489 = vmatprep.subr.mxu0 0.0
      %5490 = vmatpush1.msra.mxu0 0.0
      %5491 = vmatprep.subr.mxu0 0.0
      %5492 = vmatpush1.msra.mxu0 0.0
      %5493 = vmatprep.subr.mxu0 0.0
      %5494 = vmatpush1.msra.mxu0 0.0
      %5495 = vmatprep.subr.mxu0 0.0
      %5496 = vmatpush1.msra.mxu0 0.0
      %5497 = vmatprep.subr.mxu0 0.0
      %5498 = vmatpush1.msra.mxu0 0.0
      %5499 = vmatprep.subr.mxu0 0.0
      %5500 = vmatpush1.msra.mxu0 0.0
      %5501 = vmatprep.subr.mxu0 0.0
      %5502 = vmatpush1.msra.mxu0 0.0
      %5503 = vmatprep.subr.mxu0 0.0
      %5504 = vmatpush1.msra.mxu0 0.0
      %5505 = vmatprep.subr.mxu0 0.0
      %5506 = vmatpush1.msra.mxu0 0.0
      %5507 = vmatprep.subr.mxu0 0.0
      %5508 = vmatpush1.msra.mxu0 0.0
      %5509 = vmatprep.subr.mxu0 0.0
      %5510 = vmatpush1.msra.mxu0 0.0
      %5511 = vmatprep.subr.mxu0 0.0
      %5512 = vmatpush1.msra.mxu0 0.0
      %5513 = vmatprep.subr.mxu0 0.0
      %5514 = vmatpush1.msra.mxu0 0.0
      %5515 = vmatprep.subr.mxu0 0.0
      %5516 = vmatpush1.msra.mxu0 0.0
      %5517 = vmatprep.subr.mxu0 0.0
      %5518 = vmatpush1.msra.mxu0 0.0
      %5519 = vmatprep.subr.mxu0 0.0
      %5520 = vmatpush1.msra.mxu0 0.0
      %5521 = vmatprep.subr.mxu0 0.0
      %5522 = vmatpush1.msra.mxu0 0.0
      %5523 = vmatprep.subr.mxu0 0.0
      %5524 = vmatpush1.msra.mxu0 0.0
      %5525 = vmatprep.subr.mxu0 0.0
      %5526 = vmatpush1.msra.mxu0 0.0
      %5527 = vmatprep.mubr.f32.mxu0 0.0
      %5528 = vmatmul.mubr.f32.gmra.mrb[0].mxu0 %v5234
      %v5529 = vpop.f32.mrb[0].mxu0
      %v5530 = vadd.f32 0.0, %v5529
      %v5531 = vpop.f32.mrb[0].mxu0
      %5532 = vmatprep.mubr.f32.mxu0 0.0
      %5533 = vmatmul.mubr.f32.gmra.mrb[0].mxu0 %v5237
      %v5534 = vpop.f32.mrb[0].mxu0
      %v5535 = vadd.f32 0.0, %v5534
      %v5536 = vpop.f32.mrb[0].mxu0
      %5537 = vmatprep.mubr.f32.mxu0 0.0
      %5538 = vmatmul.mubr.f32.gmra.mrb[0].mxu0 %v5240
      %v5539 = vpop.f32.mrb[0].mxu0
      %v5540 = vadd.f32 0.0, %v5539
      %v5541 = vpop.f32.mrb[0].mxu0
      %5542 = vmatprep.mubr.f32.mxu0 0.0
      %5543 = vmatmul.mubr.f32.gmra.mrb[0].mxu0 %v5243
      %v5544 = vpop.f32.mrb[0].mxu0
      %v5545 = vadd.f32 0.0, %v5544
      %v5546 = vpop.f32.mrb[0].mxu0
      %5547 = vmatprep.mubr.f32.mxu0 0.0
      %5548 = vmatmul.mubr.f32.gmra.mrb[0].mxu0 %v5246
      %v5549 = vpop.f32.mrb[0].mxu0
      %v5550 = vadd.f32 0.0, %v5549
      %v5551 = vpop.f32.mrb[0].mxu0
      %5552 = vmatprep.mubr.f32.mxu0 0.0
      %5553 = vmatmul.mubr.f32.gmra.mrb[0].mxu0 %v5249
      %v5554 = vpop.f32.mrb[0].mxu0
      %v5555 = vadd.f32 0.0, %v5554
      %v5556 = vpop.f32.mrb[0].mxu0
      %5557 = vmatprep.mubr.f32.mxu0 0.0
      %5558 = vmatmul.mubr.f32.gmra.mrb[0].mxu0 %v5252
      %v5559 = vpop.f32.mrb[0].mxu0
      %v5560 = vadd.f32 0.0, %v5559
      %v5561 = vpop.f32.mrb[0].mxu0
      %5562 = vmatprep.mubr.f32.mxu0 0.0
      %5563 = vmatmul.mubr.f32.gmra.mrb[0].mxu0 %v5255
      %v5564 = vpop.f32.mrb[0].mxu0
      %v5565 = vadd.f32 0.0, %v5564
      %v5566 = vpop.f32.mrb[0].mxu0
      %5567 = vmatprep.mubr.f32.mxu0 0.0
      %5568 = vmatmul.mubr.f32.gmra.mrb[0].mxu0 %v5258
      %v5569 = vpop.f32.mrb[0].mxu0
      %v5570 = vadd.f32 0.0, %v5569
      %v5571 = vpop.f32.mrb[0].mxu0
      %5572 = vmatprep.mubr.f32.mxu0 0.0
      %5573 = vmatmul.mubr.f32.gmra.mrb[0].mxu0 %v5261
      %v5574 = vpop.f32.mrb[0].mxu0
      %v5575 = vadd.f32 0.0, %v5574
      %v5576 = vpop.f32.mrb[0].mxu0
      %5577 = vmatprep.mubr.f32.mxu0 0.0
      %5578 = vmatmul.mubr.f32.gmra.mrb[0].mxu0 %v5264
      %v5579 = vpop.f32.mrb[0].mxu0
      %v5580 = vadd.f32 0.0, %v5579
      %v5581 = vpop.f32.mrb[0].mxu0
      %5582 = vmatprep.mubr.f32.mxu0 0.0
      %5583 = vmatmul.mubr.f32.gmra.mrb[0].mxu0 %v5267
      %v5584 = vpop.f32.mrb[0].mxu0
      %v5585 = vadd.f32 0.0, %v5584
      %v5586 = vpop.f32.mrb[0].mxu0
      %5587 = vmatprep.mubr.f32.mxu0 0.0
      %5588 = vmatmul.mubr.f32.gmra.mrb[0].mxu0 %v5270
      %v5589 = vpop.f32.mrb[0].mxu0
      %v5590 = vadd.f32 0.0, %v5589
      %v5591 = vpop.f32.mrb[0].mxu0
      %5592 = vmatprep.mubr.f32.mxu0 0.0
      %5593 = vmatmul.mubr.f32.gmra.mrb[0].mxu0 %v5273
      %v5594 = vpop.f32.mrb[0].mxu0
      %v5595 = vadd.f32 0.0, %v5594
      %v5596 = vpop.f32.mrb[0].mxu0
      %5597 = vmatprep.mubr.f32.mxu0 0.0
      %5598 = vmatmul.mubr.f32.gmra.mrb[0].mxu0 %v5276
      %v5599 = vpop.f32.mrb[0].mxu0
      %v5600 = vadd.f32 0.0, %v5599
      %v5601 = vpop.f32.mrb[0].mxu0
      %5602 = vmatprep.mubr.f32.mxu0 0.0
      %5603 = vmatmul.mubr.f32.gmra.mrb[0].mxu0 %v5279
      %v5604 = vpop.f32.mrb[0].mxu0
      %v5605 = vadd.f32 0.0, %v5604
      %v5606 = vpop.f32.mrb[0].mxu0
      %5607 = vdwg.mxu0
      %v5608 = vadd.f32 %v5217, %v5530
      %v5609 = vadd.f32 %v5218, %v5535
      %v5610 = vadd.f32 %v5219, %v5540
      %v5611 = vadd.f32 %v5220, %v5545
      %v5612 = vadd.f32 %v5221, %v5550
      %v5613 = vadd.f32 %v5222, %v5555
      %v5614 = vadd.f32 %v5223, %v5560
      %v5615 = vadd.f32 %v5224, %v5565
      %v5616 = vadd.f32 %v5225, %v5570
      %v5617 = vadd.f32 %v5226, %v5575
      %v5618 = vadd.f32 %v5227, %v5580
      %v5619 = vadd.f32 %v5228, %v5585
      %v5620 = vadd.f32 %v5229, %v5590
      %v5621 = vadd.f32 %v5230, %v5595
      %v5622 = vadd.f32 %v5231, %v5600
      %v5623 = vadd.f32 %v5232, %v5605
      %v5625 = vsel %vm2097, %v5444, 0
      %v5628 = vsel %vm2097, %v5445, 0
      %v5631 = vsel %vm2097, %v5446, 0
      %v5634 = vsel %vm2097, %v5447, 0
      %v5637 = vsel %vm2097, %v5448, 0
      %v5640 = vsel %vm2097, %v5449, 0
      %v5643 = vsel %vm2097, %v5450, 0
      %v5646 = vsel %vm2097, %v5451, 0
      %v5649 = vsel %vm2097, %v5452, 0
      %v5652 = vsel %vm2097, %v5453, 0
      %v5655 = vsel %vm2097, %v5454, 0
      %v5658 = vsel %vm2097, %v5455, 0
      %v5661 = vsel %vm2097, %v5456, 0
      %v5664 = vsel %vm2097, %v5457, 0
      %v5667 = vsel %vm2097, %v5458, 0
      %v5670 = vsel %vm2097, %v5459, 0
      %5672 = vmatprep.subr.mxu0 0.0
      %5673 = vmatpush1.msra.mxu0 %v5461
      %5674 = vmatprep.subr.mxu0 0.0
      %5675 = vmatpush1.msra.mxu0 0.0
      %5676 = vmatprep.subr.mxu0 0.0
      %5677 = vmatpush1.msra.mxu0 0.0
      %5678 = vmatprep.subr.mxu0 0.0
      %5679 = vmatpush1.msra.mxu0 0.0
      %5680 = vmatprep.subr.mxu0 0.0
      %5681 = vmatpush1.msra.mxu0 0.0
      %5682 = vmatprep.subr.mxu0 0.0
      %5683 = vmatpush1.msra.mxu0 0.0
      %5684 = vmatprep.subr.mxu0 0.0
      %5685 = vmatpush1.msra.mxu0 0.0
      %5686 = vmatprep.subr.mxu0 0.0
      %5687 = vmatpush1.msra.mxu0 0.0
      %5688 = vmatprep.subr.mxu0 0.0
      %5689 = vmatpush1.msra.mxu0 0.0
      %5690 = vmatprep.subr.mxu0 0.0
      %5691 = vmatpush1.msra.mxu0 0.0
      %5692 = vmatprep.subr.mxu0 0.0
      %5693 = vmatpush1.msra.mxu0 0.0
      %5694 = vmatprep.subr.mxu0 0.0
      %5695 = vmatpush1.msra.mxu0 0.0
      %5696 = vmatprep.subr.mxu0 0.0
      %5697 = vmatpush1.msra.mxu0 0.0
      %5698 = vmatprep.subr.mxu0 0.0
      %5699 = vmatpush1.msra.mxu0 0.0
      %5700 = vmatprep.subr.mxu0 0.0
      %5701 = vmatpush1.msra.mxu0 0.0
      %5702 = vmatprep.subr.mxu0 0.0
      %5703 = vmatpush1.msra.mxu0 0.0
      %5704 = vmatprep.subr.mxu0 0.0
      %5705 = vmatpush1.msra.mxu0 0.0
      %5706 = vmatprep.subr.mxu0 0.0
      %5707 = vmatpush1.msra.mxu0 0.0
      %5708 = vmatprep.subr.mxu0 0.0
      %5709 = vmatpush1.msra.mxu0 0.0
      %5710 = vmatprep.subr.mxu0 0.0
      %5711 = vmatpush1.msra.mxu0 0.0
      %5712 = vmatprep.subr.mxu0 0.0
      %5713 = vmatpush1.msra.mxu0 0.0
      %5714 = vmatprep.subr.mxu0 0.0
      %5715 = vmatpush1.msra.mxu0 0.0
      %5716 = vmatprep.subr.mxu0 0.0
      %5717 = vmatpush1.msra.mxu0 0.0
      %5718 = vmatprep.subr.mxu0 0.0
      %5719 = vmatpush1.msra.mxu0 0.0
      %5720 = vmatprep.subr.mxu0 0.0
      %5721 = vmatpush1.msra.mxu0 0.0
      %5722 = vmatprep.subr.mxu0 0.0
      %5723 = vmatpush1.msra.mxu0 0.0
      %5724 = vmatprep.subr.mxu0 0.0
      %5725 = vmatpush1.msra.mxu0 0.0
      %5726 = vmatprep.subr.mxu0 0.0
      %5727 = vmatpush1.msra.mxu0 0.0
      %5728 = vmatprep.subr.mxu0 0.0
      %5729 = vmatpush1.msra.mxu0 0.0
      %5730 = vmatprep.subr.mxu0 0.0
      %5731 = vmatpush1.msra.mxu0 0.0
      %5732 = vmatprep.subr.mxu0 0.0
      %5733 = vmatpush1.msra.mxu0 0.0
      %5734 = vmatprep.subr.mxu0 0.0
      %5735 = vmatpush1.msra.mxu0 0.0
      %5736 = vmatprep.mubr.f32.mxu0 0.0
      %5737 = vmatmul.mubr.f32.gmra.mrb[0].mxu0 %v5625
      %v5738 = vpop.f32.mrb[0].mxu0
      %v5739 = vadd.f32 0.0, %v5738
      %v5740 = vpop.f32.mrb[0].mxu0
      %5741 = vmatprep.mubr.f32.mxu0 0.0
      %5742 = vmatmul.mubr.f32.gmra.mrb[0].mxu0 %v5628
      %v5743 = vpop.f32.mrb[0].mxu0
      %v5744 = vadd.f32 0.0, %v5743
      %v5745 = vpop.f32.mrb[0].mxu0
      %5746 = vmatprep.mubr.f32.mxu0 0.0
      %5747 = vmatmul.mubr.f32.gmra.mrb[0].mxu0 %v5631
      %v5748 = vpop.f32.mrb[0].mxu0
      %v5749 = vadd.f32 0.0, %v5748
      %v5750 = vpop.f32.mrb[0].mxu0
      %5751 = vmatprep.mubr.f32.mxu0 0.0
      %5752 = vmatmul.mubr.f32.gmra.mrb[0].mxu0 %v5634
      %v5753 = vpop.f32.mrb[0].mxu0
      %v5754 = vadd.f32 0.0, %v5753
      %v5755 = vpop.f32.mrb[0].mxu0
      %5756 = vmatprep.mubr.f32.mxu0 0.0
      %5757 = vmatmul.mubr.f32.gmra.mrb[0].mxu0 %v5637
      %v5758 = vpop.f32.mrb[0].mxu0
      %v5759 = vadd.f32 0.0, %v5758
      %v5760 = vpop.f32.mrb[0].mxu0
      %5761 = vmatprep.mubr.f32.mxu0 0.0
      %5762 = vmatmul.mubr.f32.gmra.mrb[0].mxu0 %v5640
      %v5763 = vpop.f32.mrb[0].mxu0
      %v5764 = vadd.f32 0.0, %v5763
      %v5765 = vpop.f32.mrb[0].mxu0
      %5766 = vmatprep.mubr.f32.mxu0 0.0
      %5767 = vmatmul.mubr.f32.gmra.mrb[0].mxu0 %v5643
      %v5768 = vpop.f32.mrb[0].mxu0
      %v5769 = vadd.f32 0.0, %v5768
      %v5770 = vpop.f32.mrb[0].mxu0
      %5771 = vmatprep.mubr.f32.mxu0 0.0
      %5772 = vmatmul.mubr.f32.gmra.mrb[0].mxu0 %v5646
      %v5773 = vpop.f32.mrb[0].mxu0
      %v5774 = vadd.f32 0.0, %v5773
      %v5775 = vpop.f32.mrb[0].mxu0
      %5776 = vmatprep.mubr.f32.mxu0 0.0
      %5777 = vmatmul.mubr.f32.gmra.mrb[0].mxu0 %v5649
      %v5778 = vpop.f32.mrb[0].mxu0
      %v5779 = vadd.f32 0.0, %v5778
      %v5780 = vpop.f32.mrb[0].mxu0
      %5781 = vmatprep.mubr.f32.mxu0 0.0
      %5782 = vmatmul.mubr.f32.gmra.mrb[0].mxu0 %v5652
      %v5783 = vpop.f32.mrb[0].mxu0
      %v5784 = vadd.f32 0.0, %v5783
      %v5785 = vpop.f32.mrb[0].mxu0
      %5786 = vmatprep.mubr.f32.mxu0 0.0
      %5787 = vmatmul.mubr.f32.gmra.mrb[0].mxu0 %v5655
      %v5788 = vpop.f32.mrb[0].mxu0
      %v5789 = vadd.f32 0.0, %v5788
      %v5790 = vpop.f32.mrb[0].mxu0
      %5791 = vmatprep.mubr.f32.mxu0 0.0
      %5792 = vmatmul.mubr.f32.gmra.mrb[0].mxu0 %v5658
      %v5793 = vpop.f32.mrb[0].mxu0
      %v5794 = vadd.f32 0.0, %v5793
      %v5795 = vpop.f32.mrb[0].mxu0
      %5796 = vmatprep.mubr.f32.mxu0 0.0
      %5797 = vmatmul.mubr.f32.gmra.mrb[0].mxu0 %v5661
      %v5798 = vpop.f32.mrb[0].mxu0
      %v5799 = vadd.f32 0.0, %v5798
      %v5800 = vpop.f32.mrb[0].mxu0
      %5801 = vmatprep.mubr.f32.mxu0 0.0
      %5802 = vmatmul.mubr.f32.gmra.mrb[0].mxu0 %v5664
      %v5803 = vpop.f32.mrb[0].mxu0
      %v5804 = vadd.f32 0.0, %v5803
      %v5805 = vpop.f32.mrb[0].mxu0
      %5806 = vmatprep.mubr.f32.mxu0 0.0
      %5807 = vmatmul.mubr.f32.gmra.mrb[0].mxu0 %v5667
      %v5808 = vpop.f32.mrb[0].mxu0
      %v5809 = vadd.f32 0.0, %v5808
      %v5810 = vpop.f32.mrb[0].mxu0
      %5811 = vmatprep.mubr.f32.mxu0 0.0
      %5812 = vmatmul.mubr.f32.gmra.mrb[0].mxu0 %v5670
      %v5813 = vpop.f32.mrb[0].mxu0
      %v5814 = vadd.f32 0.0, %v5813
      %v5815 = vpop.f32.mrb[0].mxu0
      %5816 = vdwg.mxu0
      %v5817 = vadd.f32 %v5426, %v5739
      %v5818 = vadd.f32 %v5427, %v5744
      %v5819 = vadd.f32 %v5428, %v5749
      %v5820 = vadd.f32 %v5429, %v5754
      %v5821 = vadd.f32 %v5430, %v5759
      %v5822 = vadd.f32 %v5431, %v5764
      %v5823 = vadd.f32 %v5432, %v5769
      %v5824 = vadd.f32 %v5433, %v5774
      %v5825 = vadd.f32 %v5434, %v5779
      %v5826 = vadd.f32 %v5435, %v5784
      %v5827 = vadd.f32 %v5436, %v5789
      %v5828 = vadd.f32 %v5437, %v5794
      %v5829 = vadd.f32 %v5438, %v5799
      %v5830 = vadd.f32 %v5439, %v5804
      %v5831 = vadd.f32 %v5440, %v5809
      %v5832 = vadd.f32 %v5441, %v5814
      %v5833 = vld [vmem:[%s4] sm:$0x1]
      %v5835 = vlaneseq
      %v5836 = vshrl.u32 %v5835, 7
      %v5837 = vsub.s32 0, %v5836
      %v5838 = vrot.slane %v5833, %v5837
      %v5840 = vadd.f32 %v5608, %v5838
      %v5841 = vadd.f32 %v5609, %v5838
      %v5842 = vadd.f32 %v5610, %v5838
      %v5843 = vadd.f32 %v5611, %v5838
      %v5844 = vadd.f32 %v5612, %v5838
      %v5845 = vadd.f32 %v5613, %v5838
      %v5846 = vadd.f32 %v5614, %v5838
      %v5847 = vadd.f32 %v5615, %v5838
      %v5848 = vadd.f32 %v5616, %v5838
      %v5849 = vadd.f32 %v5617, %v5838
      %v5850 = vadd.f32 %v5618, %v5838
      %v5851 = vadd.f32 %v5619, %v5838
      %v5852 = vadd.f32 %v5620, %v5838
      %v5853 = vadd.f32 %v5621, %v5838
      %v5854 = vadd.f32 %v5622, %v5838
      %v5855 = vadd.f32 %v5623, %v5838
      %v5856 = vmax.f32 %v5840, 0.0
      %v5857 = vmax.f32 %v5841, 0.0
      %v5858 = vmax.f32 %v5842, 0.0
      %v5859 = vmax.f32 %v5843, 0.0
      %v5860 = vmax.f32 %v5844, 0.0
      %v5861 = vmax.f32 %v5845, 0.0
      %v5862 = vmax.f32 %v5846, 0.0
      %v5863 = vmax.f32 %v5847, 0.0
      %v5864 = vmax.f32 %v5848, 0.0
      %v5865 = vmax.f32 %v5849, 0.0
      %v5866 = vmax.f32 %v5850, 0.0
      %v5867 = vmax.f32 %v5851, 0.0
      %v5868 = vmax.f32 %v5852, 0.0
      %v5869 = vmax.f32 %v5853, 0.0
      %v5870 = vmax.f32 %v5854, 0.0
      %v5871 = vmax.f32 %v5855, 0.0
      %v5872 = vadd.f32 %v5817, %v5838
      %v5873 = vadd.f32 %v5818, %v5838
      %v5874 = vadd.f32 %v5819, %v5838
      %v5875 = vadd.f32 %v5820, %v5838
      %v5876 = vadd.f32 %v5821, %v5838
      %v5877 = vadd.f32 %v5822, %v5838
      %v5878 = vadd.f32 %v5823, %v5838
      %v5879 = vadd.f32 %v5824, %v5838
      %v5880 = vadd.f32 %v5825, %v5838
      %v5881 = vadd.f32 %v5826, %v5838
      %v5882 = vadd.f32 %v5827, %v5838
      %v5883 = vadd.f32 %v5828, %v5838
      %v5884 = vadd.f32 %v5829, %v5838
      %v5885 = vadd.f32 %v5830, %v5838
      %v5886 = vadd.f32 %v5831, %v5838
      %v5887 = vadd.f32 %v5832, %v5838
      %v5888 = vmax.f32 %v5872, 0.0
      %v5889 = vmax.f32 %v5873, 0.0
      %v5890 = vmax.f32 %v5874, 0.0
      %v5891 = vmax.f32 %v5875, 0.0
      %v5892 = vmax.f32 %v5876, 0.0
      %v5893 = vmax.f32 %v5877, 0.0
      %v5894 = vmax.f32 %v5878, 0.0
      %v5895 = vmax.f32 %v5879, 0.0
      %v5896 = vmax.f32 %v5880, 0.0
      %v5897 = vmax.f32 %v5881, 0.0
      %v5898 = vmax.f32 %v5882, 0.0
      %v5899 = vmax.f32 %v5883, 0.0
      %v5900 = vmax.f32 %v5884, 0.0
      %v5901 = vmax.f32 %v5885, 0.0
      %v5902 = vmax.f32 %v5886, 0.0
      %v5903 = vmax.f32 %v5887, 0.0
      %v5904 = vmax.f32 %v5856, %v5888
      %v5905 = vmax.f32 %v5857, %v5889
      %v5906 = vmax.f32 %v5858, %v5890
      %v5907 = vmax.f32 %v5859, %v5891
      %v5908 = vmax.f32 %v5860, %v5892
      %v5909 = vmax.f32 %v5861, %v5893
      %v5910 = vmax.f32 %v5862, %v5894
      %v5911 = vmax.f32 %v5863, %v5895
      %v5912 = vmax.f32 %v5864, %v5896
      %v5913 = vmax.f32 %v5865, %v5897
      %v5914 = vmax.f32 %v5866, %v5898
      %v5915 = vmax.f32 %v5867, %v5899
      %v5916 = vmax.f32 %v5868, %v5900
      %v5917 = vmax.f32 %v5869, %v5901
      %v5918 = vmax.f32 %v5870, %v5902
      %v5919 = vmax.f32 %v5871, %v5903
      %v5920 = vmax.f32 %v5904, %v5905
      %v5921 = vmax.f32 %v5906, %v5907
      %v5922 = vmax.f32 %v5908, %v5909
      %v5923 = vmax.f32 %v5910, %v5911
      %v5924 = vmax.f32 %v5912, %v5913
      %v5925 = vmax.f32 %v5914, %v5915
      %v5926 = vmax.f32 %v5916, %v5917
      %v5927 = vmax.f32 %v5918, %v5919
      %v5928 = vpack.c.bf16 %v5921, %v5920
      %v5929 = vpack.c.bf16 %v5923, %v5922
      %v5930 = vpack.c.bf16 %v5925, %v5924
      %v5931 = vpack.c.bf16 %v5927, %v5926
      %v5936 = vunpack.c.l.b16 %v5928
      %v5937 = vunpack.c.h.b16 %v5928
      %v5938 = vunpack.c.l.b16 %v5929
      %v5939 = vunpack.c.h.b16 %v5929
      %v5940 = vunpack.c.l.b16 %v5930
      %v5941 = vunpack.c.h.b16 %v5930
      %v5942 = vunpack.c.l.b16 %v5931
      %v5943 = vunpack.c.h.b16 %v5931
      %v5944 = vpack.c.b16 %v5936, %v5936
      %v5945 = vpack.c.b16 %v5937, %v5937
      %v5946 = vpack.c.b16 %v5938, %v5938
      %v5947 = vpack.c.b16 %v5939, %v5939
      %v5948 = vpack.c.b16 %v5940, %v5940
      %v5949 = vpack.c.b16 %v5941, %v5941
      %v5950 = vpack.c.b16 %v5942, %v5942
      %v5951 = vpack.c.b16 %v5943, %v5943
      %vm5960 = vcmask 60416
      %5961 = vst.msk [vmem:[%s224] sm:$0xf] %vm5960, %v5944
      %5962 = vst.msk [vmem:[%s224 + $0x4] sm:$0xf] %vm5960, %v5945
      %5963 = vst.msk [vmem:[%s224 + $0x8] sm:$0xf] %vm5960, %v5946
      %5964 = vst.msk [vmem:[%s224 + $0xc] sm:$0xf] %vm5960, %v5947
      %5965 = vst.msk [vmem:[%s224 + $0x10] sm:$0xf] %vm5960, %v5948
      %5966 = vst.msk [vmem:[%s224 + $0x14] sm:$0xf] %vm5960, %v5949
      %5967 = vst.msk [vmem:[%s224 + $0x18] sm:$0xf] %vm5960, %v5950
      %5968 = vst.msk [vmem:[%s224 + $0x1c] sm:$0xf] %vm5960, %v5951
      %p5969 = scmp.lt.s32.totalorder %s16, 1
      %s5970 = scalar_select %p5969, %s16, 1
      %s5971 = smul.addr %s5970, 8
      %s5972 = smul.addr %s5971, 4
      %s5973 = scalar_lea.vmem %s5, %s5972
      // Predicated region
      $region41: #{tpu_custom_call.1} parent=39 // pred_check
        %p5974 = pneg %p144
      $region42: #{tpu_custom_call.1} parent=39 // pred_check_branch
        %5976 = sbr.rel (%p5974) target = $region44
      $region43: #{tpu_custom_call.1} parent=39 // pred_region
        _
      $region44: #{tpu_custom_call.1} parent=39 // pred_fallthru
        _
    $region40: #{tpu_custom_call.1} parent=5 // pred_fallthru
      _
    %p5977 = scmp.le.s32.totalorder 2, %s11
    // Predicated region
    $region45: #{tpu_custom_call.1} parent=5 // pred_check
      %p5978 = pneg %p5977
    $region46: #{tpu_custom_call.1} parent=5 // pred_check_branch
      %5980 = sbr.rel (%p5978) target = $region48
    $region47: #{tpu_custom_call.1} parent=5 // pred_region
      %s5981 = ssub.s32 %s11, 2
      // Predicated region
      $region49: #{tpu_custom_call.1} parent=47 // pred_check
        %p5982 = pneg %p150
      $region50: #{tpu_custom_call.1} parent=47 // pred_check_branch
        %5984 = sbr.rel (%p5982) target = $region52
      $region51: #{tpu_custom_call.1} parent=47 // pred_region
        %p5985 = scmp.lt.s32.totalorder %s17, 1
        %s5986 = scalar_select %p5985, %s17, 1
        %s5987 = smul.addr %s5986, 8
        %s5988 = smul.addr %s5987, 4
        %s5989 = scalar_lea.vmem %s5, %s5988
      $region52: #{tpu_custom_call.1} parent=47 // pred_fallthru
        _
    $region48: #{tpu_custom_call.1} parent=5 // pred_fallthru
      _
  $region6: #{tpu_custom_call.1} parent=0 // loop_footer
    %s15 = sadd.s32 1, %s11
  $region7: #{tpu_custom_call.1} parent=0 // loop_footer_branch
    %10 = sbr.rel target = $region3
  $region8: #{tpu_custom_call.1} parent=0 // loop_exit
    _

</llo_original>
